<compile_context>
chip_gen: v7x
topology: tpu7x:2x2x1
jax: 0.10.0
libtpu: 0.0.40
codegen_flags: <defaults>
</compile_context>

<pallas_src>
import math
import functools

import jax
import jax.numpy as jnp
from jax.experimental import pallas as pl
from jax.experimental.pallas import tpu as pltpu


# ----------------------------------------------------------------------------
# helpers
# ----------------------------------------------------------------------------

NEG_INF = -1e9                     # finite mask constant (f32 score math)
_VMEM_LIMIT = 64 * 1024 * 1024     # explicit scoped-VMEM limit (<= v7x physical)


def _round_up(n, m):
    return ((n + m - 1) // m) * m


def _pick_tile(dim, preferred, align):
    """Largest tile <= preferred that divides `dim` and is a multiple of
    `align`; fall back to the full dim (always a legal block)."""
    if dim <= preferred:
        return dim
    t = (preferred // align) * align
    while t >= align:
        if dim % t == 0:
            return t
        t -= align
    return dim


def _row_tile(M, cap=256):
    """Row tile: big, but small enough that the 'parallel' grid has >=2 steps
    when M allows (keeps both v7x TensorCores busy)."""
    return _pick_tile(M, max(8, min(cap, M // 2)), 8)


# ----------------------------------------------------------------------------
# Buffered(1) probe: constant-index weight blocks do not need double
# buffering; use single-buffering if this Pallas version supports it.
# ----------------------------------------------------------------------------

_WEIGHT_BUF = "unset"


def _probe_kernel(x_ref, o_ref):
    o_ref[...] = x_ref[...]


def _weight_buffer_mode():
    global _WEIGHT_BUF
    if _WEIGHT_BUF == "unset":
        try:
            mode = pl.Buffered(1)
            out = pl.pallas_call(
                _probe_kernel,
                out_shape=jax.ShapeDtypeStruct((8, 128), jnp.float32),
                grid=(2,),
                in_specs=[pl.BlockSpec((8, 128), lambda i: (0, 0),
                                       pipeline_mode=mode)],
                out_specs=pl.BlockSpec((8, 128), lambda i: (0, 0)),
            )(jnp.zeros((8, 128), jnp.float32))
            jax.block_until_ready(out)
            _WEIGHT_BUF = mode
        except Exception:
            _WEIGHT_BUF = None     # fall back to default double buffering
    return _WEIGHT_BUF


def _wspec(shape, index_map):
    """BlockSpec for a grid-invariant (constant-index) weight block."""
    mode = _weight_buffer_mode()
    if mode is not None:
        return pl.BlockSpec(shape, index_map, pipeline_mode=mode)
    return pl.BlockSpec(shape, index_map)


# ----------------------------------------------------------------------------
# Kernel 1: fused MHA (+ residual + LayerNorm)
#   grid = (batch [parallel], kv-tile [arbitrary]); online softmax over kv.
# ----------------------------------------------------------------------------

def _mha_ln_kernel(xq_ref, xkv_ref, mask_ref, kpm_ref,
                   wq_ref, bq_ref, wk_ref, bk_ref, wv_ref, bv_ref,
                   wo_ref, bo_ref, g_ref, bln_ref,
                   o_ref,
                   q_sc, m_sc, l_sc, acc_sc,
                   *, nhead, scale, eps):
    f32 = jnp.float32
    bf16 = jnp.bfloat16
    j = pl.program_id(1)
    Sq = xq_ref.shape[1]
    E = xq_ref.shape[2]
    Dh = E // nhead

    @pl.when(j == 0)
    def _init():
        xq = xq_ref[0]                                          # (Sq, E) bf16
        q = jnp.dot(xq, wq_ref[...], preferred_element_type=f32) + bq_ref[...]
        q_sc[...] = (q * scale).astype(bf16)                    # pre-scaled Q
        m_sc[...] = jnp.full(m_sc.shape, -jnp.inf, f32)
        l_sc[...] = jnp.zeros(l_sc.shape, f32)
        acc_sc[...] = jnp.zeros(acc_sc.shape, f32)

    # project only this kv tile's K/V (keeps VMEM bounded by the tile size)
    xkv = xkv_ref[0]                                            # (Tk, E) bf16
    k = jnp.dot(xkv, wk_ref[...], preferred_element_type=f32) + bk_ref[...]
    v = jnp.dot(xkv, wv_ref[...], preferred_element_type=f32) + bv_ref[...]
    madd = mask_ref[...] + kpm_ref[0]                           # (Sq, Tk) f32

    q = q_sc[...]                                               # (Sq, E) bf16
    # TODO(synk): per-head contraction depth Dh is tiny at this toy config
    # (MXU underfill); at real sizes pack heads so each MXU pass carries
    # >=128 of contraction, and cap the static unroll (lax.fori_loop)
    # once nhead grows past ~8.
    for h in range(nhead):                                      # static unroll
        sl = slice(h * Dh, (h + 1) * Dh)
        kh = k[:, sl].astype(bf16)
        vh = v[:, sl].astype(bf16)
        s = jnp.dot(q[:, sl], kh.T, preferred_element_type=f32) + madd
        m_prev = m_sc[h]                                        # (Sq, 1)
        m_new = jnp.maximum(m_prev, jnp.max(s, axis=-1, keepdims=True))
        alpha = jnp.exp(m_prev - m_new)
        p = jnp.exp(s - m_new)
        l_sc[h] = alpha * l_sc[h] + jnp.sum(p, axis=-1, keepdims=True)
        acc_sc[h] = alpha * acc_sc[h] + jnp.dot(p.astype(bf16), vh,
                                                preferred_element_type=f32)
        m_sc[h] = m_new

    @pl.when(j == pl.num_programs(1) - 1)
    def _finalize():
        # per-head output projection ACCUMULATION (no concatenate)
        y = jnp.zeros((Sq, E), f32)
        for h in range(nhead):
            inv_l = pl.reciprocal(l_sc[h], approx=True)          # EUP
            oh = (acc_sc[h] * inv_l).astype(bf16)                # (Sq, Dh)
            y = y + jnp.dot(oh, wo_ref[h * Dh:(h + 1) * Dh, :],
                            preferred_element_type=f32)
        # residual + LayerNorm in f32
        z = xq_ref[0].astype(f32) + y + bo_ref[...]
        mu = jnp.mean(z, axis=-1, keepdims=True)
        var = jnp.mean((z - mu) ** 2, axis=-1, keepdims=True)
        zn = (z - mu) * jax.lax.rsqrt(var + eps) * g_ref[...] + bln_ref[...]
        o_ref[0] = zn.astype(o_ref.dtype)


def pallas_mha_ln(x_q, x_kv, attn_mask, kpm_add, p, gamma, beta, nhead,
                  eps=1e-5):
    """x_q: (N, Sq, E) bf16, x_kv: (N, Sk, E) bf16.
       attn_mask: (Sq, Sk) additive f32; kpm_add: (N, 1, Sk) additive f32.
       Returns LayerNorm(x_q + MHA(x_q, x_kv)) as (N, Sq, E) bf16."""
    x_q = x_q.astype(jnp.bfloat16)
    x_kv = x_kv.astype(jnp.bfloat16)
    N, Sq, E = x_q.shape
    Sk = x_kv.shape[1]
    Dh = E // nhead
    scale = 1.0 / math.sqrt(Dh)
    Tk = _pick_tile(Sk, 512, 128)          # full Sk at small sizes
    n_kv = Sk // Tk
    kernel = functools.partial(_mha_ln_kernel, nhead=nhead, scale=scale,
                               eps=eps)
    wmap = lambda b, j: (0, 0)             # grid-invariant weight blocks
    return pl.pallas_call(
        kernel,
        out_shape=jax.ShapeDtypeStruct((N, Sq, E), jnp.bfloat16),
        grid=(N, n_kv),
        in_specs=[
            pl.BlockSpec((1, Sq, E), lambda b, j: (b, 0, 0)),   # x_q
            pl.BlockSpec((1, Tk, E), lambda b, j: (b, j, 0)),   # x_kv tile
            pl.BlockSpec((Sq, Tk), lambda b, j: (0, j)),        # additive mask
            pl.BlockSpec((1, 1, Tk), lambda b, j: (b, 0, j)),   # key-pad mask
            _wspec((E, E), wmap), _wspec((1, E), wmap),         # wq_t, bq
            _wspec((E, E), wmap), _wspec((1, E), wmap),         # wk_t, bk
            _wspec((E, E), wmap), _wspec((1, E), wmap),         # wv_t, bv
            _wspec((E, E), wmap), _wspec((1, E), wmap),         # wo_t, bo
            _wspec((1, E), wmap), _wspec((1, E), wmap),         # ln gamma, beta
        ],
        out_specs=pl.BlockSpec((1, Sq, E), lambda b, j: (b, 0, 0)),
        scratch_shapes=[
            pltpu.VMEM((Sq, E), jnp.bfloat16),       # projected Q
            pltpu.VMEM((nhead, Sq, 1), jnp.float32),  # online-softmax m
            pltpu.VMEM((nhead, Sq, 1), jnp.float32),  # online-softmax l
            pltpu.VMEM((nhead, Sq, Dh), jnp.float32),  # per-head acc
        ],
        compiler_params=pltpu.CompilerParams(
            dimension_semantics=("parallel", "arbitrary"),
            vmem_limit_bytes=_VMEM_LIMIT),
    )(x_q, x_kv, attn_mask, kpm_add,
      p["wq_t"], p["bq"], p["wk_t"], p["bk"], p["wv_t"], p["bv"],
      p["wo_t"], p["bo"], gamma, beta)


# ----------------------------------------------------------------------------
# Kernel 2: fused FFN (+ residual + LayerNorm [+ optional final stack norm])
# ----------------------------------------------------------------------------

def _ffn_ln_kernel(x_ref, w1_ref, b1_ref, w2_ref, b2_ref, g_ref, bln_ref,
                   *rest, eps, final_ln):
    if final_ln:
        gf_ref, bf_ref, o_ref = rest
    else:
        (o_ref,) = rest
    f32 = jnp.float32
    bf16 = jnp.bfloat16
    xb = x_ref[...]                                              # (tm, E) bf16
    x = xb.astype(f32)
    h = jnp.dot(xb, w1_ref[...], preferred_element_type=f32) + b1_ref[...]
    h = jnp.maximum(h, 0.0)                                      # ReLU (f32)
    y = jnp.dot(h.astype(bf16), w2_ref[...],
                preferred_element_type=f32) + b2_ref[...]
    z = x + y
    mu = jnp.mean(z, axis=-1, keepdims=True)
    var = jnp.mean((z - mu) ** 2, axis=-1, keepdims=True)
    z = (z - mu) * jax.lax.rsqrt(var + eps) * g_ref[...] + bln_ref[...]
    if final_ln:                                                 # fused stack norm
        mu = jnp.mean(z, axis=-1, keepdims=True)
        var = jnp.mean((z - mu) ** 2, axis=-1, keepdims=True)
        z = (z - mu) * jax.lax.rsqrt(var + eps) * gf_ref[...] + bf_ref[...]
    o_ref[...] = z.astype(o_ref.dtype)


def pallas_ffn_ln(x2d, p, gamma, beta, final_norm=None, eps=1e-5):
    """LayerNorm(x + W2 @ relu(W1 @ x + b1) + b2) on (M, E) bf16 rows;
       optionally applies the stack's final LayerNorm in the same pass."""
    x2d = x2d.astype(jnp.bfloat16)
    M, E = x2d.shape
    F = p["w1_t"].shape[1]
    tm = _row_tile(M, 256)
    final_ln = final_norm is not None
    kernel = functools.partial(_ffn_ln_kernel, eps=eps, final_ln=final_ln)
    wmap = lambda i: (0, 0)
    in_specs = [
        pl.BlockSpec((tm, E), lambda i: (i, 0)),
        _wspec((E, F), wmap), _wspec((1, F), wmap),     # w1_t, b1
        _wspec((F, E), wmap), _wspec((1, E), wmap),     # w2_t, b2
        _wspec((1, E), wmap), _wspec((1, E), wmap),     # ln gamma, beta
    ]
    args = [x2d, p["w1_t"], p["b1"], p["w2_t"], p["b2"], gamma, beta]
    if final_ln:
        in_specs += [_wspec((1, E), wmap), _wspec((1, E), wmap)]
        args += [final_norm[0], final_norm[1]]
    return pl.pallas_call(
        kernel,
        out_shape=jax.ShapeDtypeStruct((M, E), jnp.bfloat16),
        grid=(M // tm,),
        in_specs=in_specs,
        out_specs=pl.BlockSpec((tm, E), lambda i: (i, 0)),
        compiler_params=pltpu.CompilerParams(
            dimension_semantics=("parallel",),
            vmem_limit_bytes=_VMEM_LIMIT),
    )(*args)


# ----------------------------------------------------------------------------
# Kernel 3: tiled linear (generator projections), f32 VMEM accumulator
# ----------------------------------------------------------------------------

def _linear_kernel(x_ref, w_ref, b_ref, o_ref, acc_ref):
    @pl.when(pl.program_id(2) == 0)
    def _():
        acc_ref[...] = jnp.zeros(acc_ref.shape, jnp.float32)

    acc_ref[...] += jnp.dot(x_ref[...], w_ref[...],
                            preferred_element_type=jnp.float32)

    @pl.when(pl.program_id(2) == pl.num_programs(2) - 1)
    def _():
        o_ref[...] = acc_ref[...] + b_ref[...]                  # bias epilogue


def pallas_linear(x2d, wt, b2):
    """y = x @ W^T + b with x (M, K) bf16, W^T (K, Nout) bf16, b (1, Nout) f32."""
    x2d = x2d.astype(jnp.bfloat16)
    M, K = x2d.shape
    Nout = wt.shape[1]
    tm = _row_tile(M, 256)
    tn = _pick_tile(Nout, 256, 128)
    tk = _pick_tile(K, 512, 128)
    grid = (M // tm, Nout // tn, K // tk)
    return pl.pallas_call(
        _linear_kernel,
        out_shape=jax.ShapeDtypeStruct((M, Nout), jnp.float32),
        grid=grid,
        in_specs=[
            pl.BlockSpec((tm, tk), lambda i, j, k: (i, k)),
            pl.BlockSpec((tk, tn), lambda i, j, k: (k, j)),
            pl.BlockSpec((1, tn), lambda i, j, k: (0, j)),
        ],
        out_specs=pl.BlockSpec((tm, tn), lambda i, j, k: (i, j)),
        scratch_shapes=[pltpu.VMEM((tm, tn), jnp.float32)],
        compiler_params=pltpu.CompilerParams(
            dimension_semantics=("parallel", "parallel", "arbitrary"),
            vmem_limit_bytes=_VMEM_LIMIT),
    )(x2d, wt, b2)


# ----------------------------------------------------------------------------
# Transformer building blocks (batch-first (N, S, E) bf16 throughout)
# ----------------------------------------------------------------------------

def _attn_mask_to_additive(mask, Sq, Sk):
    if mask is None:
        return jnp.zeros((Sq, Sk), jnp.float32)
    if mask.dtype == jnp.bool_:                   # True = disallowed (PyTorch)
        return jnp.where(mask, NEG_INF, 0.0).astype(jnp.float32)
    return mask.astype(jnp.float32)               # already additive


def _kpm_to_additive(kpm, N, S):
    if kpm is None:
        return jnp.zeros((N, 1, S), jnp.float32)
    if kpm.dtype == jnp.bool_:                    # True = pad (PyTorch)
        add = jnp.where(kpm, NEG_INF, 0.0)
    else:
        add = kpm
    return add.astype(jnp.float32).reshape(N, 1, S)


def encoder_layer(x, lp, attn_mask, kpm_add, nhead, final_norm=None):
    N, S, E = x.shape
    x = pallas_mha_ln(x, x, attn_mask, kpm_add, lp["self_attn"],
                      lp["ln1_g"], lp["ln1_b"], nhead)
    x = pallas_ffn_ln(x.reshape(N * S, E), lp, lp["ln2_g"], lp["ln2_b"],
                      final_norm=final_norm)
    return x.reshape(N, S, E)


def decoder_layer(x, memory, lp, tgt_mask, mem_mask, tgt_kpm_add, mem_kpm_add,
                  nhead, final_norm=None):
    N, S, E = x.shape
    x = pallas_mha_ln(x, x, tgt_mask, tgt_kpm_add, lp["self_attn"],
                      lp["ln1_g"], lp["ln1_b"], nhead)
    x = pallas_mha_ln(x, memory, mem_mask, mem_kpm_add, lp["cross_attn"],
                      lp["ln2_g"], lp["ln2_b"], nhead)
    x = pallas_ffn_ln(x.reshape(N * S, E), lp, lp["ln3_g"], lp["ln3_b"],
                      final_norm=final_norm)
    return x.reshape(N, S, E)


def encode(enc_params, x_nse, src_mask, src_kpm, nhead):
    """x_nse: (N, S, E) bf16 -> memory (N, S, E) bf16 (final norm fused)."""
    N, S, E = x_nse.shape
    amask = _attn_mask_to_additive(src_mask, S, S)
    kpm_add = _kpm_to_additive(src_kpm, N, S)
    layers = enc_params["layers"]
    x = x_nse
    for li, lp in enumerate(layers):
        fin = ((enc_params["norm_g"], enc_params["norm_b"])
               if li == len(layers) - 1 else None)
        x = encoder_layer(x, lp, amask, kpm_add, nhead, final_norm=fin)
    return x


def decode(dec_params, x_nse, mem_nse, tgt_mask, mem_mask, tgt_kpm, mem_kpm,
           nhead):
    """x_nse: (N, St, E) bf16, mem_nse: (N, Ss, E) bf16 -> (N, St, E) bf16."""
    N, St, E = x_nse.shape
    Ss = mem_nse.shape[1]
    tmask = _attn_mask_to_additive(tgt_mask, St, St)
    mmask = _attn_mask_to_additive(mem_mask, St, Ss)
    tkpm = _kpm_to_additive(tgt_kpm, N, St)
    mkpm = _kpm_to_additive(mem_kpm, N, Ss)
    layers = dec_params["layers"]
    x = x_nse
    for li, lp in enumerate(layers):
        fin = ((dec_params["norm_g"], dec_params["norm_b"])
               if li == len(layers) - 1 else None)
        x = decoder_layer(x, mem_nse, lp, tmask, mmask, tkpm, mkpm, nhead,
                          final_norm=fin)
    return x


# ----------------------------------------------------------------------------
# Embeddings / positional encoding (glue)
# ----------------------------------------------------------------------------

def make_positional_encoding(emb_size, maxlen=5000):
    den = jnp.exp(-jnp.arange(0, emb_size, 2, dtype=jnp.float32)
                  * (math.log(10000.0) / emb_size))
    pos = jnp.arange(0, maxlen, dtype=jnp.float32).reshape(maxlen, 1)
    pe = jnp.zeros((maxlen, emb_size), jnp.float32)
    pe = pe.at[:, 0::2].set(jnp.sin(pos * den))
    pe = pe.at[:, 1::2].set(jnp.cos(pos * den))
    return pe[:, None, :]                                       # (maxlen, 1, E)


def embed(tokens, table, emb_size, pe):
    """token embedding * sqrt(E) + PE (dropout = identity in eval mode),
       returned batch-first in bf16: (N, S, E)."""
    x = jnp.take(table, tokens, axis=0) * math.sqrt(emb_size)   # (S, N, E) f32
    x = x + pe[: x.shape[0], :]
    return jnp.transpose(x, (1, 0, 2)).astype(jnp.bfloat16)     # (N, S, E) bf16


# ----------------------------------------------------------------------------
# Parameter initialization (deterministic, synthetic)
# Weights are stored pre-transposed (W^T) in bf16; biases / LN params in f32.
# ----------------------------------------------------------------------------

def _init_mha(key, E):
    ks = jax.random.split(key, 4)
    s = 0.02
    wq = jax.random.normal(ks[0], (E, E), jnp.float32) * s
    wk = jax.random.normal(ks[1], (E, E), jnp.float32) * s
    wv = jax.random.normal(ks[2], (E, E), jnp.float32) * s
    wo = jax.random.normal(ks[3], (E, E), jnp.float32) * s
    zb = jnp.zeros((1, E), jnp.float32)
    return dict(
        wq_t=wq.T.astype(jnp.bfloat16), bq=zb,
        wk_t=wk.T.astype(jnp.bfloat16), bk=zb,
        wv_t=wv.T.astype(jnp.bfloat16), bv=zb,
        wo_t=wo.T.astype(jnp.bfloat16), bo=zb,
    )


def _init_enc_layer(key, E, F):
    ks = jax.random.split(key, 3)
    s = 0.02
    w1 = jax.random.normal(ks[1], (F, E), jnp.float32) * s
    w2 = jax.random.normal(ks[2], (E, F), jnp.float32) * s
    return dict(
        self_attn=_init_mha(ks[0], E),
        w1_t=w1.T.astype(jnp.bfloat16), b1=jnp.zeros((1, F), jnp.float32),
        w2_t=w2.T.astype(jnp.bfloat16), b2=jnp.zeros((1, E), jnp.float32),
        ln1_g=jnp.ones((1, E), jnp.float32), ln1_b=jnp.zeros((1, E), jnp.float32),
        ln2_g=jnp.ones((1, E), jnp.float32), ln2_b=jnp.zeros((1, E), jnp.float32),
    )


def _init_dec_layer(key, E, F):
    ks = jax.random.split(key, 4)
    s = 0.02
    w1 = jax.random.normal(ks[2], (F, E), jnp.float32) * s
    w2 = jax.random.normal(ks[3], (E, F), jnp.float32) * s
    return dict(
        self_attn=_init_mha(ks[0], E),
        cross_attn=_init_mha(ks[1], E),
        w1_t=w1.T.astype(jnp.bfloat16), b1=jnp.zeros((1, F), jnp.float32),
        w2_t=w2.T.astype(jnp.bfloat16), b2=jnp.zeros((1, E), jnp.float32),
        ln1_g=jnp.ones((1, E), jnp.float32), ln1_b=jnp.zeros((1, E), jnp.float32),
        ln2_g=jnp.ones((1, E), jnp.float32), ln2_b=jnp.zeros((1, E), jnp.float32),
        ln3_g=jnp.ones((1, E), jnp.float32), ln3_b=jnp.zeros((1, E), jnp.float32),
    )


def _init_generator(key, E, vocab):
    """Vocab projection: W^T padded along vocab to a multiple of 128 so the
    output store is lane-dense; the un-pad slice is a no-op when vocab%128==0."""
    s = 0.02
    vpad = _round_up(vocab, 128)
    w = jax.random.normal(key, (vocab, E), jnp.float32) * s
    wt = jnp.zeros((E, vpad), jnp.float32).at[:, :vocab].set(w.T)
    return dict(wt=wt.astype(jnp.bfloat16),
                b=jnp.zeros((1, vpad), jnp.float32),
                vocab=vocab)


def init_params(key, num_enc, num_dec, E, F, src_vocab, tgt_vocab):
    ks = jax.random.split(key, 8)

    def stack(init_fn, k, n):
        return dict(layers=[init_fn(jax.random.fold_in(k, i), E, F)
                            for i in range(n)],
                    norm_g=jnp.ones((1, E), jnp.float32),
                    norm_b=jnp.zeros((1, E), jnp.float32))

    return dict(
        encoder1=stack(_init_enc_layer, ks[0], num_enc),
        decoder1=stack(_init_dec_layer, ks[1], num_dec),
        encoder2=stack(_init_enc_layer, ks[2], num_enc),
        decoder2=stack(_init_dec_layer, ks[3], num_dec),
        src_emb=jax.random.normal(ks[4], (src_vocab, E), jnp.float32),
        tgt_emb=jax.random.normal(ks[5], (tgt_vocab, E), jnp.float32),
        gen1=_init_generator(ks[6], E, tgt_vocab),
        gen2=_init_generator(ks[7], E, src_vocab),
    )


# ----------------------------------------------------------------------------
# Seq2SeqTransformer forward
# ----------------------------------------------------------------------------

def _apply_generator(out_sne, gen):
    S, N, E = out_sne.shape
    y = pallas_linear(out_sne.reshape(S * N, E), gen["wt"], gen["b"])
    v = gen["vocab"]
    if y.shape[1] != v:
        y = y[:, :v]
    return y.reshape(S, N, v)


def seq2seq_forward(params, pe, nhead, emb_size,
                    src1, trg1, src2, trg2,
                    src_mask1, tgt_mask1, src_mask2, tgt_mask2,
                    src_padding_mask1, tgt_padding_mask1, memory_key_padding_mask1,
                    src_padding_mask2, tgt_padding_mask2, memory_key_padding_mask2):
    # embeddings (batch-first bf16)
    src_emb1 = embed(src1, params["src_emb"], emb_size, pe)
    tgt_emb1 = embed(trg1, params["tgt_emb"], emb_size, pe)
    src_emb2 = embed(src2, params["tgt_emb"], emb_size, pe)
    tgt_emb2 = embed(trg2, params["src_emb"], emb_size, pe)

    mem1 = encode(params["encoder1"], src_emb1, src_mask1, src_padding_mask1, nhead)
    out1 = decode(params["decoder1"], tgt_emb1, mem1, tgt_mask1, None,
                  tgt_padding_mask1, memory_key_padding_mask1, nhead)
    mem2 = encode(params["encoder2"], src_emb2, src_mask2, src_padding_mask2, nhead)
    out2 = decode(params["decoder2"], tgt_emb2, mem2, tgt_mask2, None,
                  tgt_padding_mask2, memory_key_padding_mask2, nhead)

    # return memories seq-first / f32 (PyTorch layout); decoder outputs go
    # seq-first through the generator so the logits never need a transpose.
    h1 = jnp.transpose(mem1, (1, 0, 2)).astype(jnp.float32)
    h2 = jnp.transpose(mem2, (1, 0, 2)).astype(jnp.float32)
    out1_sne = jnp.transpose(out1, (1, 0, 2))
    out2_sne = jnp.transpose(out2, (1, 0, 2))
    gen1 = _apply_generator(out1_sne, params["gen1"])
    gen2 = _apply_generator(out2_sne, params["gen2"])
    return h1, h2, gen1, gen2


# ----------------------------------------------------------------------------
# Main
# ----------------------------------------------------------------------------

if __name__ == "__main__":
    key = jax.random.PRNGKey(0)

    # resolve the Buffered(1) capability once, outside any tracing
    _weight_buffer_mode()

    # small config
    NUM_ENC, NUM_DEC = 1, 1
    EMB, NHEAD, FF = 32, 4, 64
    SRC_VOCAB, TGT_VOCAB = 50, 60
    S, N = 8, 2   # seq-len, batch
    assert EMB % NHEAD == 0

    kp, k1, k2, k3, k4 = jax.random.split(key, 5)
    params = init_params(kp, NUM_ENC, NUM_DEC, EMB, FF, SRC_VOCAB, TGT_VOCAB)
    pe = make_positional_encoding(EMB)

    src1 = jax.random.randint(k1, (S, N), 0, SRC_VOCAB, dtype=jnp.int32)
    trg1 = jax.random.randint(k2, (S, N), 0, TGT_VOCAB, dtype=jnp.int32)
    src2 = jax.random.randint(k3, (S, N), 0, TGT_VOCAB, dtype=jnp.int32)  # uses tgt_tok_emb
    trg2 = jax.random.randint(k4, (S, N), 0, SRC_VOCAB, dtype=jnp.int32)  # uses src_tok_emb

    # additive float attention masks (bool masks are also handled in-code).
    # NOTE: fully-masked rows give a uniform softmax here (PyTorch gives NaN);
    # finite NEG_INF keeps f32 score math well-behaved.
    zero_mask = jnp.zeros((S, S), jnp.float32)
    causal = jnp.where(jnp.triu(jnp.ones((S, S), bool), k=1),
                       NEG_INF, 0.0).astype(jnp.float32)
    src_mask1, tgt_mask1 = zero_mask, causal
    src_mask2, tgt_mask2 = zero_mask, causal

    # boolean key-padding masks (True = pad); no padding in this example
    no_pad = jnp.zeros((N, S), bool)
    src_kpm1 = tgt_kpm1 = mem_kpm1 = no_pad
    src_kpm2 = tgt_kpm2 = mem_kpm2 = no_pad

    h1, h2, g1, g2 = seq2seq_forward(
        params, pe, NHEAD, EMB,
        src1, trg1, src2, trg2,
        src_mask1, tgt_mask1, src_mask2, tgt_mask2,
        src_kpm1, tgt_kpm1, mem_kpm1,
        src_kpm2, tgt_kpm2, mem_kpm2)

    jax.block_until_ready((h1, h2, g1, g2))
    assert h1.shape == (S, N, EMB) and h2.shape == (S, N, EMB)
    assert g1.shape == (S, N, TGT_VOCAB) and g2.shape == (S, N, SRC_VOCAB)
    assert bool(jnp.all(jnp.isfinite(h1))) and bool(jnp.all(jnp.isfinite(h2)))
    assert bool(jnp.all(jnp.isfinite(g1))) and bool(jnp.all(jnp.isfinite(g2)))
    print("KERNEL_OK")
</pallas_src>

<mosaic_0001>
module attributes {stable_mosaic.version = 11 : i64} {
  func.func @_probe_kernel(%arg0: i32, %arg1: memref<8x128xf32, #tpu.memory_space<vmem>>, %arg2: memref<8x128xf32, #tpu.memory_space<vmem>>) attributes {dimension_semantics = [#tpu.dimension_semantics<arbitrary>], iteration_bounds = array<i64: 2>, scalar_prefetch = 0 : i64, scratch_operands = 0 : i64, tpu.core_type = #tpu.core_type<tc>, window_params = [{pipeline_mode = #tpu.pipeline_mode<synchronous>, transform_indices = @transform_0, window_bounds = array<i64: 8, 128>}, {pipeline_mode = #tpu.pipeline_mode<synchronous>, transform_indices = @transform_1, window_bounds = array<i64: 8, 128>}]} {
    %c0 = arith.constant 0 : index
    %c0_0 = arith.constant 0 : index
    %0 = vector.load %arg1[%c0, %c0_0] : memref<8x128xf32, #tpu.memory_space<vmem>>, vector<8x128xf32>
    %c0_1 = arith.constant 0 : index
    %c0_2 = arith.constant 0 : index
    %1 = vector.load %arg2[%c0_1, %c0_2] : memref<8x128xf32, #tpu.memory_space<vmem>>, vector<8x128xf32>
    tpu.vector_store %arg2[%c0_1, %c0_2], %0 {strides = array<i32>} : memref<8x128xf32, #tpu.memory_space<vmem>>, vector<8x128xf32>,
    return
  }
  func.func @transform_0(%arg0: i32) -> (i32, i32) {
    %c0_i32 = arith.constant 0 : i32
    %c0_i32_0 = arith.constant 0 : i32
    %c0_i32_1 = arith.constant 0 : i32
    return %c0_i32, %c0_i32_0 : i32, i32
  }
  func.func @transform_1(%arg0: i32) -> (i32, i32) {
    %c0_i32 = arith.constant 0 : i32
    %c0_i32_0 = arith.constant 0 : i32
    %c0_i32_1 = arith.constant 0 : i32
    return %c0_i32, %c0_i32_0 : i32, i32
  }
}

module attributes {stable_mosaic.version = 11 : i64} {
  func.func @_mha_ln_kernel(%arg0: i32, %arg1: i32, %arg2: memref<1x8x32xbf16, #tpu.memory_space<vmem>>, %arg3: memref<1x8x32xbf16, #tpu.memory_space<vmem>>, %arg4: memref<8x8xf32, #tpu.memory_space<vmem>>, %arg5: memref<1x1x8xf32, #tpu.memory_space<vmem>>, %arg6: memref<32x32xbf16, #tpu.memory_space<vmem>>, %arg7: memref<1x32xf32, #tpu.memory_space<vmem>>, %arg8: memref<32x32xbf16, #tpu.memory_space<vmem>>, %arg9: memref<1x32xf32, #tpu.memory_space<vmem>>, %arg10: memref<32x32xbf16, #tpu.memory_space<vmem>>, %arg11: memref<1x32xf32, #tpu.memory_space<vmem>>, %arg12: memref<32x32xbf16, #tpu.memory_space<vmem>>, %arg13: memref<1x32xf32, #tpu.memory_space<vmem>>, %arg14: memref<1x32xf32, #tpu.memory_space<vmem>>, %arg15: memref<1x32xf32, #tpu.memory_space<vmem>>, %arg16: memref<1x8x32xbf16, #tpu.memory_space<vmem>>, %arg17: memref<8x32xbf16, #tpu.memory_space<vmem>>, %arg18: memref<4x8x1xf32, #tpu.memory_space<vmem>>, %arg19: memref<4x8x1xf32, #tpu.memory_space<vmem>>, %arg20: memref<4x8x8xf32, #tpu.memory_space<vmem>>) attributes {dimension_semantics = [#tpu.dimension_semantics<parallel>, #tpu.dimension_semantics<arbitrary>], iteration_bounds = array<i64: 2, 1>, scalar_prefetch = 0 : i64, scratch_operands = 4 : i64, tpu.core_type = #tpu.core_type<tc>, window_params = [{transform_indices = @transform_0, window_bounds = array<i64: 1, 8, 32>}, {transform_indices = @transform_1, window_bounds = array<i64: 1, 8, 32>}, {transform_indices = @transform_2, window_bounds = array<i64: 8, 8>}, {transform_indices = @transform_3, window_bounds = array<i64: 1, 1, 8>}, {pipeline_mode = #tpu.pipeline_mode<synchronous>, transform_indices = @transform_4, window_bounds = array<i64: 32, 32>}, {pipeline_mode = #tpu.pipeline_mode<synchronous>, transform_indices = @transform_5, window_bounds = array<i64: 1, 32>}, {pipeline_mode = #tpu.pipeline_mode<synchronous>, transform_indices = @transform_6, window_bounds = array<i64: 32, 32>}, {pipeline_mode = #tpu.pipeline_mode<synchronous>, transform_indices = @transform_7, window_bounds = array<i64: 1, 32>}, {pipeline_mode = #tpu.pipeline_mode<synchronous>, transform_indices = @transform_8, window_bounds = array<i64: 32, 32>}, {pipeline_mode = #tpu.pipeline_mode<synchronous>, transform_indices = @transform_9, window_bounds = array<i64: 1, 32>}, {pipeline_mode = #tpu.pipeline_mode<synchronous>, transform_indices = @transform_10, window_bounds = array<i64: 32, 32>}, {pipeline_mode = #tpu.pipeline_mode<synchronous>, transform_indices = @transform_11, window_bounds = array<i64: 1, 32>}, {pipeline_mode = #tpu.pipeline_mode<synchronous>, transform_indices = @transform_12, window_bounds = array<i64: 1, 32>}, {pipeline_mode = #tpu.pipeline_mode<synchronous>, transform_indices = @transform_13, window_bounds = array<i64: 1, 32>}, {transform_indices = @transform_14, window_bounds = array<i64: 1, 8, 32>}]} {
    %c0_i32 = arith.constant 0 : i32
    %0 = arith.cmpi eq, %arg1, %c0_i32 : i32
    %1 = arith.extui %0 : i1 to i32
    %c0_i32_0 = arith.constant 0 : i32
    %2 = arith.cmpi ne, %1, %c0_i32_0 : i32
    scf.if %2 {
      %c0_106 = arith.constant 0 : index
      %c0_107 = arith.constant 0 : index
      %c0_108 = arith.constant 0 : index
      %184 = vector.load %arg2[%c0_106, %c0_107, %c0_108] : memref<1x8x32xbf16, #tpu.memory_space<vmem>>, vector<1x8x32xbf16>
      %185 = vector.shape_cast %184 : vector<1x8x32xbf16> to vector<8x32xbf16>
      %c0_109 = arith.constant 0 : index
      %c0_110 = arith.constant 0 : index
      %186 = vector.load %arg6[%c0_109, %c0_110] : memref<32x32xbf16, #tpu.memory_space<vmem>>, vector<32x32xbf16>
      %cst_111 = arith.constant dense<0.000000e+00> : vector<8x32xf32>
      %187 = tpu.matmul %185, %186, %cst_111 {dimension_numbers = #tpu.dot_dimension_numbers<[1], [0], [0], [1], [0, 0, 1, 1], [], []>} : vector<8x32xbf16>, vector<32x32xbf16>, vector<8x32xf32> -> vector<8x32xf32>
      %c0_112 = arith.constant 0 : index
      %c0_113 = arith.constant 0 : index
      %188 = vector.load %arg7[%c0_112, %c0_113] : memref<1x32xf32, #tpu.memory_space<vmem>>, vector<1x32xf32>
      %189 = vector.broadcast %188 : vector<1x32xf32> to vector<8x32xf32>
      %190 = arith.addf %187, %189 : vector<8x32xf32>
      %cst_114 = arith.constant 0.353553385 : f32
      %191 = vector.broadcast %cst_114 : f32 to vector<8x32xf32>
      %192 = arith.mulf %190, %191 : vector<8x32xf32>
      %193 = arith.truncf %192 : vector<8x32xf32> to vector<8x32xbf16>
      %c0_115 = arith.constant 0 : index
      %c0_116 = arith.constant 0 : index
      %194 = vector.load %arg17[%c0_115, %c0_116] : memref<8x32xbf16, #tpu.memory_space<vmem>>, vector<8x32xbf16>
      tpu.vector_store %arg17[%c0_115, %c0_116], %193 {strides = array<i32>} : memref<8x32xbf16, #tpu.memory_space<vmem>>, vector<8x32xbf16>,
      %cst_117 = arith.constant 0xFF800000 : f32
      %195 = vector.broadcast %cst_117 : f32 to vector<4x8x1xf32>
      %c0_118 = arith.constant 0 : index
      %c0_119 = arith.constant 0 : index
      %c0_120 = arith.constant 0 : index
      %196 = vector.load %arg18[%c0_118, %c0_119, %c0_120] : memref<4x8x1xf32, #tpu.memory_space<vmem>>, vector<4x8x1xf32>
      tpu.vector_store %arg18[%c0_118, %c0_119, %c0_120], %195 {strides = array<i32>} : memref<4x8x1xf32, #tpu.memory_space<vmem>>, vector<4x8x1xf32>,
      %cst_121 = arith.constant 0.000000e+00 : f32
      %197 = vector.broadcast %cst_121 : f32 to vector<4x8x1xf32>
      %c0_122 = arith.constant 0 : index
      %c0_123 = arith.constant 0 : index
      %c0_124 = arith.constant 0 : index
      %198 = vector.load %arg19[%c0_122, %c0_123, %c0_124] : memref<4x8x1xf32, #tpu.memory_space<vmem>>, vector<4x8x1xf32>
      tpu.vector_store %arg19[%c0_122, %c0_123, %c0_124], %197 {strides = array<i32>} : memref<4x8x1xf32, #tpu.memory_space<vmem>>, vector<4x8x1xf32>,
      %cst_125 = arith.constant 0.000000e+00 : f32
      %199 = vector.broadcast %cst_125 : f32 to vector<4x8x8xf32>
      %c0_126 = arith.constant 0 : index
      %c0_127 = arith.constant 0 : index
      %c0_128 = arith.constant 0 : index
      %200 = vector.load %arg20[%c0_126, %c0_127, %c0_128] : memref<4x8x8xf32, #tpu.memory_space<vmem>>, vector<4x8x8xf32>
      tpu.vector_store %arg20[%c0_126, %c0_127, %c0_128], %199 {strides = array<i32>} : memref<4x8x8xf32, #tpu.memory_space<vmem>>, vector<4x8x8xf32>,
    } else {
    }
    %c0 = arith.constant 0 : index
    %c0_1 = arith.constant 0 : index
    %c0_2 = arith.constant 0 : index
    %3 = vector.load %arg3[%c0, %c0_1, %c0_2] : memref<1x8x32xbf16, #tpu.memory_space<vmem>>, vector<1x8x32xbf16>
    %4 = vector.shape_cast %3 : vector<1x8x32xbf16> to vector<8x32xbf16>
    %c0_3 = arith.constant 0 : index
    %c0_4 = arith.constant 0 : index
    %5 = vector.load %arg8[%c0_3, %c0_4] : memref<32x32xbf16, #tpu.memory_space<vmem>>, vector<32x32xbf16>
    %cst = arith.constant dense<0.000000e+00> : vector<8x32xf32>
    %6 = tpu.matmul %4, %5, %cst {dimension_numbers = #tpu.dot_dimension_numbers<[1], [0], [0], [1], [0, 0, 1, 1], [], []>} : vector<8x32xbf16>, vector<32x32xbf16>, vector<8x32xf32> -> vector<8x32xf32>
    %c0_5 = arith.constant 0 : index
    %c0_6 = arith.constant 0 : index
    %7 = vector.load %arg9[%c0_5, %c0_6] : memref<1x32xf32, #tpu.memory_space<vmem>>, vector<1x32xf32>
    %8 = vector.broadcast %7 : vector<1x32xf32> to vector<8x32xf32>
    %9 = arith.addf %6, %8 : vector<8x32xf32>
    %c0_7 = arith.constant 0 : index
    %c0_8 = arith.constant 0 : index
    %10 = vector.load %arg10[%c0_7, %c0_8] : memref<32x32xbf16, #tpu.memory_space<vmem>>, vector<32x32xbf16>
    %cst_9 = arith.constant dense<0.000000e+00> : vector<8x32xf32>
    %11 = tpu.matmul %4, %10, %cst_9 {dimension_numbers = #tpu.dot_dimension_numbers<[1], [0], [0], [1], [0, 0, 1, 1], [], []>} : vector<8x32xbf16>, vector<32x32xbf16>, vector<8x32xf32> -> vector<8x32xf32>
    %c0_10 = arith.constant 0 : index
    %c0_11 = arith.constant 0 : index
    %12 = vector.load %arg11[%c0_10, %c0_11] : memref<1x32xf32, #tpu.memory_space<vmem>>, vector<1x32xf32>
    %13 = vector.broadcast %12 : vector<1x32xf32> to vector<8x32xf32>
    %14 = arith.addf %11, %13 : vector<8x32xf32>
    %c0_12 = arith.constant 0 : index
    %c0_13 = arith.constant 0 : index
    %15 = vector.load %arg4[%c0_12, %c0_13] : memref<8x8xf32, #tpu.memory_space<vmem>>, vector<8x8xf32>
    %c0_14 = arith.constant 0 : index
    %c0_15 = arith.constant 0 : index
    %c0_16 = arith.constant 0 : index
    %16 = vector.load %arg5[%c0_14, %c0_15, %c0_16] : memref<1x1x8xf32, #tpu.memory_space<vmem>>, vector<1x1x8xf32>
    %17 = vector.shape_cast %16 : vector<1x1x8xf32> to vector<1x8xf32>
    %18 = vector.broadcast %17 : vector<1x8xf32> to vector<8x8xf32>
    %19 = arith.addf %15, %18 : vector<8x8xf32>
    %c0_17 = arith.constant 0 : index
    %c0_18 = arith.constant 0 : index
    %20 = vector.load %arg17[%c0_17, %c0_18] : memref<8x32xbf16, #tpu.memory_space<vmem>>, vector<8x32xbf16>
    %21 = vector.extract_strided_slice %9 {offsets = [0, 0], sizes = [8, 8], strides = [1, 1]} : vector<8x32xf32> to vector<8x8xf32>
    %22 = arith.truncf %21 : vector<8x8xf32> to vector<8x8xbf16>
    %23 = vector.extract_strided_slice %14 {offsets = [0, 0], sizes = [8, 8], strides = [1, 1]} : vector<8x32xf32> to vector<8x8xf32>
    %24 = arith.truncf %23 : vector<8x8xf32> to vector<8x8xbf16>
    %25 = vector.extract_strided_slice %20 {offsets = [0, 0], sizes = [8, 8], strides = [1, 1]} : vector<8x32xbf16> to vector<8x8xbf16>
    %26 = tpu.transpose %22, [1, 0] : vector<8x8xbf16> -> vector<8x8xbf16>
    %cst_19 = arith.constant dense<0.000000e+00> : vector<8x8xf32>
    %27 = tpu.matmul %25, %26, %cst_19 {dimension_numbers = #tpu.dot_dimension_numbers<[1], [0], [0], [1], [0, 0, 1, 1], [], []>} : vector<8x8xbf16>, vector<8x8xbf16>, vector<8x8xf32> -> vector<8x8xf32>
    %28 = arith.addf %27, %19 : vector<8x8xf32>
    %c0_20 = arith.constant 0 : index
    %c0_21 = arith.constant 0 : index
    %c0_22 = arith.constant 0 : index
    %29 = vector.load %arg18[%c0_20, %c0_21, %c0_22] : memref<4x8x1xf32, #tpu.memory_space<vmem>>, vector<1x8x1xf32>
    %30 = vector.shape_cast %29 : vector<1x8x1xf32> to vector<8x1xf32>
    %cst_23 = arith.constant dense<0xFF800000> : vector<8xf32>
    %31 = vector.multi_reduction <maximumf>, %28, %cst_23 [1] : vector<8x8xf32> to vector<8xf32>
    %32 = vector.shape_cast %31 : vector<8xf32> to vector<8x1xf32>
    %33 = arith.maximumf %30, %32 : vector<8x1xf32>
    %34 = arith.subf %30, %33 : vector<8x1xf32>
    %35 = math.exp %34 : vector<8x1xf32>
    %36 = vector.broadcast %33 : vector<8x1xf32> to vector<8x8xf32>
    %37 = arith.subf %28, %36 : vector<8x8xf32>
    %38 = math.exp %37 : vector<8x8xf32>
    %c0_24 = arith.constant 0 : index
    %c0_25 = arith.constant 0 : index
    %c0_26 = arith.constant 0 : index
    %39 = vector.load %arg19[%c0_24, %c0_25, %c0_26] : memref<4x8x1xf32, #tpu.memory_space<vmem>>, vector<1x8x1xf32>
    %40 = vector.shape_cast %39 : vector<1x8x1xf32> to vector<8x1xf32>
    %41 = arith.mulf %35, %40 : vector<8x1xf32>
    %cst_27 = arith.constant dense<0.000000e+00> : vector<8xf32>
    %42 = vector.multi_reduction <add>, %38, %cst_27 [1] : vector<8x8xf32> to vector<8xf32>
    %43 = vector.shape_cast %42 : vector<8xf32> to vector<8x1xf32>
    %44 = arith.addf %41, %43 : vector<8x1xf32>
    %c0_28 = arith.constant 0 : index
    %c0_29 = arith.constant 0 : index
    %c0_30 = arith.constant 0 : index
    %45 = vector.load %arg19[%c0_28, %c0_29, %c0_30] : memref<4x8x1xf32, #tpu.memory_space<vmem>>, vector<1x8x1xf32>
    %46 = vector.shape_cast %45 : vector<1x8x1xf32> to vector<8x1xf32>
    %47 = vector.shape_cast %44 : vector<8x1xf32> to vector<1x8x1xf32>
    tpu.vector_store %arg19[%c0_28, %c0_29, %c0_30], %47 {strides = array<i32>} : memref<4x8x1xf32, #tpu.memory_space<vmem>>, vector<1x8x1xf32>,
    %c0_31 = arith.constant 0 : index
    %c0_32 = arith.constant 0 : index
    %c0_33 = arith.constant 0 : index
    %48 = vector.load %arg20[%c0_31, %c0_32, %c0_33] : memref<4x8x8xf32, #tpu.memory_space<vmem>>, vector<1x8x8xf32>
    %49 = vector.shape_cast %48 : vector<1x8x8xf32> to vector<8x8xf32>
    %50 = vector.broadcast %35 : vector<8x1xf32> to vector<8x8xf32>
    %51 = arith.mulf %50, %49 : vector<8x8xf32>
    %52 = arith.truncf %38 : vector<8x8xf32> to vector<8x8xbf16>
    %cst_34 = arith.constant dense<0.000000e+00> : vector<8x8xf32>
    %53 = tpu.matmul %52, %24, %cst_34 {dimension_numbers = #tpu.dot_dimension_numbers<[1], [0], [0], [1], [0, 0, 1, 1], [], []>} : vector<8x8xbf16>, vector<8x8xbf16>, vector<8x8xf32> -> vector<8x8xf32>
    %54 = arith.addf %51, %53 : vector<8x8xf32>
    %c0_35 = arith.constant 0 : index
    %c0_36 = arith.constant 0 : index
    %c0_37 = arith.constant 0 : index
    %55 = vector.load %arg20[%c0_35, %c0_36, %c0_37] : memref<4x8x8xf32, #tpu.memory_space<vmem>>, vector<1x8x8xf32>
    %56 = vector.shape_cast %55 : vector<1x8x8xf32> to vector<8x8xf32>
    %57 = vector.shape_cast %54 : vector<8x8xf32> to vector<1x8x8xf32>
    tpu.vector_store %arg20[%c0_35, %c0_36, %c0_37], %57 {strides = array<i32>} : memref<4x8x8xf32, #tpu.memory_space<vmem>>, vector<1x8x8xf32>,
    %c0_38 = arith.constant 0 : index
    %c0_39 = arith.constant 0 : index
    %c0_40 = arith.constant 0 : index
    %58 = vector.load %arg18[%c0_38, %c0_39, %c0_40] : memref<4x8x1xf32, #tpu.memory_space<vmem>>, vector<1x8x1xf32>
    %59 = vector.shape_cast %58 : vector<1x8x1xf32> to vector<8x1xf32>
    %60 = vector.shape_cast %33 : vector<8x1xf32> to vector<1x8x1xf32>
    tpu.vector_store %arg18[%c0_38, %c0_39, %c0_40], %60 {strides = array<i32>} : memref<4x8x1xf32, #tpu.memory_space<vmem>>, vector<1x8x1xf32>,
    %61 = vector.extract_strided_slice %9 {offsets = [0, 8], sizes = [8, 8], strides = [1, 1]} : vector<8x32xf32> to vector<8x8xf32>
    %62 = arith.truncf %61 : vector<8x8xf32> to vector<8x8xbf16>
    %63 = vector.extract_strided_slice %14 {offsets = [0, 8], sizes = [8, 8], strides = [1, 1]} : vector<8x32xf32> to vector<8x8xf32>
    %64 = arith.truncf %63 : vector<8x8xf32> to vector<8x8xbf16>
    %65 = vector.extract_strided_slice %20 {offsets = [0, 8], sizes = [8, 8], strides = [1, 1]} : vector<8x32xbf16> to vector<8x8xbf16>
    %66 = tpu.transpose %62, [1, 0] : vector<8x8xbf16> -> vector<8x8xbf16>
    %cst_41 = arith.constant dense<0.000000e+00> : vector<8x8xf32>
    %67 = tpu.matmul %65, %66, %cst_41 {dimension_numbers = #tpu.dot_dimension_numbers<[1], [0], [0], [1], [0, 0, 1, 1], [], []>} : vector<8x8xbf16>, vector<8x8xbf16>, vector<8x8xf32> -> vector<8x8xf32>
    %68 = arith.addf %67, %19 : vector<8x8xf32>
    %c1 = arith.constant 1 : index
    %c0_42 = arith.constant 0 : index
    %c0_43 = arith.constant 0 : index
    %69 = vector.load %arg18[%c1, %c0_42, %c0_43] : memref<4x8x1xf32, #tpu.memory_space<vmem>>, vector<1x8x1xf32>
    %70 = vector.shape_cast %69 : vector<1x8x1xf32> to vector<8x1xf32>
    %cst_44 = arith.constant dense<0xFF800000> : vector<8xf32>
    %71 = vector.multi_reduction <maximumf>, %68, %cst_44 [1] : vector<8x8xf32> to vector<8xf32>
    %72 = vector.shape_cast %71 : vector<8xf32> to vector<8x1xf32>
    %73 = arith.maximumf %70, %72 : vector<8x1xf32>
    %74 = arith.subf %70, %73 : vector<8x1xf32>
    %75 = math.exp %74 : vector<8x1xf32>
    %76 = vector.broadcast %73 : vector<8x1xf32> to vector<8x8xf32>
    %77 = arith.subf %68, %76 : vector<8x8xf32>
    %78 = math.exp %77 : vector<8x8xf32>
    %c1_45 = arith.constant 1 : index
    %c0_46 = arith.constant 0 : index
    %c0_47 = arith.constant 0 : index
    %79 = vector.load %arg19[%c1_45, %c0_46, %c0_47] : memref<4x8x1xf32, #tpu.memory_space<vmem>>, vector<1x8x1xf32>
    %80 = vector.shape_cast %79 : vector<1x8x1xf32> to vector<8x1xf32>
    %81 = arith.mulf %75, %80 : vector<8x1xf32>
    %cst_48 = arith.constant dense<0.000000e+00> : vector<8xf32>
    %82 = vector.multi_reduction <add>, %78, %cst_48 [1] : vector<8x8xf32> to vector<8xf32>
    %83 = vector.shape_cast %82 : vector<8xf32> to vector<8x1xf32>
    %84 = arith.addf %81, %83 : vector<8x1xf32>
    %c1_49 = arith.constant 1 : index
    %c0_50 = arith.constant 0 : index
    %c0_51 = arith.constant 0 : index
    %85 = vector.load %arg19[%c1_49, %c0_50, %c0_51] : memref<4x8x1xf32, #tpu.memory_space<vmem>>, vector<1x8x1xf32>
    %86 = vector.shape_cast %85 : vector<1x8x1xf32> to vector<8x1xf32>
    %87 = vector.shape_cast %84 : vector<8x1xf32> to vector<1x8x1xf32>
    tpu.vector_store %arg19[%c1_49, %c0_50, %c0_51], %87 {strides = array<i32>} : memref<4x8x1xf32, #tpu.memory_space<vmem>>, vector<1x8x1xf32>,
    %c1_52 = arith.constant 1 : index
    %c0_53 = arith.constant 0 : index
    %c0_54 = arith.constant 0 : index
    %88 = vector.load %arg20[%c1_52, %c0_53, %c0_54] : memref<4x8x8xf32, #tpu.memory_space<vmem>>, vector<1x8x8xf32>
    %89 = vector.shape_cast %88 : vector<1x8x8xf32> to vector<8x8xf32>
    %90 = vector.broadcast %75 : vector<8x1xf32> to vector<8x8xf32>
    %91 = arith.mulf %90, %89 : vector<8x8xf32>
    %92 = arith.truncf %78 : vector<8x8xf32> to vector<8x8xbf16>
    %cst_55 = arith.constant dense<0.000000e+00> : vector<8x8xf32>
    %93 = tpu.matmul %92, %64, %cst_55 {dimension_numbers = #tpu.dot_dimension_numbers<[1], [0], [0], [1], [0, 0, 1, 1], [], []>} : vector<8x8xbf16>, vector<8x8xbf16>, vector<8x8xf32> -> vector<8x8xf32>
    %94 = arith.addf %91, %93 : vector<8x8xf32>
    %c1_56 = arith.constant 1 : index
    %c0_57 = arith.constant 0 : index
    %c0_58 = arith.constant 0 : index
    %95 = vector.load %arg20[%c1_56, %c0_57, %c0_58] : memref<4x8x8xf32, #tpu.memory_space<vmem>>, vector<1x8x8xf32>
    %96 = vector.shape_cast %95 : vector<1x8x8xf32> to vector<8x8xf32>
    %97 = vector.shape_cast %94 : vector<8x8xf32> to vector<1x8x8xf32>
    tpu.vector_store %arg20[%c1_56, %c0_57, %c0_58], %97 {strides = array<i32>} : memref<4x8x8xf32, #tpu.memory_space<vmem>>, vector<1x8x8xf32>,
    %c1_59 = arith.constant 1 : index
    %c0_60 = arith.constant 0 : index
    %c0_61 = arith.constant 0 : index
    %98 = vector.load %arg18[%c1_59, %c0_60, %c0_61] : memref<4x8x1xf32, #tpu.memory_space<vmem>>, vector<1x8x1xf32>
    %99 = vector.shape_cast %98 : vector<1x8x1xf32> to vector<8x1xf32>
    %100 = vector.shape_cast %73 : vector<8x1xf32> to vector<1x8x1xf32>
    tpu.vector_store %arg18[%c1_59, %c0_60, %c0_61], %100 {strides = array<i32>} : memref<4x8x1xf32, #tpu.memory_space<vmem>>, vector<1x8x1xf32>,
    %101 = vector.extract_strided_slice %9 {offsets = [0, 16], sizes = [8, 8], strides = [1, 1]} : vector<8x32xf32> to vector<8x8xf32>
    %102 = arith.truncf %101 : vector<8x8xf32> to vector<8x8xbf16>
    %103 = vector.extract_strided_slice %14 {offsets = [0, 16], sizes = [8, 8], strides = [1, 1]} : vector<8x32xf32> to vector<8x8xf32>
    %104 = arith.truncf %103 : vector<8x8xf32> to vector<8x8xbf16>
    %105 = vector.extract_strided_slice %20 {offsets = [0, 16], sizes = [8, 8], strides = [1, 1]} : vector<8x32xbf16> to vector<8x8xbf16>
    %106 = tpu.transpose %102, [1, 0] : vector<8x8xbf16> -> vector<8x8xbf16>
    %cst_62 = arith.constant dense<0.000000e+00> : vector<8x8xf32>
    %107 = tpu.matmul %105, %106, %cst_62 {dimension_numbers = #tpu.dot_dimension_numbers<[1], [0], [0], [1], [0, 0, 1, 1], [], []>} : vector<8x8xbf16>, vector<8x8xbf16>, vector<8x8xf32> -> vector<8x8xf32>
    %108 = arith.addf %107, %19 : vector<8x8xf32>
    %c2 = arith.constant 2 : index
    %c0_63 = arith.constant 0 : index
    %c0_64 = arith.constant 0 : index
    %109 = vector.load %arg18[%c2, %c0_63, %c0_64] : memref<4x8x1xf32, #tpu.memory_space<vmem>>, vector<1x8x1xf32>
    %110 = vector.shape_cast %109 : vector<1x8x1xf32> to vector<8x1xf32>
    %cst_65 = arith.constant dense<0xFF800000> : vector<8xf32>
    %111 = vector.multi_reduction <maximumf>, %108, %cst_65 [1] : vector<8x8xf32> to vector<8xf32>
    %112 = vector.shape_cast %111 : vector<8xf32> to vector<8x1xf32>
    %113 = arith.maximumf %110, %112 : vector<8x1xf32>
    %114 = arith.subf %110, %113 : vector<8x1xf32>
    %115 = math.exp %114 : vector<8x1xf32>
    %116 = vector.broadcast %113 : vector<8x1xf32> to vector<8x8xf32>
    %117 = arith.subf %108, %116 : vector<8x8xf32>
    %118 = math.exp %117 : vector<8x8xf32>
    %c2_66 = arith.constant 2 : index
    %c0_67 = arith.constant 0 : index
    %c0_68 = arith.constant 0 : index
    %119 = vector.load %arg19[%c2_66, %c0_67, %c0_68] : memref<4x8x1xf32, #tpu.memory_space<vmem>>, vector<1x8x1xf32>
    %120 = vector.shape_cast %119 : vector<1x8x1xf32> to vector<8x1xf32>
    %121 = arith.mulf %115, %120 : vector<8x1xf32>
    %cst_69 = arith.constant dense<0.000000e+00> : vector<8xf32>
    %122 = vector.multi_reduction <add>, %118, %cst_69 [1] : vector<8x8xf32> to vector<8xf32>
    %123 = vector.shape_cast %122 : vector<8xf32> to vector<8x1xf32>
    %124 = arith.addf %121, %123 : vector<8x1xf32>
    %c2_70 = arith.constant 2 : index
    %c0_71 = arith.constant 0 : index
    %c0_72 = arith.constant 0 : index
    %125 = vector.load %arg19[%c2_70, %c0_71, %c0_72] : memref<4x8x1xf32, #tpu.memory_space<vmem>>, vector<1x8x1xf32>
    %126 = vector.shape_cast %125 : vector<1x8x1xf32> to vector<8x1xf32>
    %127 = vector.shape_cast %124 : vector<8x1xf32> to vector<1x8x1xf32>
    tpu.vector_store %arg19[%c2_70, %c0_71, %c0_72], %127 {strides = array<i32>} : memref<4x8x1xf32, #tpu.memory_space<vmem>>, vector<1x8x1xf32>,
    %c2_73 = arith.constant 2 : index
    %c0_74 = arith.constant 0 : index
    %c0_75 = arith.constant 0 : index
    %128 = vector.load %arg20[%c2_73, %c0_74, %c0_75] : memref<4x8x8xf32, #tpu.memory_space<vmem>>, vector<1x8x8xf32>
    %129 = vector.shape_cast %128 : vector<1x8x8xf32> to vector<8x8xf32>
    %130 = vector.broadcast %115 : vector<8x1xf32> to vector<8x8xf32>
    %131 = arith.mulf %130, %129 : vector<8x8xf32>
    %132 = arith.truncf %118 : vector<8x8xf32> to vector<8x8xbf16>
    %cst_76 = arith.constant dense<0.000000e+00> : vector<8x8xf32>
    %133 = tpu.matmul %132, %104, %cst_76 {dimension_numbers = #tpu.dot_dimension_numbers<[1], [0], [0], [1], [0, 0, 1, 1], [], []>} : vector<8x8xbf16>, vector<8x8xbf16>, vector<8x8xf32> -> vector<8x8xf32>
    %134 = arith.addf %131, %133 : vector<8x8xf32>
    %c2_77 = arith.constant 2 : index
    %c0_78 = arith.constant 0 : index
    %c0_79 = arith.constant 0 : index
    %135 = vector.load %arg20[%c2_77, %c0_78, %c0_79] : memref<4x8x8xf32, #tpu.memory_space<vmem>>, vector<1x8x8xf32>
    %136 = vector.shape_cast %135 : vector<1x8x8xf32> to vector<8x8xf32>
    %137 = vector.shape_cast %134 : vector<8x8xf32> to vector<1x8x8xf32>
    tpu.vector_store %arg20[%c2_77, %c0_78, %c0_79], %137 {strides = array<i32>} : memref<4x8x8xf32, #tpu.memory_space<vmem>>, vector<1x8x8xf32>,
    %c2_80 = arith.constant 2 : index
    %c0_81 = arith.constant 0 : index
    %c0_82 = arith.constant 0 : index
    %138 = vector.load %arg18[%c2_80, %c0_81, %c0_82] : memref<4x8x1xf32, #tpu.memory_space<vmem>>, vector<1x8x1xf32>
    %139 = vector.shape_cast %138 : vector<1x8x1xf32> to vector<8x1xf32>
    %140 = vector.shape_cast %113 : vector<8x1xf32> to vector<1x8x1xf32>
    tpu.vector_store %arg18[%c2_80, %c0_81, %c0_82], %140 {strides = array<i32>} : memref<4x8x1xf32, #tpu.memory_space<vmem>>, vector<1x8x1xf32>,
    %141 = vector.extract_strided_slice %9 {offsets = [0, 24], sizes = [8, 8], strides = [1, 1]} : vector<8x32xf32> to vector<8x8xf32>
    %142 = arith.truncf %141 : vector<8x8xf32> to vector<8x8xbf16>
    %143 = vector.extract_strided_slice %14 {offsets = [0, 24], sizes = [8, 8], strides = [1, 1]} : vector<8x32xf32> to vector<8x8xf32>
    %144 = arith.truncf %143 : vector<8x8xf32> to vector<8x8xbf16>
    %145 = vector.extract_strided_slice %20 {offsets = [0, 24], sizes = [8, 8], strides = [1, 1]} : vector<8x32xbf16> to vector<8x8xbf16>
    %146 = tpu.transpose %142, [1, 0] : vector<8x8xbf16> -> vector<8x8xbf16>
    %cst_83 = arith.constant dense<0.000000e+00> : vector<8x8xf32>
    %147 = tpu.matmul %145, %146, %cst_83 {dimension_numbers = #tpu.dot_dimension_numbers<[1], [0], [0], [1], [0, 0, 1, 1], [], []>} : vector<8x8xbf16>, vector<8x8xbf16>, vector<8x8xf32> -> vector<8x8xf32>
    %148 = arith.addf %147, %19 : vector<8x8xf32>
    %c3 = arith.constant 3 : index
    %c0_84 = arith.constant 0 : index
    %c0_85 = arith.constant 0 : index
    %149 = vector.load %arg18[%c3, %c0_84, %c0_85] : memref<4x8x1xf32, #tpu.memory_space<vmem>>, vector<1x8x1xf32>
    %150 = vector.shape_cast %149 : vector<1x8x1xf32> to vector<8x1xf32>
    %cst_86 = arith.constant dense<0xFF800000> : vector<8xf32>
    %151 = vector.multi_reduction <maximumf>, %148, %cst_86 [1] : vector<8x8xf32> to vector<8xf32>
    %152 = vector.shape_cast %151 : vector<8xf32> to vector<8x1xf32>
    %153 = arith.maximumf %150, %152 : vector<8x1xf32>
    %154 = arith.subf %150, %153 : vector<8x1xf32>
    %155 = math.exp %154 : vector<8x1xf32>
    %156 = vector.broadcast %153 : vector<8x1xf32> to vector<8x8xf32>
    %157 = arith.subf %148, %156 : vector<8x8xf32>
    %158 = math.exp %157 : vector<8x8xf32>
    %c3_87 = arith.constant 3 : index
    %c0_88 = arith.constant 0 : index
    %c0_89 = arith.constant 0 : index
    %159 = vector.load %arg19[%c3_87, %c0_88, %c0_89] : memref<4x8x1xf32, #tpu.memory_space<vmem>>, vector<1x8x1xf32>
    %160 = vector.shape_cast %159 : vector<1x8x1xf32> to vector<8x1xf32>
    %161 = arith.mulf %155, %160 : vector<8x1xf32>
    %cst_90 = arith.constant dense<0.000000e+00> : vector<8xf32>
    %162 = vector.multi_reduction <add>, %158, %cst_90 [1] : vector<8x8xf32> to vector<8xf32>
    %163 = vector.shape_cast %162 : vector<8xf32> to vector<8x1xf32>
    %164 = arith.addf %161, %163 : vector<8x1xf32>
    %c3_91 = arith.constant 3 : index
    %c0_92 = arith.constant 0 : index
    %c0_93 = arith.constant 0 : index
    %165 = vector.load %arg19[%c3_91, %c0_92, %c0_93] : memref<4x8x1xf32, #tpu.memory_space<vmem>>, vector<1x8x1xf32>
    %166 = vector.shape_cast %165 : vector<1x8x1xf32> to vector<8x1xf32>
    %167 = vector.shape_cast %164 : vector<8x1xf32> to vector<1x8x1xf32>
    tpu.vector_store %arg19[%c3_91, %c0_92, %c0_93], %167 {strides = array<i32>} : memref<4x8x1xf32, #tpu.memory_space<vmem>>, vector<1x8x1xf32>,
    %c3_94 = arith.constant 3 : index
    %c0_95 = arith.constant 0 : index
    %c0_96 = arith.constant 0 : index
    %168 = vector.load %arg20[%c3_94, %c0_95, %c0_96] : memref<4x8x8xf32, #tpu.memory_space<vmem>>, vector<1x8x8xf32>
    %169 = vector.shape_cast %168 : vector<1x8x8xf32> to vector<8x8xf32>
    %170 = vector.broadcast %155 : vector<8x1xf32> to vector<8x8xf32>
    %171 = arith.mulf %170, %169 : vector<8x8xf32>
    %172 = arith.truncf %158 : vector<8x8xf32> to vector<8x8xbf16>
    %cst_97 = arith.constant dense<0.000000e+00> : vector<8x8xf32>
    %173 = tpu.matmul %172, %144, %cst_97 {dimension_numbers = #tpu.dot_dimension_numbers<[1], [0], [0], [1], [0, 0, 1, 1], [], []>} : vector<8x8xbf16>, vector<8x8xbf16>, vector<8x8xf32> -> vector<8x8xf32>
    %174 = arith.addf %171, %173 : vector<8x8xf32>
    %c3_98 = arith.constant 3 : index
    %c0_99 = arith.constant 0 : index
    %c0_100 = arith.constant 0 : index
    %175 = vector.load %arg20[%c3_98, %c0_99, %c0_100] : memref<4x8x8xf32, #tpu.memory_space<vmem>>, vector<1x8x8xf32>
    %176 = vector.shape_cast %175 : vector<1x8x8xf32> to vector<8x8xf32>
    %177 = vector.shape_cast %174 : vector<8x8xf32> to vector<1x8x8xf32>
    tpu.vector_store %arg20[%c3_98, %c0_99, %c0_100], %177 {strides = array<i32>} : memref<4x8x8xf32, #tpu.memory_space<vmem>>, vector<1x8x8xf32>,
    %c3_101 = arith.constant 3 : index
    %c0_102 = arith.constant 0 : index
    %c0_103 = arith.constant 0 : index
    %178 = vector.load %arg18[%c3_101, %c0_102, %c0_103] : memref<4x8x1xf32, #tpu.memory_space<vmem>>, vector<1x8x1xf32>
    %179 = vector.shape_cast %178 : vector<1x8x1xf32> to vector<8x1xf32>
    %180 = vector.shape_cast %153 : vector<8x1xf32> to vector<1x8x1xf32>
    tpu.vector_store %arg18[%c3_101, %c0_102, %c0_103], %180 {strides = array<i32>} : memref<4x8x1xf32, #tpu.memory_space<vmem>>, vector<1x8x1xf32>,
    %c0_i32_104 = arith.constant 0 : i32
    %181 = arith.cmpi eq, %arg1, %c0_i32_104 : i32
    %182 = arith.extui %181 : i1 to i32
    %c0_i32_105 = arith.constant 0 : i32
    %183 = arith.cmpi ne, %182, %c0_i32_105 : i32
    scf.if %183 {
      %cst_106 = arith.constant 0.000000e+00 : f32
      %184 = vector.broadcast %cst_106 : f32 to vector<8x32xf32>
      %c0_107 = arith.constant 0 : index
      %c0_108 = arith.constant 0 : index
      %c0_109 = arith.constant 0 : index
      %185 = vector.load %arg19[%c0_107, %c0_108, %c0_109] : memref<4x8x1xf32, #tpu.memory_space<vmem>>, vector<1x8x1xf32>
      %186 = vector.shape_cast %185 : vector<1x8x1xf32> to vector<8x1xf32>
      %187 = tpu.reciprocal %186 {approx = true} : vector<8x1xf32> -> vector<8x1xf32>
      %c0_110 = arith.constant 0 : index
      %c0_111 = arith.constant 0 : index
      %c0_112 = arith.constant 0 : index
      %188 = vector.load %arg20[%c0_110, %c0_111, %c0_112] : memref<4x8x8xf32, #tpu.memory_space<vmem>>, vector<1x8x8xf32>
      %189 = vector.shape_cast %188 : vector<1x8x8xf32> to vector<8x8xf32>
      %190 = vector.broadcast %187 : vector<8x1xf32> to vector<8x8xf32>
      %191 = arith.mulf %189, %190 : vector<8x8xf32>
      %192 = arith.truncf %191 : vector<8x8xf32> to vector<8x8xbf16>
      %c0_113 = arith.constant 0 : index
      %c0_114 = arith.constant 0 : index
      %193 = vector.load %arg12[%c0_113, %c0_114] : memref<32x32xbf16, #tpu.memory_space<vmem>>, vector<8x32xbf16>
      %cst_115 = arith.constant dense<0.000000e+00> : vector<8x32xf32>
      %194 = tpu.matmul %192, %193, %cst_115 {dimension_numbers = #tpu.dot_dimension_numbers<[1], [0], [0], [1], [0, 0, 1, 1], [], []>} : vector<8x8xbf16>, vector<8x32xbf16>, vector<8x32xf32> -> vector<8x32xf32>
      %195 = arith.addf %184, %194 : vector<8x32xf32>
      %c1_116 = arith.constant 1 : index
      %c0_117 = arith.constant 0 : index
      %c0_118 = arith.constant 0 : index
      %196 = vector.load %arg19[%c1_116, %c0_117, %c0_118] : memref<4x8x1xf32, #tpu.memory_space<vmem>>, vector<1x8x1xf32>
      %197 = vector.shape_cast %196 : vector<1x8x1xf32> to vector<8x1xf32>
      %198 = tpu.reciprocal %197 {approx = true} : vector<8x1xf32> -> vector<8x1xf32>
      %c1_119 = arith.constant 1 : index
      %c0_120 = arith.constant 0 : index
      %c0_121 = arith.constant 0 : index
      %199 = vector.load %arg20[%c1_119, %c0_120, %c0_121] : memref<4x8x8xf32, #tpu.memory_space<vmem>>, vector<1x8x8xf32>
      %200 = vector.shape_cast %199 : vector<1x8x8xf32> to vector<8x8xf32>
      %201 = vector.broadcast %198 : vector<8x1xf32> to vector<8x8xf32>
      %202 = arith.mulf %200, %201 : vector<8x8xf32>
      %203 = arith.truncf %202 : vector<8x8xf32> to vector<8x8xbf16>
      %c8 = arith.constant 8 : index
      %c0_122 = arith.constant 0 : index
      %204 = vector.load %arg12[%c8, %c0_122] : memref<32x32xbf16, #tpu.memory_space<vmem>>, vector<8x32xbf16>
      %cst_123 = arith.constant dense<0.000000e+00> : vector<8x32xf32>
      %205 = tpu.matmul %203, %204, %cst_123 {dimension_numbers = #tpu.dot_dimension_numbers<[1], [0], [0], [1], [0, 0, 1, 1], [], []>} : vector<8x8xbf16>, vector<8x32xbf16>, vector<8x32xf32> -> vector<8x32xf32>
      %206 = arith.addf %195, %205 : vector<8x32xf32>
      %c2_124 = arith.constant 2 : index
      %c0_125 = arith.constant 0 : index
      %c0_126 = arith.constant 0 : index
      %207 = vector.load %arg19[%c2_124, %c0_125, %c0_126] : memref<4x8x1xf32, #tpu.memory_space<vmem>>, vector<1x8x1xf32>
      %208 = vector.shape_cast %207 : vector<1x8x1xf32> to vector<8x1xf32>
      %209 = tpu.reciprocal %208 {approx = true} : vector<8x1xf32> -> vector<8x1xf32>
      %c2_127 = arith.constant 2 : index
      %c0_128 = arith.constant 0 : index
      %c0_129 = arith.constant 0 : index
      %210 = vector.load %arg20[%c2_127, %c0_128, %c0_129] : memref<4x8x8xf32, #tpu.memory_space<vmem>>, vector<1x8x8xf32>
      %211 = vector.shape_cast %210 : vector<1x8x8xf32> to vector<8x8xf32>
      %212 = vector.broadcast %209 : vector<8x1xf32> to vector<8x8xf32>
      %213 = arith.mulf %211, %212 : vector<8x8xf32>
      %214 = arith.truncf %213 : vector<8x8xf32> to vector<8x8xbf16>
      %c16 = arith.constant 16 : index
      %c0_130 = arith.constant 0 : index
      %215 = vector.load %arg12[%c16, %c0_130] : memref<32x32xbf16, #tpu.memory_space<vmem>>, vector<8x32xbf16>
      %cst_131 = arith.constant dense<0.000000e+00> : vector<8x32xf32>
      %216 = tpu.matmul %214, %215, %cst_131 {dimension_numbers = #tpu.dot_dimension_numbers<[1], [0], [0], [1], [0, 0, 1, 1], [], []>} : vector<8x8xbf16>, vector<8x32xbf16>, vector<8x32xf32> -> vector<8x32xf32>
      %217 = arith.addf %206, %216 : vector<8x32xf32>
      %c3_132 = arith.constant 3 : index
      %c0_133 = arith.constant 0 : index
      %c0_134 = arith.constant 0 : index
      %218 = vector.load %arg19[%c3_132, %c0_133, %c0_134] : memref<4x8x1xf32, #tpu.memory_space<vmem>>, vector<1x8x1xf32>
      %219 = vector.shape_cast %218 : vector<1x8x1xf32> to vector<8x1xf32>
      %220 = tpu.reciprocal %219 {approx = true} : vector<8x1xf32> -> vector<8x1xf32>
      %c3_135 = arith.constant 3 : index
      %c0_136 = arith.constant 0 : index
      %c0_137 = arith.constant 0 : index
      %221 = vector.load %arg20[%c3_135, %c0_136, %c0_137] : memref<4x8x8xf32, #tpu.memory_space<vmem>>, vector<1x8x8xf32>
      %222 = vector.shape_cast %221 : vector<1x8x8xf32> to vector<8x8xf32>
      %223 = vector.broadcast %220 : vector<8x1xf32> to vector<8x8xf32>
      %224 = arith.mulf %222, %223 : vector<8x8xf32>
      %225 = arith.truncf %224 : vector<8x8xf32> to vector<8x8xbf16>
      %c24 = arith.constant 24 : index
      %c0_138 = arith.constant 0 : index
      %226 = vector.load %arg12[%c24, %c0_138] : memref<32x32xbf16, #tpu.memory_space<vmem>>, vector<8x32xbf16>
      %cst_139 = arith.constant dense<0.000000e+00> : vector<8x32xf32>
      %227 = tpu.matmul %225, %226, %cst_139 {dimension_numbers = #tpu.dot_dimension_numbers<[1], [0], [0], [1], [0, 0, 1, 1], [], []>} : vector<8x8xbf16>, vector<8x32xbf16>, vector<8x32xf32> -> vector<8x32xf32>
      %228 = arith.addf %217, %227 : vector<8x32xf32>
      %c0_140 = arith.constant 0 : index
      %c0_141 = arith.constant 0 : index
      %c0_142 = arith.constant 0 : index
      %229 = vector.load %arg2[%c0_140, %c0_141, %c0_142] : memref<1x8x32xbf16, #tpu.memory_space<vmem>>, vector<1x8x32xbf16>
      %230 = vector.shape_cast %229 : vector<1x8x32xbf16> to vector<8x32xbf16>
      %231 = arith.extf %230 : vector<8x32xbf16> to vector<8x32xf32>
      %232 = arith.addf %231, %228 : vector<8x32xf32>
      %c0_143 = arith.constant 0 : index
      %c0_144 = arith.constant 0 : index
      %233 = vector.load %arg13[%c0_143, %c0_144] : memref<1x32xf32, #tpu.memory_space<vmem>>, vector<1x32xf32>
      %234 = vector.broadcast %233 : vector<1x32xf32> to vector<8x32xf32>
      %235 = arith.addf %232, %234 : vector<8x32xf32>
      %cst_145 = arith.constant dense<0.000000e+00> : vector<8xf32>
      %236 = vector.multi_reduction <add>, %235, %cst_145 [1] : vector<8x32xf32> to vector<8xf32>
      %237 = vector.shape_cast %236 : vector<8xf32> to vector<8x1xf32>
      %cst_146 = arith.constant 3.200000e+01 : f32
      %238 = vector.broadcast %cst_146 : f32 to vector<8x1xf32>
      %239 = arith.divf %237, %238 : vector<8x1xf32>
      %240 = vector.broadcast %239 : vector<8x1xf32> to vector<8x32xf32>
      %241 = arith.subf %235, %240 : vector<8x32xf32>
      %242 = arith.mulf %241, %241 : vector<8x32xf32>
      %cst_147 = arith.constant dense<0.000000e+00> : vector<8xf32>
      %243 = vector.multi_reduction <add>, %242, %cst_147 [1] : vector<8x32xf32> to vector<8xf32>
      %244 = vector.shape_cast %243 : vector<8xf32> to vector<8x1xf32>
      %cst_148 = arith.constant 3.200000e+01 : f32
      %245 = vector.broadcast %cst_148 : f32 to vector<8x1xf32>
      %246 = arith.divf %244, %245 : vector<8x1xf32>
      %247 = vector.broadcast %239 : vector<8x1xf32> to vector<8x32xf32>
      %248 = arith.subf %235, %247 : vector<8x32xf32>
      %cst_149 = arith.constant 9.99999974E-6 : f32
      %249 = vector.broadcast %cst_149 : f32 to vector<8x1xf32>
      %250 = arith.addf %246, %249 : vector<8x1xf32>
      %251 = math.rsqrt %250 : vector<8x1xf32>
      %252 = vector.broadcast %251 : vector<8x1xf32> to vector<8x32xf32>
      %253 = arith.mulf %248, %252 : vector<8x32xf32>
      %c0_150 = arith.constant 0 : index
      %c0_151 = arith.constant 0 : index
      %254 = vector.load %arg14[%c0_150, %c0_151] : memref<1x32xf32, #tpu.memory_space<vmem>>, vector<1x32xf32>
      %255 = vector.broadcast %254 : vector<1x32xf32> to vector<8x32xf32>
      %256 = arith.mulf %253, %255 : vector<8x32xf32>
      %c0_152 = arith.constant 0 : index
      %c0_153 = arith.constant 0 : index
      %257 = vector.load %arg15[%c0_152, %c0_153] : memref<1x32xf32, #tpu.memory_space<vmem>>, vector<1x32xf32>
      %258 = vector.broadcast %257 : vector<1x32xf32> to vector<8x32xf32>
      %259 = arith.addf %256, %258 : vector<8x32xf32>
      %260 = arith.truncf %259 : vector<8x32xf32> to vector<8x32xbf16>
      %c0_154 = arith.constant 0 : index
      %c0_155 = arith.constant 0 : index
      %c0_156 = arith.constant 0 : index
      %261 = vector.load %arg16[%c0_154, %c0_155, %c0_156] : memref<1x8x32xbf16, #tpu.memory_space<vmem>>, vector<1x8x32xbf16>
      %262 = vector.shape_cast %261 : vector<1x8x32xbf16> to vector<8x32xbf16>
      %263 = vector.shape_cast %260 : vector<8x32xbf16> to vector<1x8x32xbf16>
      tpu.vector_store %arg16[%c0_154, %c0_155, %c0_156], %263 {strides = array<i32>} : memref<1x8x32xbf16, #tpu.memory_space<vmem>>, vector<1x8x32xbf16>,
    } else {
    }
    return
  }
  func.func @transform_0(%arg0: i32, %arg1: i32) -> (i32, i32, i32) {
    %c0_i32 = arith.constant 0 : i32
    %c0_i32_0 = arith.constant 0 : i32
    %c0_i32_1 = arith.constant 0 : i32
    return %arg0, %c0_i32, %c0_i32_0 : i32, i32, i32
  }
  func.func @transform_1(%arg0: i32, %arg1: i32) -> (i32, i32, i32) {
    %c0_i32 = arith.constant 0 : i32
    %c0_i32_0 = arith.constant 0 : i32
    return %arg0, %arg1, %c0_i32 : i32, i32, i32
  }
  func.func @transform_2(%arg0: i32, %arg1: i32) -> (i32, i32) {
    %c0_i32 = arith.constant 0 : i32
    %c0_i32_0 = arith.constant 0 : i32
    return %c0_i32, %arg1 : i32, i32
  }
  func.func @transform_3(%arg0: i32, %arg1: i32) -> (i32, i32, i32) {
    %c0_i32 = arith.constant 0 : i32
    %c0_i32_0 = arith.constant 0 : i32
    return %arg0, %c0_i32, %arg1 : i32, i32, i32
  }
  func.func @transform_4(%arg0: i32, %arg1: i32) -> (i32, i32) {
    %c0_i32 = arith.constant 0 : i32
    %c0_i32_0 = arith.constant 0 : i32
    %c0_i32_1 = arith.constant 0 : i32
    return %c0_i32, %c0_i32_0 : i32, i32
  }
  func.func @transform_5(%arg0: i32, %arg1: i32) -> (i32, i32) {
    %c0_i32 = arith.constant 0 : i32
    %c0_i32_0 = arith.constant 0 : i32
    %c0_i32_1 = arith.constant 0 : i32
    return %c0_i32, %c0_i32_0 : i32, i32
  }
  func.func @transform_6(%arg0: i32, %arg1: i32) -> (i32, i32) {
    %c0_i32 = arith.constant 0 : i32
    %c0_i32_0 = arith.constant 0 : i32
    %c0_i32_1 = arith.constant 0 : i32
    return %c0_i32, %c0_i32_0 : i32, i32
  }
  func.func @transform_7(%arg0: i32, %arg1: i32) -> (i32, i32) {
    %c0_i32 = arith.constant 0 : i32
    %c0_i32_0 = arith.constant 0 : i32
    %c0_i32_1 = arith.constant 0 : i32
    return %c0_i32, %c0_i32_0 : i32, i32
  }
  func.func @transform_8(%arg0: i32, %arg1: i32) -> (i32, i32) {
    %c0_i32 = arith.constant 0 : i32
    %c0_i32_0 = arith.constant 0 : i32
    %c0_i32_1 = arith.constant 0 : i32
    return %c0_i32, %c0_i32_0 : i32, i32
  }
  func.func @transform_9(%arg0: i32, %arg1: i32) -> (i32, i32) {
    %c0_i32 = arith.constant 0 : i32
    %c0_i32_0 = arith.constant 0 : i32
    %c0_i32_1 = arith.constant 0 : i32
    return %c0_i32, %c0_i32_0 : i32, i32
  }
  func.func @transform_10(%arg0: i32, %arg1: i32) -> (i32, i32) {
    %c0_i32 = arith.constant 0 : i32
    %c0_i32_0 = arith.constant 0 : i32
    %c0_i32_1 = arith.constant 0 : i32
    return %c0_i32, %c0_i32_0 : i32, i32
  }
  func.func @transform_11(%arg0: i32, %arg1: i32) -> (i32, i32) {
    %c0_i32 = arith.constant 0 : i32
    %c0_i32_0 = arith.constant 0 : i32
    %c0_i32_1 = arith.constant 0 : i32
    return %c0_i32, %c0_i32_0 : i32, i32
  }
  func.func @transform_12(%arg0: i32, %arg1: i32) -> (i32, i32) {
    %c0_i32 = arith.constant 0 : i32
    %c0_i32_0 = arith.constant 0 : i32
    %c0_i32_1 = arith.constant 0 : i32
    return %c0_i32, %c0_i32_0 : i32, i32
  }
  func.func @transform_13(%arg0: i32, %arg1: i32) -> (i32, i32) {
    %c0_i32 = arith.constant 0 : i32
    %c0_i32_0 = arith.constant 0 : i32
    %c0_i32_1 = arith.constant 0 : i32
    return %c0_i32, %c0_i32_0 : i32, i32
  }
  func.func @transform_14(%arg0: i32, %arg1: i32) -> (i32, i32, i32) {
    %c0_i32 = arith.constant 0 : i32
    %c0_i32_0 = arith.constant 0 : i32
    %c0_i32_1 = arith.constant 0 : i32
    return %arg0, %c0_i32, %c0_i32_0 : i32, i32, i32
  }
}

</mosaic_0001>

<llo_original>
// kernel: tpu_custom_call.1
$region0: #{tpu_custom_call.1}
  #allocation0 [shape = 'u32[]', space=smem, size = 0x4, offset = 0x4, fixed_abs, tag = 'smem constant byte address 0x4 - core index']
  #allocation1 [shape = 'u32[144,128]{1,0:T(1,128)}', space=vmem, size = 0x12000, scoped, tag = 'internal scratch']
  %s0 = inlined_call_operand.hbm [shape: f32[8,128], index: 0, kind: input, shape index: {}]
  %s1 = inlined_call_operand.hbm [shape: f32[8,128], index: 1, kind: output, shape index: {}]
  %s2 = sld [smem:[#allocation0]]
  $region41: #{tpu_custom_call.1} parent=0
    _
  %s4 = ssub.s32 1, %s2
  %s5 = scalar_select 0, %s4, %s2
  $region1: #{tpu_custom_call.1} parent=0
    #allocation2 [shape = 'u8[4096]{0}', space=vmem, size = 0x1000, scoped, tag = 'input window, operand 0, single buffered']
    #allocation3 [shape = 's32[2]{0}', space=sflag, size = 0x8, scoped, tag = 'scoped memory for tpu_custom_call.1']
    #allocation4 [shape = 's32[2]{0}', space=sflag, size = 0x8, scoped, tag = 'scoped memory for tpu_custom_call.1']
    #allocation5 [shape = 'u8[4096]{0}', space=vmem, size = 0x1000, scoped, tag = 'output window, operand 0, single buffered']
    %6 = vsyncpa [#allocation3], 0
    %7 = vsyncpa [#allocation4], 0
    loop: start=0, step=1, limit=4
    $region2: #{tpu_custom_call.1} parent=1 // loop_pre_header
      _
    $region3: #{tpu_custom_call.1} parent=1 // loop_header
      %s9 = sphi 0, %s13
      %p10 = scmp.ge.s32.totalorder %s9, 4
      %s17 = sphi 0, %s17
      %s19 = sphi 0, %s17
      %s20 = sphi 0, %s19
      %s34 = sphi 0, %s20
      %s38 = sphi 0, %s38
      %s40 = sphi 0, %s38
      %s41 = sphi 0, %s40
      %s55 = sphi 0, %s41
    $region4: #{tpu_custom_call.1} parent=1 // loop_header_branch
      %12 = sbr.rel (%p10) target = $region8
    $region5: #{tpu_custom_call.1} parent=1 // loop_body
      %s14 = ssub.s32 %s9, 1
      %s15 = ssub.s32 %s9, 2
      %s16 = sadd.s32 %s9, 1
      %s18 = sadd.s32 %s17, 1
      %p21 = scmp.eq.s32.totalorder %s9, 1
      %p22 = scmp.ne.s32.totalorder %s17, %s19
      %p23 = scmp.eq.s32.totalorder %s9, 0
      %p24 = por %p22, %p23
      %p25 = scmp.ne.s32.totalorder %s17, %s19
      %p26 = scmp.eq.s32.totalorder %s14, 1
      %p27 = por %p25, %p26
      %p28 = scmp.ne.s32.totalorder %s19, %s20
      %p29 = scmp.eq.s32.totalorder %s14, 0
      %p30 = por %p28, %p29
      %p31 = scmp.ne.s32.totalorder %s19, %s20
      %p32 = scmp.eq.s32.totalorder %s15, 1
      %p33 = por %p31, %p32
      %p35 = scmp.ne.s32.totalorder %s20, %s34
      %p36 = scmp.eq.s32.totalorder %s15, 0
      %p37 = por %p35, %p36
      %s39 = sadd.s32 %s38, 1
      %p42 = scmp.eq.s32.totalorder %s9, 1
      %p43 = scmp.ne.s32.totalorder %s38, %s40
      %p44 = scmp.eq.s32.totalorder %s9, 0
      %p45 = por %p43, %p44
      %p46 = scmp.ne.s32.totalorder %s38, %s40
      %p47 = scmp.eq.s32.totalorder %s14, 1
      %p48 = por %p46, %p47
      %p49 = scmp.ne.s32.totalorder %s40, %s41
      %p50 = scmp.eq.s32.totalorder %s14, 0
      %p51 = por %p49, %p50
      %p52 = scmp.ne.s32.totalorder %s40, %s41
      %p53 = scmp.eq.s32.totalorder %s15, 1
      %p54 = por %p52, %p53
      %p56 = scmp.ne.s32.totalorder %s41, %s55
      %p57 = scmp.eq.s32.totalorder %s15, 0
      %p58 = por %p56, %p57
      %p59 = scmp.le.s32.totalorder 1, %s9
      %p60 = scmp.lt.s32.totalorder %s9, 3
      %p61 = pnand %p59, %p60
      %p62 = pneg %p61
      // Predicated region
      $region9: #{tpu_custom_call.1} parent=5 // pred_check
        _
      $region10: #{tpu_custom_call.1} parent=5 // pred_check_branch
        %64 = sbr.rel (%p61) target = $region12
      $region11: #{tpu_custom_call.1} parent=5 // pred_region
        %s65 = ssub.s32 %s9, 1
        // Predicated region
        $region13: #{tpu_custom_call.1} parent=11 // pred_check
          %p66 = pneg %p30
        $region14: #{tpu_custom_call.1} parent=11 // pred_check_branch
          %68 = sbr.rel (%p66) target = $region16
        $region15: #{tpu_custom_call.1} parent=11 // pred_region
          %s70 = ssub.s32 128, 128
          %71 = vsyncadd [#allocation3], %s70
          %s73 = sshll.u32 [#allocation2], 4
          %s74 = int_to_ptr.vmem [resolvable:$true] %s73
          %76 = dma.hbm_to_vmem [thread:$0]  %s0, 128, %s74, [#allocation3]
        $region16: #{tpu_custom_call.1} parent=11 // pred_fallthru
          _
      $region12: #{tpu_custom_call.1} parent=5 // pred_fallthru
        _
      %p77 = scmp.lt.s32.totalorder %s9, 2
      // Predicated region
      $region17: #{tpu_custom_call.1} parent=5 // pred_check
        %p78 = pneg %p77
      $region18: #{tpu_custom_call.1} parent=5 // pred_check_branch
        %80 = sbr.rel (%p78) target = $region20
      $region19: #{tpu_custom_call.1} parent=5 // pred_region
        _
      $region20: #{tpu_custom_call.1} parent=5 // pred_fallthru
        _
      %p81 = scmp.le.s32.totalorder 1, %s9
      %p82 = scmp.lt.s32.totalorder %s9, 3
      %p83 = pnand %p81, %p82
      %p84 = pneg %p83
      // Predicated region
      $region21: #{tpu_custom_call.1} parent=5 // pred_check
        _
      $region22: #{tpu_custom_call.1} parent=5 // pred_check_branch
        %86 = sbr.rel (%p83) target = $region24
      $region23: #{tpu_custom_call.1} parent=5 // pred_region
        %s87 = ssub.s32 %s9, 1
        // Predicated region
        $region25: #{tpu_custom_call.1} parent=23 // pred_check
          %p88 = pneg %p30
        $region26: #{tpu_custom_call.1} parent=23 // pred_check_branch
          %90 = sbr.rel (%p88) target = $region28
        $region27: #{tpu_custom_call.1} parent=23 // pred_region
          %91 = dma.done [#allocation3], 128
        $region28: #{tpu_custom_call.1} parent=23 // pred_fallthru
          _
        %p92 = pneg %p30
        %p93 = pneg %p27
        %p94 = pneg %p51
        %p95 = pneg %p48
        %v96 = vld [vmem:[#allocation2] sm:$0xff]
        %97 = vst [vmem:[#allocation5] sm:$0xff] %v96
        // Predicated region
        $region29: #{tpu_custom_call.1} parent=23 // pred_check
          %p98 = pneg %p48
        $region30: #{tpu_custom_call.1} parent=23 // pred_check_branch
          %100 = sbr.rel (%p98) target = $region32
        $region31: #{tpu_custom_call.1} parent=23 // pred_region
          %s102 = ssub.s32 128, 128
          %103 = vsyncadd [#allocation4], %s102
          %s105 = sshll.u32 [#allocation5], 4
          %s106 = int_to_ptr.vmem [resolvable:$true] %s105
          %108 = dma.vmem_to_hbm [thread:$0]  %s106, 128, %s1, [#allocation4]
        $region32: #{tpu_custom_call.1} parent=23 // pred_fallthru
          _
        // Predicated region
        $region33: #{tpu_custom_call.1} parent=23 // pred_check
          %p109 = pneg %p48
        $region34: #{tpu_custom_call.1} parent=23 // pred_check_branch
          %111 = sbr.rel (%p109) target = $region36
        $region35: #{tpu_custom_call.1} parent=23 // pred_region
          %112 = dma.done [#allocation4], 128
        $region36: #{tpu_custom_call.1} parent=23 // pred_fallthru
          _
      $region24: #{tpu_custom_call.1} parent=5 // pred_fallthru
        _
      %p113 = scmp.le.s32.totalorder 2, %s9
      // Predicated region
      $region37: #{tpu_custom_call.1} parent=5 // pred_check
        %p114 = pneg %p113
      $region38: #{tpu_custom_call.1} parent=5 // pred_check_branch
        %116 = sbr.rel (%p114) target = $region40
      $region39: #{tpu_custom_call.1} parent=5 // pred_region
        %s117 = ssub.s32 %s9, 2
      $region40: #{tpu_custom_call.1} parent=5 // pred_fallthru
        _
    $region6: #{tpu_custom_call.1} parent=1 // loop_footer
      %s13 = sadd.s32 1, %s9
    $region7: #{tpu_custom_call.1} parent=1 // loop_footer_branch
      %8 = sbr.rel target = $region3
    $region8: #{tpu_custom_call.1} parent=1 // loop_exit
      _
    %118 = vsyncpa [#allocation3], 1
    %s119 = scalar_lea.sflag [#allocation3], 1
    %120 = vsyncpa %s119, 1
    %121 = vsyncpa [#allocation4], 1
    %s122 = scalar_lea.sflag [#allocation4], 1
    %123 = vsyncpa %s122, 1

// kernel: tpu_custom_call.1
$region0: #{tpu_custom_call.1}
  #allocation0 [shape = 'u32[]', space=smem, size = 0x4, offset = 0x4, fixed_abs, tag = 'smem constant byte address 0x4 - core index']
  #allocation1 [shape = 'u32[144,128]{1,0:T(1,128)}', space=vmem, size = 0x12000, scoped, tag = 'internal scratch']
  #allocation2 [shape = 'bf16[8,32]{1,0:T(8,128)(2,1)}', space=vmem, size = 0x800, scoped, tag = 'scratch operand']
  #allocation3 [shape = 'f32[4,8,1]{2,1,0:T(8,128)}', space=vmem, size = 0x4000, scoped, tag = 'scratch operand']
  #allocation4 [shape = 'f32[4,8,1]{2,1,0:T(8,128)}', space=vmem, size = 0x4000, scoped, tag = 'scratch operand']
  #allocation5 [shape = 'f32[4,8,8]{2,1,0:T(8,128)}', space=vmem, size = 0x4000, scoped, tag = 'scratch operand']
  %s0 = inlined_call_operand.hbm [shape: bf16[2,8,32], index: 0, kind: input, shape index: {}]
  %s1 = inlined_call_operand.hbm [shape: bf16[2,8,32], index: 1, kind: input, shape index: {}]
  %s2 = inlined_call_operand.hbm [shape: f32[8,8], index: 2, kind: input, shape index: {}]
  %s3 = inlined_call_operand.hbm [shape: f32[2,1,8], index: 3, kind: input, shape index: {}]
  %s4 = inlined_call_operand.hbm [shape: bf16[32,32], index: 4, kind: input, shape index: {}]
  %s5 = inlined_call_operand.hbm [shape: f32[1,32], index: 5, kind: input, shape index: {}]
  %s6 = inlined_call_operand.hbm [shape: bf16[32,32], index: 6, kind: input, shape index: {}]
  %s7 = inlined_call_operand.hbm [shape: f32[1,32], index: 7, kind: input, shape index: {}]
  %s8 = inlined_call_operand.hbm [shape: bf16[32,32], index: 8, kind: input, shape index: {}]
  %s9 = inlined_call_operand.hbm [shape: f32[1,32], index: 9, kind: input, shape index: {}]
  %s10 = inlined_call_operand.hbm [shape: bf16[32,32], index: 10, kind: input, shape index: {}]
  %s11 = inlined_call_operand.hbm [shape: f32[1,32], index: 11, kind: input, shape index: {}]
  %s12 = inlined_call_operand.hbm [shape: f32[1,32], index: 12, kind: input, shape index: {}]
  %s13 = inlined_call_operand.hbm [shape: f32[1,32], index: 13, kind: input, shape index: {}]
  %s14 = inlined_call_operand.hbm [shape: bf16[2,8,32], index: 14, kind: output, shape index: {}]
  %s15 = sld [smem:[#allocation0]]
  $region153: #{tpu_custom_call.1} parent=0
    _
  %s17 = ssub.s32 1, %s15
  %s18 = scalar_select 0, %s17, %s15
  $region1: #{tpu_custom_call.1} parent=0
    #allocation6 [shape = 'u8[4096]{0}', space=vmem, size = 0x1000, scoped, tag = 'input window, operand 0']
    #allocation7 [shape = 's32[2]{0}', space=sflag, size = 0x8, scoped, tag = 'scoped memory for tpu_custom_call.1']
    #allocation8 [shape = 's32[2]{0}', space=sflag, size = 0x8, scoped, tag = 'scoped memory for tpu_custom_call.1']
    #allocation9 [shape = 'u8[4096]{0}', space=vmem, size = 0x1000, scoped, tag = 'input window, operand 1']
    #allocation10 [shape = 's32[2]{0}', space=sflag, size = 0x8, scoped, tag = 'scoped memory for tpu_custom_call.1']
    #allocation11 [shape = 'u8[4096]{0}', space=vmem, size = 0x1000, scoped, tag = 'input window, operand 2, single buffered']
    #allocation12 [shape = 'u8[1024]{0}', space=vmem, size = 0x400, scoped, tag = 'input window, operand 3']
    #allocation13 [shape = 's32[2]{0}', space=sflag, size = 0x8, scoped, tag = 'scoped memory for tpu_custom_call.1']
    #allocation14 [shape = 'u8[8192]{0}', space=vmem, size = 0x2000, scoped, tag = 'input window, operand 4, single buffered']
    #allocation15 [shape = 'u8[512]{0}', space=vmem, size = 0x400, scoped, tag = 'input window, operand 5, single buffered']
    #allocation16 [shape = 's32[1]{0}', space=sflag, size = 0x4, scoped, tag = 'scoped memory for tpu_custom_call.1']
    #allocation17 [shape = 'u8[8192]{0}', space=vmem, size = 0x2000, scoped, tag = 'input window, operand 6, single buffered']
    #allocation18 [shape = 'u8[512]{0}', space=vmem, size = 0x400, scoped, tag = 'input window, operand 7, single buffered']
    #allocation19 [shape = 's32[1]{0}', space=sflag, size = 0x4, scoped, tag = 'scoped memory for tpu_custom_call.1']
    #allocation20 [shape = 'u8[8192]{0}', space=vmem, size = 0x2000, scoped, tag = 'input window, operand 8, single buffered']
    #allocation21 [shape = 'u8[512]{0}', space=vmem, size = 0x400, scoped, tag = 'input window, operand 9, single buffered']
    #allocation22 [shape = 's32[1]{0}', space=sflag, size = 0x4, scoped, tag = 'scoped memory for tpu_custom_call.1']
    #allocation23 [shape = 'u8[8192]{0}', space=vmem, size = 0x2000, scoped, tag = 'input window, operand 10, single buffered']
    #allocation24 [shape = 'u8[512]{0}', space=vmem, size = 0x400, scoped, tag = 'input window, operand 11, single buffered']
    #allocation25 [shape = 's32[1]{0}', space=sflag, size = 0x4, scoped, tag = 'scoped memory for tpu_custom_call.1']
    #allocation26 [shape = 'u8[512]{0}', space=vmem, size = 0x400, scoped, tag = 'input window, operand 12, single buffered']
    #allocation27 [shape = 'u8[512]{0}', space=vmem, size = 0x400, scoped, tag = 'input window, operand 13, single buffered']
    #allocation28 [shape = 's32[1]{0}', space=sflag, size = 0x4, scoped, tag = 'scoped memory for tpu_custom_call.1']
    #allocation29 [shape = 'u8[4096]{0}', space=vmem, size = 0x1000, scoped, tag = 'output window, operand 0']
    %19 = vsyncpa [#allocation7], 0
    %s20 = scalar_lea.sflag [#allocation7], 1
    %21 = vsyncpa %s20, 0
    %22 = vsyncpa [#allocation10], 0
    %s23 = scalar_lea.sflag [#allocation10], 1
    %24 = vsyncpa %s23, 0
    %25 = vsyncpa [#allocation13], 0
    %s26 = scalar_lea.sflag [#allocation13], 1
    %27 = vsyncpa %s26, 0
    %28 = vsyncpa [#allocation16], 0
    %29 = vsyncpa [#allocation19], 0
    %30 = vsyncpa [#allocation22], 0
    %31 = vsyncpa [#allocation25], 0
    %32 = vsyncpa [#allocation28], 0
    %33 = vsyncpa [#allocation8], 0
    %s34 = scalar_lea.sflag [#allocation8], 1
    %35 = vsyncpa %s34, 0
    loop: start=0, step=1, limit=4
    $region2: #{tpu_custom_call.1} parent=1 // loop_pre_header
      _
    $region3: #{tpu_custom_call.1} parent=1 // loop_header
      %s37 = sphi 0, %s41
      %p38 = scmp.ge.s32.totalorder %s37, 4
      %s44 = sphi 0, %s56
      %s45 = sphi 0, %s52
      %s46 = sphi 0, %s44
      %s47 = sphi 0, %s45
      %s48 = sphi 0, %s46
      %s49 = sphi 0, %s47
      %s59 = sphi 0, %s61
      %s62 = sphi 0, %s59
      %s63 = sphi 0, %s62
      %s79 = sphi 0, %s63
      %s87 = sphi 0, %s89
      %s90 = sphi 0, %s87
      %s91 = sphi 0, %s90
      %s107 = sphi 0, %s91
      %s113 = sphi 0, %s115
      %s116 = sphi 0, %s113
      %s117 = sphi 0, %s116
      %s133 = sphi 0, %s117
      %s141 = sphi 0, %s143
      %s144 = sphi 0, %s141
      %s145 = sphi 0, %s144
      %s161 = sphi 0, %s145
      %s165 = sphi 0, %s165
      %s167 = sphi 0, %s165
      %s168 = sphi 0, %s167
      %s182 = sphi 0, %s168
      %s186 = sphi 0, %s186
      %s188 = sphi 0, %s186
      %s189 = sphi 0, %s188
      %s203 = sphi 0, %s189
      %s207 = sphi 0, %s207
      %s209 = sphi 0, %s207
      %s210 = sphi 0, %s209
      %s224 = sphi 0, %s210
      %s228 = sphi 0, %s228
      %s230 = sphi 0, %s228
      %s231 = sphi 0, %s230
      %s245 = sphi 0, %s231
      %s249 = sphi 0, %s249
      %s251 = sphi 0, %s249
      %s252 = sphi 0, %s251
      %s266 = sphi 0, %s252
      %s270 = sphi 0, %s270
      %s272 = sphi 0, %s270
      %s273 = sphi 0, %s272
      %s287 = sphi 0, %s273
      %s291 = sphi 0, %s291
      %s293 = sphi 0, %s291
      %s294 = sphi 0, %s293
      %s308 = sphi 0, %s294
      %s312 = sphi 0, %s312
      %s314 = sphi 0, %s312
      %s315 = sphi 0, %s314
      %s329 = sphi 0, %s315
      %s333 = sphi 0, %s333
      %s335 = sphi 0, %s333
      %s336 = sphi 0, %s335
      %s350 = sphi 0, %s336
      %s354 = sphi 0, %s354
      %s356 = sphi 0, %s354
      %s357 = sphi 0, %s356
      %s371 = sphi 0, %s357
      %s377 = sphi 0, %s379
      %s380 = sphi 0, %s377
      %s381 = sphi 0, %s380
      %s397 = sphi 0, %s381
    $region4: #{tpu_custom_call.1} parent=1 // loop_header_branch
      %40 = sbr.rel (%p38) target = $region8
    $region5: #{tpu_custom_call.1} parent=1 // loop_body
      %s42 = ssub.s32 %s37, 1
      %s43 = ssub.s32 %s37, 2
      %s50 = sadd.s32 1, %s45
      %p51 = scmp.ge.s32.totalorder %s50, 1
      %s52 = scalar_select %p51, 0, %s50
      %s53 = sadd.s32 1, %s44
      %s54 = scalar_select %p51, %s53, %s44
      %p55 = scmp.ge.s32.totalorder %s54, 2
      %s56 = scalar_select %p55, 0, %s54
      %s57 = ssub.s32 %s44, %s56
      %p58 = scmp.eq.s32.totalorder %s57, 0
      %s60 = sadd.s32 %s59, 1
      %s61 = scalar_select %p58, %s59, %s60
      %p64 = pneg %p58
      %p65 = scmp.eq.s32.totalorder %s37, 1
      %p66 = por %p64, %p65
      %p67 = scmp.ne.s32.totalorder %s59, %s62
      %p68 = scmp.eq.s32.totalorder %s37, 0
      %p69 = por %p67, %p68
      %p70 = scmp.ne.s32.totalorder %s59, %s62
      %p71 = scmp.eq.s32.totalorder %s42, 1
      %p72 = por %p70, %p71
      %p73 = scmp.ne.s32.totalorder %s62, %s63
      %p74 = scmp.eq.s32.totalorder %s42, 0
      %p75 = por %p73, %p74
      %p76 = scmp.ne.s32.totalorder %s62, %s63
      %p77 = scmp.eq.s32.totalorder %s43, 1
      %p78 = por %p76, %p77
      %p80 = scmp.ne.s32.totalorder %s63, %s79
      %p81 = scmp.eq.s32.totalorder %s43, 0
      %p82 = por %p80, %p81
      %s83 = ssub.s32 %s44, %s56
      %s84 = ssub.s32 %s45, %s52
      %s85 = sor.u32 %s83, %s84
      %p86 = scmp.eq.s32.totalorder %s85, 0
      %s88 = sadd.s32 %s87, 1
      %s89 = scalar_select %p86, %s87, %s88
      %p92 = pneg %p86
      %p93 = scmp.eq.s32.totalorder %s37, 1
      %p94 = por %p92, %p93
      %p95 = scmp.ne.s32.totalorder %s87, %s90
      %p96 = scmp.eq.s32.totalorder %s37, 0
      %p97 = por %p95, %p96
      %p98 = scmp.ne.s32.totalorder %s87, %s90
      %p99 = scmp.eq.s32.totalorder %s42, 1
      %p100 = por %p98, %p99
      %p101 = scmp.ne.s32.totalorder %s90, %s91
      %p102 = scmp.eq.s32.totalorder %s42, 0
      %p103 = por %p101, %p102
      %p104 = scmp.ne.s32.totalorder %s90, %s91
      %p105 = scmp.eq.s32.totalorder %s43, 1
      %p106 = por %p104, %p105
      %p108 = scmp.ne.s32.totalorder %s91, %s107
      %p109 = scmp.eq.s32.totalorder %s43, 0
      %p110 = por %p108, %p109
      %s111 = ssub.s32 %s45, %s52
      %p112 = scmp.eq.s32.totalorder %s111, 0
      %s114 = sadd.s32 %s113, 1
      %s115 = scalar_select %p112, %s113, %s114
      %p118 = pneg %p112
      %p119 = scmp.eq.s32.totalorder %s37, 1
      %p120 = por %p118, %p119
      %p121 = scmp.ne.s32.totalorder %s113, %s116
      %p122 = scmp.eq.s32.totalorder %s37, 0
      %p123 = por %p121, %p122
      %p124 = scmp.ne.s32.totalorder %s113, %s116
      %p125 = scmp.eq.s32.totalorder %s42, 1
      %p126 = por %p124, %p125
      %p127 = scmp.ne.s32.totalorder %s116, %s117
      %p128 = scmp.eq.s32.totalorder %s42, 0
      %p129 = por %p127, %p128
      %p130 = scmp.ne.s32.totalorder %s116, %s117
      %p131 = scmp.eq.s32.totalorder %s43, 1
      %p132 = por %p130, %p131
      %p134 = scmp.ne.s32.totalorder %s117, %s133
      %p135 = scmp.eq.s32.totalorder %s43, 0
      %p136 = por %p134, %p135
      %s137 = ssub.s32 %s44, %s56
      %s138 = ssub.s32 %s45, %s52
      %s139 = sor.u32 %s137, %s138
      %p140 = scmp.eq.s32.totalorder %s139, 0
      %s142 = sadd.s32 %s141, 1
      %s143 = scalar_select %p140, %s141, %s142
      %p146 = pneg %p140
      %p147 = scmp.eq.s32.totalorder %s37, 1
      %p148 = por %p146, %p147
      %p149 = scmp.ne.s32.totalorder %s141, %s144
      %p150 = scmp.eq.s32.totalorder %s37, 0
      %p151 = por %p149, %p150
      %p152 = scmp.ne.s32.totalorder %s141, %s144
      %p153 = scmp.eq.s32.totalorder %s42, 1
      %p154 = por %p152, %p153
      %p155 = scmp.ne.s32.totalorder %s144, %s145
      %p156 = scmp.eq.s32.totalorder %s42, 0
      %p157 = por %p155, %p156
      %p158 = scmp.ne.s32.totalorder %s144, %s145
      %p159 = scmp.eq.s32.totalorder %s43, 1
      %p160 = por %p158, %p159
      %p162 = scmp.ne.s32.totalorder %s145, %s161
      %p163 = scmp.eq.s32.totalorder %s43, 0
      %p164 = por %p162, %p163
      %s166 = sadd.s32 %s165, 1
      %p169 = scmp.eq.s32.totalorder %s37, 1
      %p170 = scmp.ne.s32.totalorder %s165, %s167
      %p171 = scmp.eq.s32.totalorder %s37, 0
      %p172 = por %p170, %p171
      %p173 = scmp.ne.s32.totalorder %s165, %s167
      %p174 = scmp.eq.s32.totalorder %s42, 1
      %p175 = por %p173, %p174
      %p176 = scmp.ne.s32.totalorder %s167, %s168
      %p177 = scmp.eq.s32.totalorder %s42, 0
      %p178 = por %p176, %p177
      %p179 = scmp.ne.s32.totalorder %s167, %s168
      %p180 = scmp.eq.s32.totalorder %s43, 1
      %p181 = por %p179, %p180
      %p183 = scmp.ne.s32.totalorder %s168, %s182
      %p184 = scmp.eq.s32.totalorder %s43, 0
      %p185 = por %p183, %p184
      %s187 = sadd.s32 %s186, 1
      %p190 = scmp.eq.s32.totalorder %s37, 1
      %p191 = scmp.ne.s32.totalorder %s186, %s188
      %p192 = scmp.eq.s32.totalorder %s37, 0
      %p193 = por %p191, %p192
      %p194 = scmp.ne.s32.totalorder %s186, %s188
      %p195 = scmp.eq.s32.totalorder %s42, 1
      %p196 = por %p194, %p195
      %p197 = scmp.ne.s32.totalorder %s188, %s189
      %p198 = scmp.eq.s32.totalorder %s42, 0
      %p199 = por %p197, %p198
      %p200 = scmp.ne.s32.totalorder %s188, %s189
      %p201 = scmp.eq.s32.totalorder %s43, 1
      %p202 = por %p200, %p201
      %p204 = scmp.ne.s32.totalorder %s189, %s203
      %p205 = scmp.eq.s32.totalorder %s43, 0
      %p206 = por %p204, %p205
      %s208 = sadd.s32 %s207, 1
      %p211 = scmp.eq.s32.totalorder %s37, 1
      %p212 = scmp.ne.s32.totalorder %s207, %s209
      %p213 = scmp.eq.s32.totalorder %s37, 0
      %p214 = por %p212, %p213
      %p215 = scmp.ne.s32.totalorder %s207, %s209
      %p216 = scmp.eq.s32.totalorder %s42, 1
      %p217 = por %p215, %p216
      %p218 = scmp.ne.s32.totalorder %s209, %s210
      %p219 = scmp.eq.s32.totalorder %s42, 0
      %p220 = por %p218, %p219
      %p221 = scmp.ne.s32.totalorder %s209, %s210
      %p222 = scmp.eq.s32.totalorder %s43, 1
      %p223 = por %p221, %p222
      %p225 = scmp.ne.s32.totalorder %s210, %s224
      %p226 = scmp.eq.s32.totalorder %s43, 0
      %p227 = por %p225, %p226
      %s229 = sadd.s32 %s228, 1
      %p232 = scmp.eq.s32.totalorder %s37, 1
      %p233 = scmp.ne.s32.totalorder %s228, %s230
      %p234 = scmp.eq.s32.totalorder %s37, 0
      %p235 = por %p233, %p234
      %p236 = scmp.ne.s32.totalorder %s228, %s230
      %p237 = scmp.eq.s32.totalorder %s42, 1
      %p238 = por %p236, %p237
      %p239 = scmp.ne.s32.totalorder %s230, %s231
      %p240 = scmp.eq.s32.totalorder %s42, 0
      %p241 = por %p239, %p240
      %p242 = scmp.ne.s32.totalorder %s230, %s231
      %p243 = scmp.eq.s32.totalorder %s43, 1
      %p244 = por %p242, %p243
      %p246 = scmp.ne.s32.totalorder %s231, %s245
      %p247 = scmp.eq.s32.totalorder %s43, 0
      %p248 = por %p246, %p247
      %s250 = sadd.s32 %s249, 1
      %p253 = scmp.eq.s32.totalorder %s37, 1
      %p254 = scmp.ne.s32.totalorder %s249, %s251
      %p255 = scmp.eq.s32.totalorder %s37, 0
      %p256 = por %p254, %p255
      %p257 = scmp.ne.s32.totalorder %s249, %s251
      %p258 = scmp.eq.s32.totalorder %s42, 1
      %p259 = por %p257, %p258
      %p260 = scmp.ne.s32.totalorder %s251, %s252
      %p261 = scmp.eq.s32.totalorder %s42, 0
      %p262 = por %p260, %p261
      %p263 = scmp.ne.s32.totalorder %s251, %s252
      %p264 = scmp.eq.s32.totalorder %s43, 1
      %p265 = por %p263, %p264
      %p267 = scmp.ne.s32.totalorder %s252, %s266
      %p268 = scmp.eq.s32.totalorder %s43, 0
      %p269 = por %p267, %p268
      %s271 = sadd.s32 %s270, 1
      %p274 = scmp.eq.s32.totalorder %s37, 1
      %p275 = scmp.ne.s32.totalorder %s270, %s272
      %p276 = scmp.eq.s32.totalorder %s37, 0
      %p277 = por %p275, %p276
      %p278 = scmp.ne.s32.totalorder %s270, %s272
      %p279 = scmp.eq.s32.totalorder %s42, 1
      %p280 = por %p278, %p279
      %p281 = scmp.ne.s32.totalorder %s272, %s273
      %p282 = scmp.eq.s32.totalorder %s42, 0
      %p283 = por %p281, %p282
      %p284 = scmp.ne.s32.totalorder %s272, %s273
      %p285 = scmp.eq.s32.totalorder %s43, 1
      %p286 = por %p284, %p285
      %p288 = scmp.ne.s32.totalorder %s273, %s287
      %p289 = scmp.eq.s32.totalorder %s43, 0
      %p290 = por %p288, %p289
      %s292 = sadd.s32 %s291, 1
      %p295 = scmp.eq.s32.totalorder %s37, 1
      %p296 = scmp.ne.s32.totalorder %s291, %s293
      %p297 = scmp.eq.s32.totalorder %s37, 0
      %p298 = por %p296, %p297
      %p299 = scmp.ne.s32.totalorder %s291, %s293
      %p300 = scmp.eq.s32.totalorder %s42, 1
      %p301 = por %p299, %p300
      %p302 = scmp.ne.s32.totalorder %s293, %s294
      %p303 = scmp.eq.s32.totalorder %s42, 0
      %p304 = por %p302, %p303
      %p305 = scmp.ne.s32.totalorder %s293, %s294
      %p306 = scmp.eq.s32.totalorder %s43, 1
      %p307 = por %p305, %p306
      %p309 = scmp.ne.s32.totalorder %s294, %s308
      %p310 = scmp.eq.s32.totalorder %s43, 0
      %p311 = por %p309, %p310
      %s313 = sadd.s32 %s312, 1
      %p316 = scmp.eq.s32.totalorder %s37, 1
      %p317 = scmp.ne.s32.totalorder %s312, %s314
      %p318 = scmp.eq.s32.totalorder %s37, 0
      %p319 = por %p317, %p318
      %p320 = scmp.ne.s32.totalorder %s312, %s314
      %p321 = scmp.eq.s32.totalorder %s42, 1
      %p322 = por %p320, %p321
      %p323 = scmp.ne.s32.totalorder %s314, %s315
      %p324 = scmp.eq.s32.totalorder %s42, 0
      %p325 = por %p323, %p324
      %p326 = scmp.ne.s32.totalorder %s314, %s315
      %p327 = scmp.eq.s32.totalorder %s43, 1
      %p328 = por %p326, %p327
      %p330 = scmp.ne.s32.totalorder %s315, %s329
      %p331 = scmp.eq.s32.totalorder %s43, 0
      %p332 = por %p330, %p331
      %s334 = sadd.s32 %s333, 1
      %p337 = scmp.eq.s32.totalorder %s37, 1
      %p338 = scmp.ne.s32.totalorder %s333, %s335
      %p339 = scmp.eq.s32.totalorder %s37, 0
      %p340 = por %p338, %p339
      %p341 = scmp.ne.s32.totalorder %s333, %s335
      %p342 = scmp.eq.s32.totalorder %s42, 1
      %p343 = por %p341, %p342
      %p344 = scmp.ne.s32.totalorder %s335, %s336
      %p345 = scmp.eq.s32.totalorder %s42, 0
      %p346 = por %p344, %p345
      %p347 = scmp.ne.s32.totalorder %s335, %s336
      %p348 = scmp.eq.s32.totalorder %s43, 1
      %p349 = por %p347, %p348
      %p351 = scmp.ne.s32.totalorder %s336, %s350
      %p352 = scmp.eq.s32.totalorder %s43, 0
      %p353 = por %p351, %p352
      %s355 = sadd.s32 %s354, 1
      %p358 = scmp.eq.s32.totalorder %s37, 1
      %p359 = scmp.ne.s32.totalorder %s354, %s356
      %p360 = scmp.eq.s32.totalorder %s37, 0
      %p361 = por %p359, %p360
      %p362 = scmp.ne.s32.totalorder %s354, %s356
      %p363 = scmp.eq.s32.totalorder %s42, 1
      %p364 = por %p362, %p363
      %p365 = scmp.ne.s32.totalorder %s356, %s357
      %p366 = scmp.eq.s32.totalorder %s42, 0
      %p367 = por %p365, %p366
      %p368 = scmp.ne.s32.totalorder %s356, %s357
      %p369 = scmp.eq.s32.totalorder %s43, 1
      %p370 = por %p368, %p369
      %p372 = scmp.ne.s32.totalorder %s357, %s371
      %p373 = scmp.eq.s32.totalorder %s43, 0
      %p374 = por %p372, %p373
      %s375 = ssub.s32 %s44, %s56
      %p376 = scmp.eq.s32.totalorder %s375, 0
      %s378 = sadd.s32 %s377, 1
      %s379 = scalar_select %p376, %s377, %s378
      %p382 = pneg %p376
      %p383 = scmp.eq.s32.totalorder %s37, 1
      %p384 = por %p382, %p383
      %p385 = scmp.ne.s32.totalorder %s377, %s380
      %p386 = scmp.eq.s32.totalorder %s37, 0
      %p387 = por %p385, %p386
      %p388 = scmp.ne.s32.totalorder %s377, %s380
      %p389 = scmp.eq.s32.totalorder %s42, 1
      %p390 = por %p388, %p389
      %p391 = scmp.ne.s32.totalorder %s380, %s381
      %p392 = scmp.eq.s32.totalorder %s42, 0
      %p393 = por %p391, %p392
      %p394 = scmp.ne.s32.totalorder %s380, %s381
      %p395 = scmp.eq.s32.totalorder %s43, 1
      %p396 = por %p394, %p395
      %p398 = scmp.ne.s32.totalorder %s381, %s397
      %p399 = scmp.eq.s32.totalorder %s43, 0
      %p400 = por %p398, %p399
      %p401 = scmp.le.s32.totalorder 1, %s37
      %p402 = scmp.lt.s32.totalorder %s37, 3
      %p403 = pnand %p401, %p402
      %p404 = pneg %p403
      // Predicated region
      $region9: #{tpu_custom_call.1} parent=5 // pred_check
        _
      $region10: #{tpu_custom_call.1} parent=5 // pred_check_branch
        %406 = sbr.rel (%p403) target = $region12
      $region11: #{tpu_custom_call.1} parent=5 // pred_region
        %s407 = ssub.s32 %s37, 1
        // Predicated region
        $region13: #{tpu_custom_call.1} parent=11 // pred_check
          %p408 = pneg %p129
        $region14: #{tpu_custom_call.1} parent=11 // pred_check_branch
          %410 = sbr.rel (%p408) target = $region16
        $region15: #{tpu_custom_call.1} parent=11 // pred_region
          %s412 = ssub.s32 128, 128
          %413 = vsyncadd [#allocation10], %s412
          %s414 = smul.addr %s47, 128
          %s415 = scalar_lea.hbm %s2, %s414
          %s417 = sshll.u32 [#allocation11], 4
          %s418 = int_to_ptr.vmem [resolvable:$true] %s417
          %420 = dma.hbm_to_vmem [thread:$0]  %s415, 128, %s418, [#allocation10]
        $region16: #{tpu_custom_call.1} parent=11 // pred_fallthru
          _
        // Predicated region
        $region17: #{tpu_custom_call.1} parent=11 // pred_check
          %p421 = pneg %p178
        $region18: #{tpu_custom_call.1} parent=11 // pred_check_branch
          %423 = sbr.rel (%p421) target = $region20
        $region19: #{tpu_custom_call.1} parent=11 // pred_region
          %s425 = ssub.s32 256, 256
          %426 = vsyncadd [#allocation13], %s425
          %s427 = sshll.u32 [#allocation14], 4
          %s428 = int_to_ptr.vmem [resolvable:$true] %s427
          %433 = dma.hbm_to_vmem [thread:$0]  %s4, 256, %s428, [#allocation13], 64, 64, 4
        $region20: #{tpu_custom_call.1} parent=11 // pred_fallthru
          _
        // Predicated region
        $region21: #{tpu_custom_call.1} parent=11 // pred_check
          %p434 = pneg %p199
        $region22: #{tpu_custom_call.1} parent=11 // pred_check_branch
          %436 = sbr.rel (%p434) target = $region24
        $region23: #{tpu_custom_call.1} parent=11 // pred_region
          %s438 = ssub.s32 16, 16
          %439 = vsyncadd [#allocation16], %s438
          %s441 = sshll.u32 [#allocation15], 4
          %s442 = int_to_ptr.vmem [resolvable:$true] %s441
          %444 = dma.hbm_to_vmem [thread:$0]  %s5, 16, %s442, [#allocation16]
        $region24: #{tpu_custom_call.1} parent=11 // pred_fallthru
          _
        // Predicated region
        $region25: #{tpu_custom_call.1} parent=11 // pred_check
          %p445 = pneg %p220
        $region26: #{tpu_custom_call.1} parent=11 // pred_check_branch
          %447 = sbr.rel (%p445) target = $region28
        $region27: #{tpu_custom_call.1} parent=11 // pred_region
          %s449 = ssub.s32 256, 256
          %450 = vsyncadd [#allocation16], %s449
          %s451 = sshll.u32 [#allocation17], 4
          %s452 = int_to_ptr.vmem [resolvable:$true] %s451
          %457 = dma.hbm_to_vmem [thread:$0]  %s6, 256, %s452, [#allocation16], 64, 64, 4
        $region28: #{tpu_custom_call.1} parent=11 // pred_fallthru
          _
        // Predicated region
        $region29: #{tpu_custom_call.1} parent=11 // pred_check
          %p458 = pneg %p241
        $region30: #{tpu_custom_call.1} parent=11 // pred_check_branch
          %460 = sbr.rel (%p458) target = $region32
        $region31: #{tpu_custom_call.1} parent=11 // pred_region
          %s462 = ssub.s32 16, 16
          %463 = vsyncadd [#allocation19], %s462
          %s465 = sshll.u32 [#allocation18], 4
          %s466 = int_to_ptr.vmem [resolvable:$true] %s465
          %468 = dma.hbm_to_vmem [thread:$0]  %s7, 16, %s466, [#allocation19]
        $region32: #{tpu_custom_call.1} parent=11 // pred_fallthru
          _
        // Predicated region
        $region33: #{tpu_custom_call.1} parent=11 // pred_check
          %p469 = pneg %p262
        $region34: #{tpu_custom_call.1} parent=11 // pred_check_branch
          %471 = sbr.rel (%p469) target = $region36
        $region35: #{tpu_custom_call.1} parent=11 // pred_region
          %s473 = ssub.s32 256, 256
          %474 = vsyncadd [#allocation19], %s473
          %s475 = sshll.u32 [#allocation20], 4
          %s476 = int_to_ptr.vmem [resolvable:$true] %s475
          %481 = dma.hbm_to_vmem [thread:$0]  %s8, 256, %s476, [#allocation19], 64, 64, 4
        $region36: #{tpu_custom_call.1} parent=11 // pred_fallthru
          _
        // Predicated region
        $region37: #{tpu_custom_call.1} parent=11 // pred_check
          %p482 = pneg %p283
        $region38: #{tpu_custom_call.1} parent=11 // pred_check_branch
          %484 = sbr.rel (%p482) target = $region40
        $region39: #{tpu_custom_call.1} parent=11 // pred_region
          %s486 = ssub.s32 16, 16
          %487 = vsyncadd [#allocation22], %s486
          %s489 = sshll.u32 [#allocation21], 4
          %s490 = int_to_ptr.vmem [resolvable:$true] %s489
          %492 = dma.hbm_to_vmem [thread:$0]  %s9, 16, %s490, [#allocation22]
        $region40: #{tpu_custom_call.1} parent=11 // pred_fallthru
          _
        // Predicated region
        $region41: #{tpu_custom_call.1} parent=11 // pred_check
          %p493 = pneg %p304
        $region42: #{tpu_custom_call.1} parent=11 // pred_check_branch
          %495 = sbr.rel (%p493) target = $region44
        $region43: #{tpu_custom_call.1} parent=11 // pred_region
          %s497 = ssub.s32 256, 256
          %498 = vsyncadd [#allocation22], %s497
          %s499 = sshll.u32 [#allocation23], 4
          %s500 = int_to_ptr.vmem [resolvable:$true] %s499
          %505 = dma.hbm_to_vmem [thread:$0]  %s10, 256, %s500, [#allocation22], 64, 64, 4
        $region44: #{tpu_custom_call.1} parent=11 // pred_fallthru
          _
        // Predicated region
        $region45: #{tpu_custom_call.1} parent=11 // pred_check
          %p506 = pneg %p325
        $region46: #{tpu_custom_call.1} parent=11 // pred_check_branch
          %508 = sbr.rel (%p506) target = $region48
        $region47: #{tpu_custom_call.1} parent=11 // pred_region
          %s510 = ssub.s32 16, 16
          %511 = vsyncadd [#allocation25], %s510
          %s513 = sshll.u32 [#allocation24], 4
          %s514 = int_to_ptr.vmem [resolvable:$true] %s513
          %516 = dma.hbm_to_vmem [thread:$0]  %s11, 16, %s514, [#allocation25]
        $region48: #{tpu_custom_call.1} parent=11 // pred_fallthru
          _
        // Predicated region
        $region49: #{tpu_custom_call.1} parent=11 // pred_check
          %p517 = pneg %p346
        $region50: #{tpu_custom_call.1} parent=11 // pred_check_branch
          %519 = sbr.rel (%p517) target = $region52
        $region51: #{tpu_custom_call.1} parent=11 // pred_region
          %s521 = ssub.s32 16, 16
          %522 = vsyncadd [#allocation25], %s521
          %s524 = sshll.u32 [#allocation26], 4
          %s525 = int_to_ptr.vmem [resolvable:$true] %s524
          %527 = dma.hbm_to_vmem [thread:$0]  %s12, 16, %s525, [#allocation25]
        $region52: #{tpu_custom_call.1} parent=11 // pred_fallthru
          _
        // Predicated region
        $region53: #{tpu_custom_call.1} parent=11 // pred_check
          %p528 = pneg %p367
        $region54: #{tpu_custom_call.1} parent=11 // pred_check_branch
          %530 = sbr.rel (%p528) target = $region56
        $region55: #{tpu_custom_call.1} parent=11 // pred_region
          %s532 = ssub.s32 16, 16
          %533 = vsyncadd [#allocation28], %s532
          %s535 = sshll.u32 [#allocation27], 4
          %s536 = int_to_ptr.vmem [resolvable:$true] %s535
          %538 = dma.hbm_to_vmem [thread:$0]  %s13, 16, %s536, [#allocation28]
        $region56: #{tpu_custom_call.1} parent=11 // pred_fallthru
          _
      $region12: #{tpu_custom_call.1} parent=5 // pred_fallthru
        _
      %p539 = scmp.lt.s32.totalorder %s37, 2
      // Predicated region
      $region57: #{tpu_custom_call.1} parent=5 // pred_check
        %p540 = pneg %p539
      $region58: #{tpu_custom_call.1} parent=5 // pred_check_branch
        %542 = sbr.rel (%p540) target = $region60
      $region59: #{tpu_custom_call.1} parent=5 // pred_region
        // Predicated region
        $region61: #{tpu_custom_call.1} parent=59 // pred_check
          %p543 = pneg %p69
        $region62: #{tpu_custom_call.1} parent=59 // pred_check_branch
          %545 = sbr.rel (%p543) target = $region64
        $region63: #{tpu_custom_call.1} parent=59 // pred_region
          %s546 = sand.u32 %s59, 1
          %s547 = scalar_lea.sflag [#allocation7], %s546
          %s548 = sand.u32 %s59, 1
          %s549 = smul.addr %s548, 4
          %s550 = scalar_lea.vmem [#allocation6], %s549
          %s552 = ssub.s32 64, 64
          %553 = vsyncadd %s547, %s552
          %s554 = smul.addr %s44, 64
          %s555 = scalar_lea.hbm %s0, %s554
          %s557 = sshll.u32 %s550, 4
          %s558 = int_to_ptr.vmem [resolvable:$true] %s557
          %560 = dma.hbm_to_vmem [thread:$0]  %s555, 64, %s558, %s547
        $region64: #{tpu_custom_call.1} parent=59 // pred_fallthru
          _
        // Predicated region
        $region65: #{tpu_custom_call.1} parent=59 // pred_check
          %p561 = pneg %p97
        $region66: #{tpu_custom_call.1} parent=59 // pred_check_branch
          %563 = sbr.rel (%p561) target = $region68
        $region67: #{tpu_custom_call.1} parent=59 // pred_region
          %s564 = sand.u32 %s37, 1
          %s565 = scalar_lea.sflag [#allocation10], %s564
          %s566 = sand.u32 %s87, 1
          %s567 = smul.addr %s566, 4
          %s568 = scalar_lea.vmem [#allocation9], %s567
          %s570 = ssub.s32 64, 64
          %571 = vsyncadd %s565, %s570
          %s572 = sadd.s32 %s45, %s44
          %s573 = smul.addr %s572, 64
          %s574 = scalar_lea.hbm %s1, %s573
          %s576 = sshll.u32 %s568, 4
          %s577 = int_to_ptr.vmem [resolvable:$true] %s576
          %579 = dma.hbm_to_vmem [thread:$0]  %s574, 64, %s577, %s565
        $region68: #{tpu_custom_call.1} parent=59 // pred_fallthru
          _
        // Predicated region
        $region69: #{tpu_custom_call.1} parent=59 // pred_check
          %p580 = pneg %p151
        $region70: #{tpu_custom_call.1} parent=59 // pred_check_branch
          %582 = sbr.rel (%p580) target = $region72
        $region71: #{tpu_custom_call.1} parent=59 // pred_region
          %s583 = sand.u32 %s37, 1
          %s584 = scalar_lea.sflag [#allocation13], %s583
          %s585 = sand.u32 %s141, 1
          %s586 = scalar_lea.vmem [#allocation12], %s585
          %s588 = ssub.s32 16, 16
          %589 = vsyncadd %s584, %s588
          %s590 = sadd.s32 %s45, %s44
          %s591 = smul.addr %s590, 16
          %s592 = scalar_lea.hbm %s3, %s591
          %s594 = sshll.u32 %s586, 4
          %s595 = int_to_ptr.vmem [resolvable:$true] %s594
          %597 = dma.hbm_to_vmem [thread:$0]  %s592, 16, %s595, %s584
        $region72: #{tpu_custom_call.1} parent=59 // pred_fallthru
          _
      $region60: #{tpu_custom_call.1} parent=5 // pred_fallthru
        _
      %p598 = scmp.le.s32.totalorder 1, %s37
      %p599 = scmp.lt.s32.totalorder %s37, 3
      %p600 = pnand %p598, %p599
      %p601 = pneg %p600
      // Predicated region
      $region73: #{tpu_custom_call.1} parent=5 // pred_check
        _
      $region74: #{tpu_custom_call.1} parent=5 // pred_check_branch
        %603 = sbr.rel (%p600) target = $region76
      $region75: #{tpu_custom_call.1} parent=5 // pred_region
        %s604 = ssub.s32 %s37, 1
        %s605 = sand.u32 %s62, 1
        %s606 = scalar_lea.sflag [#allocation7], %s605
        %s607 = sand.u32 %s62, 1
        %s608 = smul.addr %s607, 4
        %s609 = scalar_lea.vmem [#allocation6], %s608
        // Predicated region
        $region77: #{tpu_custom_call.1} parent=75 // pred_check
          %p610 = pneg %p75
        $region78: #{tpu_custom_call.1} parent=75 // pred_check_branch
          %612 = sbr.rel (%p610) target = $region80
        $region79: #{tpu_custom_call.1} parent=75 // pred_region
          %613 = dma.done %s606, 64
        $region80: #{tpu_custom_call.1} parent=75 // pred_fallthru
          _
        %s614 = sand.u32 %s42, 1
        %s615 = scalar_lea.sflag [#allocation10], %s614
        %s616 = sand.u32 %s90, 1
        %s617 = smul.addr %s616, 4
        %s618 = scalar_lea.vmem [#allocation9], %s617
        // Predicated region
        $region81: #{tpu_custom_call.1} parent=75 // pred_check
          %p619 = pneg %p103
        $region82: #{tpu_custom_call.1} parent=75 // pred_check_branch
          %621 = sbr.rel (%p619) target = $region84
        $region83: #{tpu_custom_call.1} parent=75 // pred_region
          %622 = dma.done %s615, 64
        $region84: #{tpu_custom_call.1} parent=75 // pred_fallthru
          _
        // Predicated region
        $region85: #{tpu_custom_call.1} parent=75 // pred_check
          %p623 = pneg %p129
        $region86: #{tpu_custom_call.1} parent=75 // pred_check_branch
          %625 = sbr.rel (%p623) target = $region88
        $region87: #{tpu_custom_call.1} parent=75 // pred_region
          %626 = dma.done [#allocation10], 128
        $region88: #{tpu_custom_call.1} parent=75 // pred_fallthru
          _
        %s627 = sand.u32 %s42, 1
        %s628 = scalar_lea.sflag [#allocation13], %s627
        %s629 = sand.u32 %s144, 1
        %s630 = scalar_lea.vmem [#allocation12], %s629
        // Predicated region
        $region89: #{tpu_custom_call.1} parent=75 // pred_check
          %p631 = pneg %p157
        $region90: #{tpu_custom_call.1} parent=75 // pred_check_branch
          %633 = sbr.rel (%p631) target = $region92
        $region91: #{tpu_custom_call.1} parent=75 // pred_region
          %634 = dma.done %s628, 16
        $region92: #{tpu_custom_call.1} parent=75 // pred_fallthru
          _
        // Predicated region
        $region93: #{tpu_custom_call.1} parent=75 // pred_check
          %p635 = pneg %p178
        $region94: #{tpu_custom_call.1} parent=75 // pred_check_branch
          %637 = sbr.rel (%p635) target = $region96
        $region95: #{tpu_custom_call.1} parent=75 // pred_region
          %638 = dma.done [#allocation13], 256
        $region96: #{tpu_custom_call.1} parent=75 // pred_fallthru
          _
        // Predicated region
        $region97: #{tpu_custom_call.1} parent=75 // pred_check
          %p639 = pneg %p199
        $region98: #{tpu_custom_call.1} parent=75 // pred_check_branch
          %641 = sbr.rel (%p639) target = $region100
        $region99: #{tpu_custom_call.1} parent=75 // pred_region
          %642 = dma.done [#allocation16], 16
        $region100: #{tpu_custom_call.1} parent=75 // pred_fallthru
          _
        // Predicated region
        $region101: #{tpu_custom_call.1} parent=75 // pred_check
          %p643 = pneg %p220
        $region102: #{tpu_custom_call.1} parent=75 // pred_check_branch
          %645 = sbr.rel (%p643) target = $region104
        $region103: #{tpu_custom_call.1} parent=75 // pred_region
          %646 = dma.done [#allocation16], 256
        $region104: #{tpu_custom_call.1} parent=75 // pred_fallthru
          _
        // Predicated region
        $region105: #{tpu_custom_call.1} parent=75 // pred_check
          %p647 = pneg %p241
        $region106: #{tpu_custom_call.1} parent=75 // pred_check_branch
          %649 = sbr.rel (%p647) target = $region108
        $region107: #{tpu_custom_call.1} parent=75 // pred_region
          %650 = dma.done [#allocation19], 16
        $region108: #{tpu_custom_call.1} parent=75 // pred_fallthru
          _
        // Predicated region
        $region109: #{tpu_custom_call.1} parent=75 // pred_check
          %p651 = pneg %p262
        $region110: #{tpu_custom_call.1} parent=75 // pred_check_branch
          %653 = sbr.rel (%p651) target = $region112
        $region111: #{tpu_custom_call.1} parent=75 // pred_region
          %654 = dma.done [#allocation19], 256
        $region112: #{tpu_custom_call.1} parent=75 // pred_fallthru
          _
        // Predicated region
        $region113: #{tpu_custom_call.1} parent=75 // pred_check
          %p655 = pneg %p283
        $region114: #{tpu_custom_call.1} parent=75 // pred_check_branch
          %657 = sbr.rel (%p655) target = $region116
        $region115: #{tpu_custom_call.1} parent=75 // pred_region
          %658 = dma.done [#allocation22], 16
        $region116: #{tpu_custom_call.1} parent=75 // pred_fallthru
          _
        // Predicated region
        $region117: #{tpu_custom_call.1} parent=75 // pred_check
          %p659 = pneg %p304
        $region118: #{tpu_custom_call.1} parent=75 // pred_check_branch
          %661 = sbr.rel (%p659) target = $region120
        $region119: #{tpu_custom_call.1} parent=75 // pred_region
          %662 = dma.done [#allocation22], 256
        $region120: #{tpu_custom_call.1} parent=75 // pred_fallthru
          _
        // Predicated region
        $region121: #{tpu_custom_call.1} parent=75 // pred_check
          %p663 = pneg %p325
        $region122: #{tpu_custom_call.1} parent=75 // pred_check_branch
          %665 = sbr.rel (%p663) target = $region124
        $region123: #{tpu_custom_call.1} parent=75 // pred_region
          %666 = dma.done [#allocation25], 16
        $region124: #{tpu_custom_call.1} parent=75 // pred_fallthru
          _
        // Predicated region
        $region125: #{tpu_custom_call.1} parent=75 // pred_check
          %p667 = pneg %p346
        $region126: #{tpu_custom_call.1} parent=75 // pred_check_branch
          %669 = sbr.rel (%p667) target = $region128
        $region127: #{tpu_custom_call.1} parent=75 // pred_region
          %670 = dma.done [#allocation25], 16
        $region128: #{tpu_custom_call.1} parent=75 // pred_fallthru
          _
        // Predicated region
        $region129: #{tpu_custom_call.1} parent=75 // pred_check
          %p671 = pneg %p367
        $region130: #{tpu_custom_call.1} parent=75 // pred_check_branch
          %673 = sbr.rel (%p671) target = $region132
        $region131: #{tpu_custom_call.1} parent=75 // pred_region
          %674 = dma.done [#allocation28], 16
        $region132: #{tpu_custom_call.1} parent=75 // pred_fallthru
          _
        %s675 = sand.u32 %s62, 1
        %s676 = scalar_lea.sflag [#allocation7], %s675
        %s677 = sand.u32 %s62, 1
        %s678 = smul.addr %s677, 4
        %s679 = scalar_lea.vmem [#allocation6], %s678
        %p680 = pneg %p75
        %p681 = pneg %p72
        %s682 = sand.u32 %s42, 1
        %s683 = scalar_lea.sflag [#allocation10], %s682
        %s684 = sand.u32 %s90, 1
        %s685 = smul.addr %s684, 4
        %s686 = scalar_lea.vmem [#allocation9], %s685
        %p687 = pneg %p103
        %p688 = pneg %p100
        %p689 = pneg %p129
        %p690 = pneg %p126
        %s691 = sand.u32 %s42, 1
        %s692 = scalar_lea.sflag [#allocation13], %s691
        %s693 = sand.u32 %s144, 1
        %s694 = scalar_lea.vmem [#allocation12], %s693
        %p695 = pneg %p157
        %p696 = pneg %p154
        %p697 = pneg %p178
        %p698 = pneg %p175
        %p699 = pneg %p199
        %p700 = pneg %p196
        %p701 = pneg %p220
        %p702 = pneg %p217
        %p703 = pneg %p241
        %p704 = pneg %p238
        %p705 = pneg %p262
        %p706 = pneg %p259
        %p707 = pneg %p283
        %p708 = pneg %p280
        %p709 = pneg %p304
        %p710 = pneg %p301
        %p711 = pneg %p325
        %p712 = pneg %p322
        %p713 = pneg %p346
        %p714 = pneg %p343
        %p715 = pneg %p367
        %p716 = pneg %p364
        %p717 = pneg %p393
        %p718 = pneg %p390
        %s719 = sand.u32 %s380, 1
        %s720 = scalar_lea.sflag [#allocation8], %s719
        %s721 = sand.u32 %s380, 1
        %s722 = smul.addr %s721, 4
        %s723 = scalar_lea.vmem [#allocation29], %s722
        %p725 = scmp.eq.s32.totalorder %s47, 0
        // Predicated region
        $region133: #{tpu_custom_call.1} parent=75 // pred_check
          %p726 = pneg %p725
        $region134: #{tpu_custom_call.1} parent=75 // pred_check_branch
          %728 = sbr.rel (%p726) target = $region136
        $region135: #{tpu_custom_call.1} parent=75 // pred_region
          %v729 = vld [vmem:[%s609] sm:$0xf]
          %v730 = vld [vmem:[#allocation14] sm:$0xf]
          %v731 = vld [vmem:[#allocation14 + $0x4] sm:$0xf]
          %v732 = vld [vmem:[#allocation14 + $0x8] sm:$0xf]
          %v733 = vld [vmem:[#allocation14 + $0xc] sm:$0xf]
          %v734 = vld [vmem:[#allocation15] sm:$0x1]
          %v736 = vlaneseq
          %v737 = vshrl.u32 %v736, 7
          %v738 = vsub.s32 0, %v737
          %v739 = vrot.slane %v734, %v738
          %v745 = vunpack.c.l.b16 %v730
          %v746 = vunpack.c.l.b16 %v731
          %v747 = vunpack.c.l.b16 %v732
          %v748 = vunpack.c.l.b16 %v733
          %v749 = vpack.c.b16 %v746, %v745
          %v750 = vpack.c.b16 %v748, %v747
          %vm753 = vcmask 261120
          %v755 = vsel %vm753, %v729, 0
          %757 = vmatprep.subr.bf16.mxu0 0
          %758 = vmatpush1.bf16.msra.mxu0 %v749
          %759 = vmatprep.subr.bf16.mxu0 0
          %760 = vmatpush1.bf16.msra.mxu0 %v750
          %761 = vmatprep.subr.bf16.mxu0 0
          %762 = vmatpush1.bf16.msra.mxu0 0
          %763 = vmatprep.subr.bf16.mxu0 0
          %764 = vmatpush1.bf16.msra.mxu0 0
          %765 = vmatprep.subr.bf16.mxu0 0
          %766 = vmatpush1.bf16.msra.mxu0 0
          %767 = vmatprep.subr.bf16.mxu0 0
          %768 = vmatpush1.bf16.msra.mxu0 0
          %769 = vmatprep.subr.bf16.mxu0 0
          %770 = vmatpush1.bf16.msra.mxu0 0
          %771 = vmatprep.subr.bf16.mxu0 0
          %772 = vmatpush1.bf16.msra.mxu0 0
          %773 = vmatprep.subr.bf16.mxu0 0
          %774 = vmatpush1.bf16.msra.mxu0 0
          %775 = vmatprep.subr.bf16.mxu0 0
          %776 = vmatpush1.bf16.msra.mxu0 0
          %777 = vmatprep.subr.bf16.mxu0 0
          %778 = vmatpush1.bf16.msra.mxu0 0
          %779 = vmatprep.subr.bf16.mxu0 0
          %780 = vmatpush1.bf16.msra.mxu0 0
          %781 = vmatprep.subr.bf16.mxu0 0
          %782 = vmatpush1.bf16.msra.mxu0 0
          %783 = vmatprep.subr.bf16.mxu0 0
          %784 = vmatpush1.bf16.msra.mxu0 0
          %785 = vmatprep.subr.bf16.mxu0 0
          %786 = vmatpush1.bf16.msra.mxu0 0
          %787 = vmatprep.subr.bf16.mxu0 0
          %788 = vmatpush1.bf16.msra.mxu0 0
          %789 = vmatprep.mubr.bf16.mxu0 0
          %790 = vmatmul.mubr.bf16.gmra.mrb[0].mxu0 %v755
          %v791 = vpop.f32.mrb[0].mxu0
          %v792 = vadd.f32 %v739, %v791
          %v793 = vpop.f32.mrb[0].mxu0
          %v794 = vpop.f32.mrb[0].mxu0
          %v795 = vpop.f32.mrb[0].mxu0
          %796 = vdwg.mxu0
          %v797 = vmul.f32 %v792, 0.35355338
          %v798 = vpack.c.bf16 %v797, %v797
          %vm799 = vcmask 257024
          %800 = vst.msk [vmem:[#allocation2] sm:$0xf] %vm799, %v798
          %vm801 = vcmask 7168
          %802 = vst.msk [vmem:[#allocation3] sm:$0xff] %vm801, -inf
          %803 = vst.msk [vmem:[#allocation3 + $0x8] sm:$0xff] %vm801, -inf
          %804 = vst.msk [vmem:[#allocation3 + $0x10] sm:$0xff] %vm801, -inf
          %805 = vst.msk [vmem:[#allocation3 + $0x18] sm:$0xff] %vm801, -inf
          %806 = vst.msk [vmem:[#allocation4] sm:$0xff] %vm801, 0.0
          %807 = vst.msk [vmem:[#allocation4 + $0x8] sm:$0xff] %vm801, 0.0
          %808 = vst.msk [vmem:[#allocation4 + $0x10] sm:$0xff] %vm801, 0.0
          %809 = vst.msk [vmem:[#allocation4 + $0x18] sm:$0xff] %vm801, 0.0
          %vm810 = vcmask 64512
          %811 = vst.msk [vmem:[#allocation5] sm:$0xff] %vm810, 0.0
          %812 = vst.msk [vmem:[#allocation5 + $0x8] sm:$0xff] %vm810, 0.0
          %813 = vst.msk [vmem:[#allocation5 + $0x10] sm:$0xff] %vm810, 0.0
          %814 = vst.msk [vmem:[#allocation5 + $0x18] sm:$0xff] %vm810, 0.0
        $region136: #{tpu_custom_call.1} parent=75 // pred_fallthru
          _
        %v815 = vld [vmem:[%s618] sm:$0xf]
        %v816 = vld [vmem:[#allocation17] sm:$0xf]
        %v817 = vld [vmem:[#allocation17 + $0x4] sm:$0xf]
        %v818 = vld [vmem:[#allocation17 + $0x8] sm:$0xf]
        %v819 = vld [vmem:[#allocation17 + $0xc] sm:$0xf]
        %v820 = vld [vmem:[#allocation18] sm:$0x1]
        %v822 = vlaneseq
        %v823 = vshrl.u32 %v822, 7
        %v824 = vsub.s32 0, %v823
        %v825 = vrot.slane %v820, %v824
        %v831 = vunpack.c.l.b16 %v816
        %v832 = vunpack.c.l.b16 %v817
        %v833 = vunpack.c.l.b16 %v818
        %v834 = vunpack.c.l.b16 %v819
        %v835 = vpack.c.b16 %v832, %v831
        %v836 = vpack.c.b16 %v834, %v833
        %vm839 = vcmask 261120
        %v841 = vsel %vm839, %v815, 0
        %843 = vmatprep.subr.bf16.mxu0 0
        %844 = vmatpush1.bf16.msra.mxu0 %v835
        %845 = vmatprep.subr.bf16.mxu0 0
        %846 = vmatpush1.bf16.msra.mxu0 %v836
        %847 = vmatprep.subr.bf16.mxu0 0
        %848 = vmatpush1.bf16.msra.mxu0 0
        %849 = vmatprep.subr.bf16.mxu0 0
        %850 = vmatpush1.bf16.msra.mxu0 0
        %851 = vmatprep.subr.bf16.mxu0 0
        %852 = vmatpush1.bf16.msra.mxu0 0
        %853 = vmatprep.subr.bf16.mxu0 0
        %854 = vmatpush1.bf16.msra.mxu0 0
        %855 = vmatprep.subr.bf16.mxu0 0
        %856 = vmatpush1.bf16.msra.mxu0 0
        %857 = vmatprep.subr.bf16.mxu0 0
        %858 = vmatpush1.bf16.msra.mxu0 0
        %859 = vmatprep.subr.bf16.mxu0 0
        %860 = vmatpush1.bf16.msra.mxu0 0
        %861 = vmatprep.subr.bf16.mxu0 0
        %862 = vmatpush1.bf16.msra.mxu0 0
        %863 = vmatprep.subr.bf16.mxu0 0
        %864 = vmatpush1.bf16.msra.mxu0 0
        %865 = vmatprep.subr.bf16.mxu0 0
        %866 = vmatpush1.bf16.msra.mxu0 0
        %867 = vmatprep.subr.bf16.mxu0 0
        %868 = vmatpush1.bf16.msra.mxu0 0
        %869 = vmatprep.subr.bf16.mxu0 0
        %870 = vmatpush1.bf16.msra.mxu0 0
        %871 = vmatprep.subr.bf16.mxu0 0
        %872 = vmatpush1.bf16.msra.mxu0 0
        %873 = vmatprep.subr.bf16.mxu0 0
        %874 = vmatpush1.bf16.msra.mxu0 0
        %875 = vmatprep.mubr.bf16.mxu0 0
        %876 = vmatmul.mubr.bf16.gmra.mrb[0].mxu0 %v841
        %v877 = vpop.f32.mrb[0].mxu0
        %v878 = vadd.f32 %v825, %v877
        %v879 = vpop.f32.mrb[0].mxu0
        %v880 = vpop.f32.mrb[0].mxu0
        %v881 = vpop.f32.mrb[0].mxu0
        %882 = vdwg.mxu0
        %v883 = vld [vmem:[#allocation20] sm:$0xf]
        %v884 = vld [vmem:[#allocation20 + $0x4] sm:$0xf]
        %v885 = vld [vmem:[#allocation20 + $0x8] sm:$0xf]
        %v886 = vld [vmem:[#allocation20 + $0xc] sm:$0xf]
        %v887 = vld [vmem:[#allocation21] sm:$0x1]
        %v889 = vlaneseq
        %v890 = vshrl.u32 %v889, 7
        %v891 = vsub.s32 0, %v890
        %v892 = vrot.slane %v887, %v891
        %v898 = vunpack.c.l.b16 %v883
        %v899 = vunpack.c.l.b16 %v884
        %v900 = vunpack.c.l.b16 %v885
        %v901 = vunpack.c.l.b16 %v886
        %v902 = vpack.c.b16 %v899, %v898
        %v903 = vpack.c.b16 %v901, %v900
        %906 = vmatprep.subr.bf16.mxu0 0
        %907 = vmatpush1.bf16.msra.mxu0 %v902
        %908 = vmatprep.subr.bf16.mxu0 0
        %909 = vmatpush1.bf16.msra.mxu0 %v903
        %910 = vmatprep.subr.bf16.mxu0 0
        %911 = vmatpush1.bf16.msra.mxu0 0
        %912 = vmatprep.subr.bf16.mxu0 0
        %913 = vmatpush1.bf16.msra.mxu0 0
        %914 = vmatprep.subr.bf16.mxu0 0
        %915 = vmatpush1.bf16.msra.mxu0 0
        %916 = vmatprep.subr.bf16.mxu0 0
        %917 = vmatpush1.bf16.msra.mxu0 0
        %918 = vmatprep.subr.bf16.mxu0 0
        %919 = vmatpush1.bf16.msra.mxu0 0
        %920 = vmatprep.subr.bf16.mxu0 0
        %921 = vmatpush1.bf16.msra.mxu0 0
        %922 = vmatprep.subr.bf16.mxu0 0
        %923 = vmatpush1.bf16.msra.mxu0 0
        %924 = vmatprep.subr.bf16.mxu0 0
        %925 = vmatpush1.bf16.msra.mxu0 0
        %926 = vmatprep.subr.bf16.mxu0 0
        %927 = vmatpush1.bf16.msra.mxu0 0
        %928 = vmatprep.subr.bf16.mxu0 0
        %929 = vmatpush1.bf16.msra.mxu0 0
        %930 = vmatprep.subr.bf16.mxu0 0
        %931 = vmatpush1.bf16.msra.mxu0 0
        %932 = vmatprep.subr.bf16.mxu0 0
        %933 = vmatpush1.bf16.msra.mxu0 0
        %934 = vmatprep.subr.bf16.mxu0 0
        %935 = vmatpush1.bf16.msra.mxu0 0
        %936 = vmatprep.subr.bf16.mxu0 0
        %937 = vmatpush1.bf16.msra.mxu0 0
        %938 = vmatprep.mubr.bf16.mxu0 0
        %939 = vmatmul.mubr.bf16.gmra.mrb[0].mxu0 %v841
        %v940 = vpop.f32.mrb[0].mxu0
        %v941 = vadd.f32 %v892, %v940
        %v942 = vpop.f32.mrb[0].mxu0
        %v943 = vpop.f32.mrb[0].mxu0
        %v944 = vpop.f32.mrb[0].mxu0
        %945 = vdwg.mxu0
        %v946 = vld [vmem:[#allocation11] sm:$0xff]
        %v947 = vld [vmem:[%s630] sm:$0x1]
        %v949 = vlaneseq
        %v950 = vshrl.u32 %v949, 7
        %v951 = vsub.s32 0, %v950
        %v952 = vrot.slane %v947, %v951
        %v954 = vadd.f32 %v946, %v952
        %v955 = vld [vmem:[#allocation2] sm:$0xf]
        %v956 = vpack.c.bf16 %v878, %v878
        %v957 = vpack.c.bf16 %v941, %v941
        %vm958 = vcmask 64512
        %v960 = vsel %vm958, %v955, 0
        %v963 = vsel %vm958, %v956, 0
        %965 = vmatprep.subr.bf16.mxu0 0
        %966 = vmatpush1.bf16.xpose.msra.mxu0 %v963
        %967 = vmatprep.subr.bf16.mxu0 0
        %968 = vmatpush1.bf16.xpose.msra.mxu0 0
        %969 = vmatprep.subr.bf16.mxu0 0
        %970 = vmatpush1.bf16.xpose.msra.mxu0 0
        %971 = vmatprep.subr.bf16.mxu0 0
        %972 = vmatpush1.bf16.xpose.msra.mxu0 0
        %973 = vmatprep.subr.bf16.mxu0 0
        %974 = vmatpush1.bf16.xpose.msra.mxu0 0
        %975 = vmatprep.subr.bf16.mxu0 0
        %976 = vmatpush1.bf16.xpose.msra.mxu0 0
        %977 = vmatprep.subr.bf16.mxu0 0
        %978 = vmatpush1.bf16.xpose.msra.mxu0 0
        %979 = vmatprep.subr.bf16.mxu0 0
        %980 = vmatpush1.bf16.xpose.msra.mxu0 0
        %981 = vmatprep.subr.bf16.mxu0 0
        %982 = vmatpush1.bf16.xpose.msra.mxu0 0
        %983 = vmatprep.subr.bf16.mxu0 0
        %984 = vmatpush1.bf16.xpose.msra.mxu0 0
        %985 = vmatprep.subr.bf16.mxu0 0
        %986 = vmatpush1.bf16.xpose.msra.mxu0 0
        %987 = vmatprep.subr.bf16.mxu0 0
        %988 = vmatpush1.bf16.xpose.msra.mxu0 0
        %989 = vmatprep.subr.bf16.mxu0 0
        %990 = vmatpush1.bf16.xpose.msra.mxu0 0
        %991 = vmatprep.subr.bf16.mxu0 0
        %992 = vmatpush1.bf16.xpose.msra.mxu0 0
        %993 = vmatprep.subr.bf16.mxu0 0
        %994 = vmatpush1.bf16.xpose.msra.mxu0 0
        %995 = vmatprep.subr.bf16.mxu0 0
        %996 = vmatpush1.bf16.xpose.msra.mxu0 0
        %997 = vmatprep.mubr.bf16.mxu0 0
        %998 = vmatmul.mubr.bf16.gmra.mrb[0].mxu0 %v960
        %v999 = vpop.f32.mrb[0].mxu0
        %v1000 = vadd.f32 %v954, %v999
        %v1001 = vpop.f32.mrb[0].mxu0
        %v1002 = vpop.f32.mrb[0].mxu0
        %v1003 = vpop.f32.mrb[0].mxu0
        %1004 = vdwg.mxu0
        %v1005 = vld [vmem:[#allocation3] sm:$0xff]
        %v1006 = vsel %vm958, %v1000, -inf
        %1007 = vmax.xlane.f32.xlu0 %v1006
        %v1008 = vpop.xlane.xlu0 %1007
        %v1009 = vmax.f32 %v1005, %v1008
        %v1010 = vsub.f32 %v1005, %v1009
        %v1011 = vmul.f32 %v1010, 1.442695
        %v1012 = vpow.pop %v1011
        %1014 = vset.pattern.permute.xlu0 0
        %1015 = vperm.xlu0 %1014, %v1009
        %v1016 = vpop.permute.xlu0 %1015
        %v1018 = vsub.f32 %v1000, %v1016
        %v1019 = vmul.f32 %v1018, 1.442695
        %v1020 = vpow.pop %v1019
        %v1021 = vld [vmem:[#allocation4] sm:$0xff]
        %v1022 = vmul.f32 %v1012, %v1021
        %v1023 = vsel %vm958, %v1020, 0.0
        %1024 = vadd.xlane.f32.xlu0 %v1023
        %v1025 = vpop.xlane.xlu0 %1024
        %v1026 = vadd.f32 %v1022, %v1025
        %vm1027 = vcmask 7168
        %1028 = vst.msk [vmem:[#allocation4] sm:$0xff] %vm1027, %v1026
        %v1029 = vld [vmem:[#allocation5] sm:$0xff]
        %1031 = vset.pattern.permute.xlu0 0
        %1032 = vperm.xlu0 %1031, %v1012
        %v1033 = vpop.permute.xlu0 %1032
        %v1035 = vmul.f32 %v1033, %v1029
        %v1036 = vpack.c.bf16 %v1020, %v1020
        %v1038 = vsel %vm958, %v1036, 0
        %vm1040 = vcmask 1043456
        %v1042 = vsel %vm1040, %v957, 0
        %1044 = vmatprep.subr.bf16.mxu0 0
        %1045 = vmatpush1.bf16.msra.mxu0 %v1042
        %1046 = vmatprep.subr.bf16.mxu0 0
        %1047 = vmatpush1.bf16.msra.mxu0 0
        %1048 = vmatprep.subr.bf16.mxu0 0
        %1049 = vmatpush1.bf16.msra.mxu0 0
        %1050 = vmatprep.subr.bf16.mxu0 0
        %1051 = vmatpush1.bf16.msra.mxu0 0
        %1052 = vmatprep.subr.bf16.mxu0 0
        %1053 = vmatpush1.bf16.msra.mxu0 0
        %1054 = vmatprep.subr.bf16.mxu0 0
        %1055 = vmatpush1.bf16.msra.mxu0 0
        %1056 = vmatprep.subr.bf16.mxu0 0
        %1057 = vmatpush1.bf16.msra.mxu0 0
        %1058 = vmatprep.subr.bf16.mxu0 0
        %1059 = vmatpush1.bf16.msra.mxu0 0
        %1060 = vmatprep.subr.bf16.mxu0 0
        %1061 = vmatpush1.bf16.msra.mxu0 0
        %1062 = vmatprep.subr.bf16.mxu0 0
        %1063 = vmatpush1.bf16.msra.mxu0 0
        %1064 = vmatprep.subr.bf16.mxu0 0
        %1065 = vmatpush1.bf16.msra.mxu0 0
        %1066 = vmatprep.subr.bf16.mxu0 0
        %1067 = vmatpush1.bf16.msra.mxu0 0
        %1068 = vmatprep.subr.bf16.mxu0 0
        %1069 = vmatpush1.bf16.msra.mxu0 0
        %1070 = vmatprep.subr.bf16.mxu0 0
        %1071 = vmatpush1.bf16.msra.mxu0 0
        %1072 = vmatprep.subr.bf16.mxu0 0
        %1073 = vmatpush1.bf16.msra.mxu0 0
        %1074 = vmatprep.subr.bf16.mxu0 0
        %1075 = vmatpush1.bf16.msra.mxu0 0
        %1076 = vmatprep.mubr.bf16.mxu0 0
        %1077 = vmatmul.mubr.bf16.gmra.mrb[0].mxu0 %v1038
        %v1078 = vpop.f32.mrb[0].mxu0
        %v1079 = vadd.f32 0.0, %v1078
        %v1080 = vpop.f32.mrb[0].mxu0
        %v1081 = vpop.f32.mrb[0].mxu0
        %v1082 = vpop.f32.mrb[0].mxu0
        %1083 = vdwg.mxu0
        %v1084 = vadd.f32 %v1035, %v1079
        %1085 = vst.msk [vmem:[#allocation5] sm:$0xff] %vm958, %v1084
        %1086 = vst.msk [vmem:[#allocation3] sm:$0xff] %vm1027, %v1009
        %v1088 = vunpack.c.l.b16 %v955
        %v1089 = vpack.c.b16 %v1088, %v1088
        %1090 = vrot.lane.b32.xlu0 %v1089, 120
        %v1091 = vpop.permute.xlu0 %1090
        %1093 = vrot.lane.b32.xlu0 %v956, 120
        %v1094 = vpop.permute.xlu0 %1093
        %v1096 = vsel %vm958, %v1091, 0
        %v1099 = vsel %vm958, %v1094, 0
        %1101 = vmatprep.subr.bf16.mxu0 0
        %1102 = vmatpush1.bf16.xpose.msra.mxu0 %v1099
        %1103 = vmatprep.subr.bf16.mxu0 0
        %1104 = vmatpush1.bf16.xpose.msra.mxu0 0
        %1105 = vmatprep.subr.bf16.mxu0 0
        %1106 = vmatpush1.bf16.xpose.msra.mxu0 0
        %1107 = vmatprep.subr.bf16.mxu0 0
        %1108 = vmatpush1.bf16.xpose.msra.mxu0 0
        %1109 = vmatprep.subr.bf16.mxu0 0
        %1110 = vmatpush1.bf16.xpose.msra.mxu0 0
        %1111 = vmatprep.subr.bf16.mxu0 0
        %1112 = vmatpush1.bf16.xpose.msra.mxu0 0
        %1113 = vmatprep.subr.bf16.mxu0 0
        %1114 = vmatpush1.bf16.xpose.msra.mxu0 0
        %1115 = vmatprep.subr.bf16.mxu0 0
        %1116 = vmatpush1.bf16.xpose.msra.mxu0 0
        %1117 = vmatprep.subr.bf16.mxu0 0
        %1118 = vmatpush1.bf16.xpose.msra.mxu0 0
        %1119 = vmatprep.subr.bf16.mxu0 0
        %1120 = vmatpush1.bf16.xpose.msra.mxu0 0
        %1121 = vmatprep.subr.bf16.mxu0 0
        %1122 = vmatpush1.bf16.xpose.msra.mxu0 0
        %1123 = vmatprep.subr.bf16.mxu0 0
        %1124 = vmatpush1.bf16.xpose.msra.mxu0 0
        %1125 = vmatprep.subr.bf16.mxu0 0
        %1126 = vmatpush1.bf16.xpose.msra.mxu0 0
        %1127 = vmatprep.subr.bf16.mxu0 0
        %1128 = vmatpush1.bf16.xpose.msra.mxu0 0
        %1129 = vmatprep.subr.bf16.mxu0 0
        %1130 = vmatpush1.bf16.xpose.msra.mxu0 0
        %1131 = vmatprep.subr.bf16.mxu0 0
        %1132 = vmatpush1.bf16.xpose.msra.mxu0 0
        %1133 = vmatprep.mubr.bf16.mxu0 0
        %1134 = vmatmul.mubr.bf16.gmra.mrb[0].mxu0 %v1096
        %v1135 = vpop.f32.mrb[0].mxu0
        %v1136 = vadd.f32 %v954, %v1135
        %v1137 = vpop.f32.mrb[0].mxu0
        %v1138 = vpop.f32.mrb[0].mxu0
        %v1139 = vpop.f32.mrb[0].mxu0
        %1140 = vdwg.mxu0
        %s1141 = scalar_lea.vmem [#allocation3], 8
        %v1142 = vld [vmem:[%s1141] sm:$0xff]
        %v1143 = vsel %vm958, %v1136, -inf
        %1144 = vmax.xlane.f32.xlu0 %v1143
        %v1145 = vpop.xlane.xlu0 %1144
        %v1146 = vmax.f32 %v1142, %v1145
        %v1147 = vsub.f32 %v1142, %v1146
        %v1148 = vmul.f32 %v1147, 1.442695
        %v1149 = vpow.pop %v1148
        %1151 = vset.pattern.permute.xlu0 0
        %1152 = vperm.xlu0 %1151, %v1146
        %v1153 = vpop.permute.xlu0 %1152
        %v1155 = vsub.f32 %v1136, %v1153
        %v1156 = vmul.f32 %v1155, 1.442695
        %v1157 = vpow.pop %v1156
        %s1158 = scalar_lea.vmem [#allocation4], 8
        %v1159 = vld [vmem:[%s1158] sm:$0xff]
        %v1160 = vmul.f32 %v1149, %v1159
        %v1161 = vsel %vm958, %v1157, 0.0
        %1162 = vadd.xlane.f32.xlu0 %v1161
        %v1163 = vpop.xlane.xlu0 %1162
        %v1164 = vadd.f32 %v1160, %v1163
        %1165 = vst.msk [vmem:[%s1158] sm:$0xff] %vm1027, %v1164
        %s1166 = scalar_lea.vmem [#allocation5], 8
        %v1167 = vld [vmem:[%s1166] sm:$0xff]
        %1169 = vset.pattern.permute.xlu0 0
        %1170 = vperm.xlu0 %1169, %v1149
        %v1171 = vpop.permute.xlu0 %1170
        %v1173 = vmul.f32 %v1171, %v1167
        %v1174 = vpack.c.bf16 %v1157, %v1157
        %1176 = vrot.lane.b32.xlu0 %v957, 120
        %v1177 = vpop.permute.xlu0 %1176
        %v1179 = vsel %vm958, %v1174, 0
        %v1182 = vsel %vm1040, %v1177, 0
        %1184 = vmatprep.subr.bf16.mxu0 0
        %1185 = vmatpush1.bf16.msra.mxu0 %v1182
        %1186 = vmatprep.subr.bf16.mxu0 0
        %1187 = vmatpush1.bf16.msra.mxu0 0
        %1188 = vmatprep.subr.bf16.mxu0 0
        %1189 = vmatpush1.bf16.msra.mxu0 0
        %1190 = vmatprep.subr.bf16.mxu0 0
        %1191 = vmatpush1.bf16.msra.mxu0 0
        %1192 = vmatprep.subr.bf16.mxu0 0
        %1193 = vmatpush1.bf16.msra.mxu0 0
        %1194 = vmatprep.subr.bf16.mxu0 0
        %1195 = vmatpush1.bf16.msra.mxu0 0
        %1196 = vmatprep.subr.bf16.mxu0 0
        %1197 = vmatpush1.bf16.msra.mxu0 0
        %1198 = vmatprep.subr.bf16.mxu0 0
        %1199 = vmatpush1.bf16.msra.mxu0 0
        %1200 = vmatprep.subr.bf16.mxu0 0
        %1201 = vmatpush1.bf16.msra.mxu0 0
        %1202 = vmatprep.subr.bf16.mxu0 0
        %1203 = vmatpush1.bf16.msra.mxu0 0
        %1204 = vmatprep.subr.bf16.mxu0 0
        %1205 = vmatpush1.bf16.msra.mxu0 0
        %1206 = vmatprep.subr.bf16.mxu0 0
        %1207 = vmatpush1.bf16.msra.mxu0 0
        %1208 = vmatprep.subr.bf16.mxu0 0
        %1209 = vmatpush1.bf16.msra.mxu0 0
        %1210 = vmatprep.subr.bf16.mxu0 0
        %1211 = vmatpush1.bf16.msra.mxu0 0
        %1212 = vmatprep.subr.bf16.mxu0 0
        %1213 = vmatpush1.bf16.msra.mxu0 0
        %1214 = vmatprep.subr.bf16.mxu0 0
        %1215 = vmatpush1.bf16.msra.mxu0 0
        %1216 = vmatprep.mubr.bf16.mxu0 0
        %1217 = vmatmul.mubr.bf16.gmra.mrb[0].mxu0 %v1179
        %v1218 = vpop.f32.mrb[0].mxu0
        %v1219 = vadd.f32 0.0, %v1218
        %v1220 = vpop.f32.mrb[0].mxu0
        %v1221 = vpop.f32.mrb[0].mxu0
        %v1222 = vpop.f32.mrb[0].mxu0
        %1223 = vdwg.mxu0
        %v1224 = vadd.f32 %v1173, %v1219
        %1225 = vst.msk [vmem:[%s1166] sm:$0xff] %vm958, %v1224
        %1226 = vst.msk [vmem:[%s1141] sm:$0xff] %vm1027, %v1146
        %1227 = vrot.lane.b32.xlu0 %v1089, 112
        %v1228 = vpop.permute.xlu0 %1227
        %1229 = vrot.lane.b32.xlu0 %v956, 112
        %v1230 = vpop.permute.xlu0 %1229
        %v1232 = vsel %vm958, %v1228, 0
        %v1235 = vsel %vm958, %v1230, 0
        %1237 = vmatprep.subr.bf16.mxu0 0
        %1238 = vmatpush1.bf16.xpose.msra.mxu0 %v1235
        %1239 = vmatprep.subr.bf16.mxu0 0
        %1240 = vmatpush1.bf16.xpose.msra.mxu0 0
        %1241 = vmatprep.subr.bf16.mxu0 0
        %1242 = vmatpush1.bf16.xpose.msra.mxu0 0
        %1243 = vmatprep.subr.bf16.mxu0 0
        %1244 = vmatpush1.bf16.xpose.msra.mxu0 0
        %1245 = vmatprep.subr.bf16.mxu0 0
        %1246 = vmatpush1.bf16.xpose.msra.mxu0 0
        %1247 = vmatprep.subr.bf16.mxu0 0
        %1248 = vmatpush1.bf16.xpose.msra.mxu0 0
        %1249 = vmatprep.subr.bf16.mxu0 0
        %1250 = vmatpush1.bf16.xpose.msra.mxu0 0
        %1251 = vmatprep.subr.bf16.mxu0 0
        %1252 = vmatpush1.bf16.xpose.msra.mxu0 0
        %1253 = vmatprep.subr.bf16.mxu0 0
        %1254 = vmatpush1.bf16.xpose.msra.mxu0 0
        %1255 = vmatprep.subr.bf16.mxu0 0
        %1256 = vmatpush1.bf16.xpose.msra.mxu0 0
        %1257 = vmatprep.subr.bf16.mxu0 0
        %1258 = vmatpush1.bf16.xpose.msra.mxu0 0
        %1259 = vmatprep.subr.bf16.mxu0 0
        %1260 = vmatpush1.bf16.xpose.msra.mxu0 0
        %1261 = vmatprep.subr.bf16.mxu0 0
        %1262 = vmatpush1.bf16.xpose.msra.mxu0 0
        %1263 = vmatprep.subr.bf16.mxu0 0
        %1264 = vmatpush1.bf16.xpose.msra.mxu0 0
        %1265 = vmatprep.subr.bf16.mxu0 0
        %1266 = vmatpush1.bf16.xpose.msra.mxu0 0
        %1267 = vmatprep.subr.bf16.mxu0 0
        %1268 = vmatpush1.bf16.xpose.msra.mxu0 0
        %1269 = vmatprep.mubr.bf16.mxu0 0
        %1270 = vmatmul.mubr.bf16.gmra.mrb[0].mxu0 %v1232
        %v1271 = vpop.f32.mrb[0].mxu0
        %v1272 = vadd.f32 %v954, %v1271
        %v1273 = vpop.f32.mrb[0].mxu0
        %v1274 = vpop.f32.mrb[0].mxu0
        %v1275 = vpop.f32.mrb[0].mxu0
        %1276 = vdwg.mxu0
        %s1277 = scalar_lea.vmem [#allocation3], 16
        %v1278 = vld [vmem:[%s1277] sm:$0xff]
        %v1279 = vsel %vm958, %v1272, -inf
        %1280 = vmax.xlane.f32.xlu0 %v1279
        %v1281 = vpop.xlane.xlu0 %1280
        %v1282 = vmax.f32 %v1278, %v1281
        %v1283 = vsub.f32 %v1278, %v1282
        %v1284 = vmul.f32 %v1283, 1.442695
        %v1285 = vpow.pop %v1284
        %1287 = vset.pattern.permute.xlu0 0
        %1288 = vperm.xlu0 %1287, %v1282
        %v1289 = vpop.permute.xlu0 %1288
        %v1291 = vsub.f32 %v1272, %v1289
        %v1292 = vmul.f32 %v1291, 1.442695
        %v1293 = vpow.pop %v1292
        %s1294 = scalar_lea.vmem [#allocation4], 16
        %v1295 = vld [vmem:[%s1294] sm:$0xff]
        %v1296 = vmul.f32 %v1285, %v1295
        %v1297 = vsel %vm958, %v1293, 0.0
        %1298 = vadd.xlane.f32.xlu0 %v1297
        %v1299 = vpop.xlane.xlu0 %1298
        %v1300 = vadd.f32 %v1296, %v1299
        %1301 = vst.msk [vmem:[%s1294] sm:$0xff] %vm1027, %v1300
        %s1302 = scalar_lea.vmem [#allocation5], 16
        %v1303 = vld [vmem:[%s1302] sm:$0xff]
        %1305 = vset.pattern.permute.xlu0 0
        %1306 = vperm.xlu0 %1305, %v1285
        %v1307 = vpop.permute.xlu0 %1306
        %v1309 = vmul.f32 %v1307, %v1303
        %v1310 = vpack.c.bf16 %v1293, %v1293
        %1311 = vrot.lane.b32.xlu0 %v957, 112
        %v1312 = vpop.permute.xlu0 %1311
        %v1314 = vsel %vm958, %v1310, 0
        %v1317 = vsel %vm1040, %v1312, 0
        %1319 = vmatprep.subr.bf16.mxu0 0
        %1320 = vmatpush1.bf16.msra.mxu0 %v1317
        %1321 = vmatprep.subr.bf16.mxu0 0
        %1322 = vmatpush1.bf16.msra.mxu0 0
        %1323 = vmatprep.subr.bf16.mxu0 0
        %1324 = vmatpush1.bf16.msra.mxu0 0
        %1325 = vmatprep.subr.bf16.mxu0 0
        %1326 = vmatpush1.bf16.msra.mxu0 0
        %1327 = vmatprep.subr.bf16.mxu0 0
        %1328 = vmatpush1.bf16.msra.mxu0 0
        %1329 = vmatprep.subr.bf16.mxu0 0
        %1330 = vmatpush1.bf16.msra.mxu0 0
        %1331 = vmatprep.subr.bf16.mxu0 0
        %1332 = vmatpush1.bf16.msra.mxu0 0
        %1333 = vmatprep.subr.bf16.mxu0 0
        %1334 = vmatpush1.bf16.msra.mxu0 0
        %1335 = vmatprep.subr.bf16.mxu0 0
        %1336 = vmatpush1.bf16.msra.mxu0 0
        %1337 = vmatprep.subr.bf16.mxu0 0
        %1338 = vmatpush1.bf16.msra.mxu0 0
        %1339 = vmatprep.subr.bf16.mxu0 0
        %1340 = vmatpush1.bf16.msra.mxu0 0
        %1341 = vmatprep.subr.bf16.mxu0 0
        %1342 = vmatpush1.bf16.msra.mxu0 0
        %1343 = vmatprep.subr.bf16.mxu0 0
        %1344 = vmatpush1.bf16.msra.mxu0 0
        %1345 = vmatprep.subr.bf16.mxu0 0
        %1346 = vmatpush1.bf16.msra.mxu0 0
        %1347 = vmatprep.subr.bf16.mxu0 0
        %1348 = vmatpush1.bf16.msra.mxu0 0
        %1349 = vmatprep.subr.bf16.mxu0 0
        %1350 = vmatpush1.bf16.msra.mxu0 0
        %1351 = vmatprep.mubr.bf16.mxu0 0
        %1352 = vmatmul.mubr.bf16.gmra.mrb[0].mxu0 %v1314
        %v1353 = vpop.f32.mrb[0].mxu0
        %v1354 = vadd.f32 0.0, %v1353
        %v1355 = vpop.f32.mrb[0].mxu0
        %v1356 = vpop.f32.mrb[0].mxu0
        %v1357 = vpop.f32.mrb[0].mxu0
        %1358 = vdwg.mxu0
        %v1359 = vadd.f32 %v1309, %v1354
        %1360 = vst.msk [vmem:[%s1302] sm:$0xff] %vm958, %v1359
        %1361 = vst.msk [vmem:[%s1277] sm:$0xff] %vm1027, %v1282
        %1362 = vrot.lane.b32.xlu0 %v1089, 104
        %v1363 = vpop.permute.xlu0 %1362
        %1364 = vrot.lane.b32.xlu0 %v956, 104
        %v1365 = vpop.permute.xlu0 %1364
        %v1367 = vsel %vm958, %v1363, 0
        %v1370 = vsel %vm958, %v1365, 0
        %1372 = vmatprep.subr.bf16.mxu0 0
        %1373 = vmatpush1.bf16.xpose.msra.mxu0 %v1370
        %1374 = vmatprep.subr.bf16.mxu0 0
        %1375 = vmatpush1.bf16.xpose.msra.mxu0 0
        %1376 = vmatprep.subr.bf16.mxu0 0
        %1377 = vmatpush1.bf16.xpose.msra.mxu0 0
        %1378 = vmatprep.subr.bf16.mxu0 0
        %1379 = vmatpush1.bf16.xpose.msra.mxu0 0
        %1380 = vmatprep.subr.bf16.mxu0 0
        %1381 = vmatpush1.bf16.xpose.msra.mxu0 0
        %1382 = vmatprep.subr.bf16.mxu0 0
        %1383 = vmatpush1.bf16.xpose.msra.mxu0 0
        %1384 = vmatprep.subr.bf16.mxu0 0
        %1385 = vmatpush1.bf16.xpose.msra.mxu0 0
        %1386 = vmatprep.subr.bf16.mxu0 0
        %1387 = vmatpush1.bf16.xpose.msra.mxu0 0
        %1388 = vmatprep.subr.bf16.mxu0 0
        %1389 = vmatpush1.bf16.xpose.msra.mxu0 0
        %1390 = vmatprep.subr.bf16.mxu0 0
        %1391 = vmatpush1.bf16.xpose.msra.mxu0 0
        %1392 = vmatprep.subr.bf16.mxu0 0
        %1393 = vmatpush1.bf16.xpose.msra.mxu0 0
        %1394 = vmatprep.subr.bf16.mxu0 0
        %1395 = vmatpush1.bf16.xpose.msra.mxu0 0
        %1396 = vmatprep.subr.bf16.mxu0 0
        %1397 = vmatpush1.bf16.xpose.msra.mxu0 0
        %1398 = vmatprep.subr.bf16.mxu0 0
        %1399 = vmatpush1.bf16.xpose.msra.mxu0 0
        %1400 = vmatprep.subr.bf16.mxu0 0
        %1401 = vmatpush1.bf16.xpose.msra.mxu0 0
        %1402 = vmatprep.subr.bf16.mxu0 0
        %1403 = vmatpush1.bf16.xpose.msra.mxu0 0
        %1404 = vmatprep.mubr.bf16.mxu0 0
        %1405 = vmatmul.mubr.bf16.gmra.mrb[0].mxu0 %v1367
        %v1406 = vpop.f32.mrb[0].mxu0
        %v1407 = vadd.f32 %v954, %v1406
        %v1408 = vpop.f32.mrb[0].mxu0
        %v1409 = vpop.f32.mrb[0].mxu0
        %v1410 = vpop.f32.mrb[0].mxu0
        %1411 = vdwg.mxu0
        %s1412 = scalar_lea.vmem [#allocation3], 24
        %v1413 = vld [vmem:[%s1412] sm:$0xff]
        %v1414 = vsel %vm958, %v1407, -inf
        %1415 = vmax.xlane.f32.xlu0 %v1414
        %v1416 = vpop.xlane.xlu0 %1415
        %v1417 = vmax.f32 %v1413, %v1416
        %v1418 = vsub.f32 %v1413, %v1417
        %v1419 = vmul.f32 %v1418, 1.442695
        %v1420 = vpow.pop %v1419
        %1422 = vset.pattern.permute.xlu0 0
        %1423 = vperm.xlu0 %1422, %v1417
        %v1424 = vpop.permute.xlu0 %1423
        %v1426 = vsub.f32 %v1407, %v1424
        %v1427 = vmul.f32 %v1426, 1.442695
        %v1428 = vpow.pop %v1427
        %s1429 = scalar_lea.vmem [#allocation4], 24
        %v1430 = vld [vmem:[%s1429] sm:$0xff]
        %v1431 = vmul.f32 %v1420, %v1430
        %v1432 = vsel %vm958, %v1428, 0.0
        %1433 = vadd.xlane.f32.xlu0 %v1432
        %v1434 = vpop.xlane.xlu0 %1433
        %v1435 = vadd.f32 %v1431, %v1434
        %1436 = vst.msk [vmem:[%s1429] sm:$0xff] %vm1027, %v1435
        %s1437 = scalar_lea.vmem [#allocation5], 24
        %v1438 = vld [vmem:[%s1437] sm:$0xff]
        %1440 = vset.pattern.permute.xlu0 0
        %1441 = vperm.xlu0 %1440, %v1420
        %v1442 = vpop.permute.xlu0 %1441
        %v1444 = vmul.f32 %v1442, %v1438
        %v1445 = vpack.c.bf16 %v1428, %v1428
        %1446 = vrot.lane.b32.xlu0 %v957, 104
        %v1447 = vpop.permute.xlu0 %1446
        %v1449 = vsel %vm958, %v1445, 0
        %v1452 = vsel %vm1040, %v1447, 0
        %1454 = vmatprep.subr.bf16.mxu0 0
        %1455 = vmatpush1.bf16.msra.mxu0 %v1452
        %1456 = vmatprep.subr.bf16.mxu0 0
        %1457 = vmatpush1.bf16.msra.mxu0 0
        %1458 = vmatprep.subr.bf16.mxu0 0
        %1459 = vmatpush1.bf16.msra.mxu0 0
        %1460 = vmatprep.subr.bf16.mxu0 0
        %1461 = vmatpush1.bf16.msra.mxu0 0
        %1462 = vmatprep.subr.bf16.mxu0 0
        %1463 = vmatpush1.bf16.msra.mxu0 0
        %1464 = vmatprep.subr.bf16.mxu0 0
        %1465 = vmatpush1.bf16.msra.mxu0 0
        %1466 = vmatprep.subr.bf16.mxu0 0
        %1467 = vmatpush1.bf16.msra.mxu0 0
        %1468 = vmatprep.subr.bf16.mxu0 0
        %1469 = vmatpush1.bf16.msra.mxu0 0
        %1470 = vmatprep.subr.bf16.mxu0 0
        %1471 = vmatpush1.bf16.msra.mxu0 0
        %1472 = vmatprep.subr.bf16.mxu0 0
        %1473 = vmatpush1.bf16.msra.mxu0 0
        %1474 = vmatprep.subr.bf16.mxu0 0
        %1475 = vmatpush1.bf16.msra.mxu0 0
        %1476 = vmatprep.subr.bf16.mxu0 0
        %1477 = vmatpush1.bf16.msra.mxu0 0
        %1478 = vmatprep.subr.bf16.mxu0 0
        %1479 = vmatpush1.bf16.msra.mxu0 0
        %1480 = vmatprep.subr.bf16.mxu0 0
        %1481 = vmatpush1.bf16.msra.mxu0 0
        %1482 = vmatprep.subr.bf16.mxu0 0
        %1483 = vmatpush1.bf16.msra.mxu0 0
        %1484 = vmatprep.subr.bf16.mxu0 0
        %1485 = vmatpush1.bf16.msra.mxu0 0
        %1486 = vmatprep.mubr.bf16.mxu0 0
        %1487 = vmatmul.mubr.bf16.gmra.mrb[0].mxu0 %v1449
        %v1488 = vpop.f32.mrb[0].mxu0
        %v1489 = vadd.f32 0.0, %v1488
        %v1490 = vpop.f32.mrb[0].mxu0
        %v1491 = vpop.f32.mrb[0].mxu0
        %v1492 = vpop.f32.mrb[0].mxu0
        %1493 = vdwg.mxu0
        %v1494 = vadd.f32 %v1444, %v1489
        %1495 = vst.msk [vmem:[%s1437] sm:$0xff] %vm958, %v1494
        %1496 = vst.msk [vmem:[%s1412] sm:$0xff] %vm1027, %v1417
        // Predicated region
        $region137: #{tpu_custom_call.1} parent=75 // pred_check
          %p1497 = pneg %p725
        $region138: #{tpu_custom_call.1} parent=75 // pred_check_branch
          %1499 = sbr.rel (%p1497) target = $region140
        $region139: #{tpu_custom_call.1} parent=75 // pred_region
          %v1500 = vld [vmem:[#allocation4] sm:$0xff]
          %v1501 = vrcp.pop %v1500
          %v1502 = vld [vmem:[#allocation5] sm:$0xff]
          %1504 = vset.pattern.permute.xlu0 0
          %1505 = vperm.xlu0 %1504, %v1501
          %v1506 = vpop.permute.xlu0 %1505
          %v1508 = vmul.f32 %v1502, %v1506
          %v1509 = vpack.c.bf16 %v1508, %v1508
          %v1510 = vld [vmem:[#allocation23] sm:$0xf]
          %v1511 = vld [vmem:[%s1158] sm:$0xff]
          %v1512 = vrcp.pop %v1511
          %v1513 = vld [vmem:[%s1166] sm:$0xff]
          %1515 = vset.pattern.permute.xlu0 0
          %1516 = vperm.xlu0 %1515, %v1512
          %v1517 = vpop.permute.xlu0 %1516
          %v1519 = vmul.f32 %v1513, %v1517
          %v1520 = vpack.c.bf16 %v1519, %v1519
          %v1521 = vld [vmem:[#allocation23 + $0x4] sm:$0xf]
          %v1523 = vsel %vm958, %v1520, 0
          %v1526 = vsel %vm1040, %v1521, 0
          %1528 = vmatprep.subr.bf16.mxu0 0
          %1529 = vmatpush1.bf16.msra.mxu0 %v1526
          %1530 = vmatprep.subr.bf16.mxu0 0
          %1531 = vmatpush1.bf16.msra.mxu0 0
          %1532 = vmatprep.subr.bf16.mxu0 0
          %1533 = vmatpush1.bf16.msra.mxu0 0
          %1534 = vmatprep.subr.bf16.mxu0 0
          %1535 = vmatpush1.bf16.msra.mxu0 0
          %1536 = vmatprep.subr.bf16.mxu0 0
          %1537 = vmatpush1.bf16.msra.mxu0 0
          %1538 = vmatprep.subr.bf16.mxu0 0
          %1539 = vmatpush1.bf16.msra.mxu0 0
          %1540 = vmatprep.subr.bf16.mxu0 0
          %1541 = vmatpush1.bf16.msra.mxu0 0
          %1542 = vmatprep.subr.bf16.mxu0 0
          %1543 = vmatpush1.bf16.msra.mxu0 0
          %1544 = vmatprep.subr.bf16.mxu0 0
          %1545 = vmatpush1.bf16.msra.mxu0 0
          %1546 = vmatprep.subr.bf16.mxu0 0
          %1547 = vmatpush1.bf16.msra.mxu0 0
          %1548 = vmatprep.subr.bf16.mxu0 0
          %1549 = vmatpush1.bf16.msra.mxu0 0
          %1550 = vmatprep.subr.bf16.mxu0 0
          %1551 = vmatpush1.bf16.msra.mxu0 0
          %1552 = vmatprep.subr.bf16.mxu0 0
          %1553 = vmatpush1.bf16.msra.mxu0 0
          %1554 = vmatprep.subr.bf16.mxu0 0
          %1555 = vmatpush1.bf16.msra.mxu0 0
          %1556 = vmatprep.subr.bf16.mxu0 0
          %1557 = vmatpush1.bf16.msra.mxu0 0
          %1558 = vmatprep.subr.bf16.mxu0 0
          %1559 = vmatpush1.bf16.msra.mxu0 0
          %1560 = vmatprep.mubr.bf16.mxu0 0
          %1561 = vmatmul.mubr.bf16.gmra.mrb[0].mxu0 %v1523
          %v1562 = vpop.f32.mrb[0].mxu0
          %v1563 = vadd.f32 0.0, %v1562
          %v1564 = vpop.f32.mrb[0].mxu0
          %v1565 = vpop.f32.mrb[0].mxu0
          %v1566 = vpop.f32.mrb[0].mxu0
          %1567 = vdwg.mxu0
          %v1569 = vsel %vm958, %v1509, 0
          %v1572 = vsel %vm1040, %v1510, 0
          %1574 = vmatprep.subr.bf16.mxu0 0
          %1575 = vmatpush1.bf16.msra.mxu0 %v1572
          %1576 = vmatprep.subr.bf16.mxu0 0
          %1577 = vmatpush1.bf16.msra.mxu0 0
          %1578 = vmatprep.subr.bf16.mxu0 0
          %1579 = vmatpush1.bf16.msra.mxu0 0
          %1580 = vmatprep.subr.bf16.mxu0 0
          %1581 = vmatpush1.bf16.msra.mxu0 0
          %1582 = vmatprep.subr.bf16.mxu0 0
          %1583 = vmatpush1.bf16.msra.mxu0 0
          %1584 = vmatprep.subr.bf16.mxu0 0
          %1585 = vmatpush1.bf16.msra.mxu0 0
          %1586 = vmatprep.subr.bf16.mxu0 0
          %1587 = vmatpush1.bf16.msra.mxu0 0
          %1588 = vmatprep.subr.bf16.mxu0 0
          %1589 = vmatpush1.bf16.msra.mxu0 0
          %1590 = vmatprep.subr.bf16.mxu0 0
          %1591 = vmatpush1.bf16.msra.mxu0 0
          %1592 = vmatprep.subr.bf16.mxu0 0
          %1593 = vmatpush1.bf16.msra.mxu0 0
          %1594 = vmatprep.subr.bf16.mxu0 0
          %1595 = vmatpush1.bf16.msra.mxu0 0
          %1596 = vmatprep.subr.bf16.mxu0 0
          %1597 = vmatpush1.bf16.msra.mxu0 0
          %1598 = vmatprep.subr.bf16.mxu0 0
          %1599 = vmatpush1.bf16.msra.mxu0 0
          %1600 = vmatprep.subr.bf16.mxu0 0
          %1601 = vmatpush1.bf16.msra.mxu0 0
          %1602 = vmatprep.subr.bf16.mxu0 0
          %1603 = vmatpush1.bf16.msra.mxu0 0
          %1604 = vmatprep.subr.bf16.mxu0 0
          %1605 = vmatpush1.bf16.msra.mxu0 0
          %1606 = vmatprep.mubr.bf16.mxu0 0
          %1607 = vmatmul.mubr.bf16.gmra.mrb[0].mxu0 %v1569
          %v1608 = vpop.f32.mrb[0].mxu0
          %v1609 = vadd.f32 %v1563, %v1608
          %v1610 = vpop.f32.mrb[0].mxu0
          %v1611 = vpop.f32.mrb[0].mxu0
          %v1612 = vpop.f32.mrb[0].mxu0
          %1613 = vdwg.mxu0
          %v1614 = vld [vmem:[%s1294] sm:$0xff]
          %v1615 = vrcp.pop %v1614
          %v1616 = vld [vmem:[%s1302] sm:$0xff]
          %1618 = vset.pattern.permute.xlu0 0
          %1619 = vperm.xlu0 %1618, %v1615
          %v1620 = vpop.permute.xlu0 %1619
          %v1622 = vmul.f32 %v1616, %v1620
          %v1623 = vpack.c.bf16 %v1622, %v1622
          %v1624 = vld [vmem:[#allocation23 + $0x8] sm:$0xf]
          %v1626 = vsel %vm958, %v1623, 0
          %v1629 = vsel %vm1040, %v1624, 0
          %1631 = vmatprep.subr.bf16.mxu0 0
          %1632 = vmatpush1.bf16.msra.mxu0 %v1629
          %1633 = vmatprep.subr.bf16.mxu0 0
          %1634 = vmatpush1.bf16.msra.mxu0 0
          %1635 = vmatprep.subr.bf16.mxu0 0
          %1636 = vmatpush1.bf16.msra.mxu0 0
          %1637 = vmatprep.subr.bf16.mxu0 0
          %1638 = vmatpush1.bf16.msra.mxu0 0
          %1639 = vmatprep.subr.bf16.mxu0 0
          %1640 = vmatpush1.bf16.msra.mxu0 0
          %1641 = vmatprep.subr.bf16.mxu0 0
          %1642 = vmatpush1.bf16.msra.mxu0 0
          %1643 = vmatprep.subr.bf16.mxu0 0
          %1644 = vmatpush1.bf16.msra.mxu0 0
          %1645 = vmatprep.subr.bf16.mxu0 0
          %1646 = vmatpush1.bf16.msra.mxu0 0
          %1647 = vmatprep.subr.bf16.mxu0 0
          %1648 = vmatpush1.bf16.msra.mxu0 0
          %1649 = vmatprep.subr.bf16.mxu0 0
          %1650 = vmatpush1.bf16.msra.mxu0 0
          %1651 = vmatprep.subr.bf16.mxu0 0
          %1652 = vmatpush1.bf16.msra.mxu0 0
          %1653 = vmatprep.subr.bf16.mxu0 0
          %1654 = vmatpush1.bf16.msra.mxu0 0
          %1655 = vmatprep.subr.bf16.mxu0 0
          %1656 = vmatpush1.bf16.msra.mxu0 0
          %1657 = vmatprep.subr.bf16.mxu0 0
          %1658 = vmatpush1.bf16.msra.mxu0 0
          %1659 = vmatprep.subr.bf16.mxu0 0
          %1660 = vmatpush1.bf16.msra.mxu0 0
          %1661 = vmatprep.subr.bf16.mxu0 0
          %1662 = vmatpush1.bf16.msra.mxu0 0
          %1663 = vmatprep.mubr.bf16.mxu0 0
          %1664 = vmatmul.mubr.bf16.gmra.mrb[0].mxu0 %v1626
          %v1665 = vpop.f32.mrb[0].mxu0
          %v1666 = vadd.f32 0.0, %v1665
          %v1667 = vpop.f32.mrb[0].mxu0
          %v1668 = vpop.f32.mrb[0].mxu0
          %v1669 = vpop.f32.mrb[0].mxu0
          %1670 = vdwg.mxu0
          %v1671 = vadd.f32 %v1609, %v1666
          %v1672 = vld [vmem:[%s1429] sm:$0xff]
          %v1673 = vrcp.pop %v1672
          %v1674 = vld [vmem:[%s1437] sm:$0xff]
          %1676 = vset.pattern.permute.xlu0 0
          %1677 = vperm.xlu0 %1676, %v1673
          %v1678 = vpop.permute.xlu0 %1677
          %v1680 = vmul.f32 %v1674, %v1678
          %v1681 = vpack.c.bf16 %v1680, %v1680
          %v1682 = vld [vmem:[#allocation23 + $0xc] sm:$0xf]
          %v1684 = vsel %vm958, %v1681, 0
          %v1687 = vsel %vm1040, %v1682, 0
          %1689 = vmatprep.subr.bf16.mxu0 0
          %1690 = vmatpush1.bf16.msra.mxu0 %v1687
          %1691 = vmatprep.subr.bf16.mxu0 0
          %1692 = vmatpush1.bf16.msra.mxu0 0
          %1693 = vmatprep.subr.bf16.mxu0 0
          %1694 = vmatpush1.bf16.msra.mxu0 0
          %1695 = vmatprep.subr.bf16.mxu0 0
          %1696 = vmatpush1.bf16.msra.mxu0 0
          %1697 = vmatprep.subr.bf16.mxu0 0
          %1698 = vmatpush1.bf16.msra.mxu0 0
          %1699 = vmatprep.subr.bf16.mxu0 0
          %1700 = vmatpush1.bf16.msra.mxu0 0
          %1701 = vmatprep.subr.bf16.mxu0 0
          %1702 = vmatpush1.bf16.msra.mxu0 0
          %1703 = vmatprep.subr.bf16.mxu0 0
          %1704 = vmatpush1.bf16.msra.mxu0 0
          %1705 = vmatprep.subr.bf16.mxu0 0
          %1706 = vmatpush1.bf16.msra.mxu0 0
          %1707 = vmatprep.subr.bf16.mxu0 0
          %1708 = vmatpush1.bf16.msra.mxu0 0
          %1709 = vmatprep.subr.bf16.mxu0 0
          %1710 = vmatpush1.bf16.msra.mxu0 0
          %1711 = vmatprep.subr.bf16.mxu0 0
          %1712 = vmatpush1.bf16.msra.mxu0 0
          %1713 = vmatprep.subr.bf16.mxu0 0
          %1714 = vmatpush1.bf16.msra.mxu0 0
          %1715 = vmatprep.subr.bf16.mxu0 0
          %1716 = vmatpush1.bf16.msra.mxu0 0
          %1717 = vmatprep.subr.bf16.mxu0 0
          %1718 = vmatpush1.bf16.msra.mxu0 0
          %1719 = vmatprep.subr.bf16.mxu0 0
          %1720 = vmatpush1.bf16.msra.mxu0 0
          %1721 = vmatprep.mubr.bf16.mxu0 0
          %1722 = vmatmul.mubr.bf16.gmra.mrb[0].mxu0 %v1684
          %v1723 = vpop.f32.mrb[0].mxu0
          %v1724 = vadd.f32 0.0, %v1723
          %v1725 = vpop.f32.mrb[0].mxu0
          %v1726 = vpop.f32.mrb[0].mxu0
          %v1727 = vpop.f32.mrb[0].mxu0
          %1728 = vdwg.mxu0
          %v1729 = vadd.f32 %v1671, %v1724
          %v1730 = vld [vmem:[%s609] sm:$0xf]
          %v1731 = vunpack.c.l.bf16 %v1730
          %v1732 = vadd.f32 %v1731, %v1729
          %v1733 = vld [vmem:[#allocation24] sm:$0x1]
          %v1735 = vlaneseq
          %v1736 = vshrl.u32 %v1735, 7
          %v1737 = vsub.s32 0, %v1736
          %v1738 = vrot.slane %v1733, %v1737
          %v1740 = vadd.f32 %v1732, %v1738
          %v1741 = vsel %vm839, %v1740, 0.0
          %1742 = vadd.xlane.f32.xlu0 %v1741
          %v1743 = vpop.xlane.xlu0 %1742
          %v1744 = vrcp.pop 32.0
          %v1745 = vmul.f32 %v1743, %v1744
          %v1746 = vsub.f32 %v1740, %v1745
          %v1747 = vmul.f32 %v1746, %v1746
          %v1748 = vsel %vm839, %v1747, 0.0
          %1749 = vadd.xlane.f32.xlu0 %v1748
          %v1750 = vpop.xlane.xlu0 %1749
          %v1751 = vmul.f32 %v1750, %v1744
          %v1752 = vadd.f32 %v1751, 1e-05
          %v1753 = vrsqrt.pop %v1752
          %v1754 = vmul.f32 %v1746, %v1753
          %v1755 = vld [vmem:[#allocation26] sm:$0x1]
          %v1757 = vlaneseq
          %v1758 = vshrl.u32 %v1757, 7
          %v1759 = vsub.s32 0, %v1758
          %v1760 = vrot.slane %v1755, %v1759
          %v1762 = vmul.f32 %v1754, %v1760
          %v1763 = vld [vmem:[#allocation27] sm:$0x1]
          %v1765 = vlaneseq
          %v1766 = vshrl.u32 %v1765, 7
          %v1767 = vsub.s32 0, %v1766
          %v1768 = vrot.slane %v1763, %v1767
          %v1770 = vadd.f32 %v1762, %v1768
          %v1771 = vpack.c.bf16 %v1770, %v1770
          %vm1772 = vcmask 257024
          %1773 = vst.msk [vmem:[%s723] sm:$0xf] %vm1772, %v1771
        $region140: #{tpu_custom_call.1} parent=75 // pred_fallthru
          _
        %s1774 = sand.u32 %s380, 1
        %s1775 = scalar_lea.sflag [#allocation8], %s1774
        %s1776 = sand.u32 %s380, 1
        %s1777 = smul.addr %s1776, 4
        %s1778 = scalar_lea.vmem [#allocation29], %s1777
        // Predicated region
        $region141: #{tpu_custom_call.1} parent=75 // pred_check
          %p1779 = pneg %p390
        $region142: #{tpu_custom_call.1} parent=75 // pred_check_branch
          %1781 = sbr.rel (%p1779) target = $region144
        $region143: #{tpu_custom_call.1} parent=75 // pred_region
          %s1783 = ssub.s32 64, 64
          %1784 = vsyncadd %s1775, %s1783
          %s1785 = smul.addr %s46, 64
          %s1786 = scalar_lea.hbm %s14, %s1785
          %s1788 = sshll.u32 %s1778, 4
          %s1789 = int_to_ptr.vmem [resolvable:$true] %s1788
          %1791 = dma.vmem_to_hbm [thread:$0]  %s1789, 64, %s1786, %s1775
        $region144: #{tpu_custom_call.1} parent=75 // pred_fallthru
          _
      $region76: #{tpu_custom_call.1} parent=5 // pred_fallthru
        _
      %p1792 = scmp.le.s32.totalorder 2, %s37
      // Predicated region
      $region145: #{tpu_custom_call.1} parent=5 // pred_check
        %p1793 = pneg %p1792
      $region146: #{tpu_custom_call.1} parent=5 // pred_check_branch
        %1795 = sbr.rel (%p1793) target = $region148
      $region147: #{tpu_custom_call.1} parent=5 // pred_region
        %s1796 = ssub.s32 %s37, 2
        // Predicated region
        $region149: #{tpu_custom_call.1} parent=147 // pred_check
          %p1797 = pneg %p396
        $region150: #{tpu_custom_call.1} parent=147 // pred_check_branch
          %1799 = sbr.rel (%p1797) target = $region152
        $region151: #{tpu_custom_call.1} parent=147 // pred_region
          %s1800 = sand.u32 %s381, 1
          %s1801 = scalar_lea.sflag [#allocation8], %s1800
          %s1802 = sand.u32 %s381, 1
          %s1803 = smul.addr %s1802, 4
          %s1804 = scalar_lea.vmem [#allocation29], %s1803
          %1805 = dma.done %s1801, 64
        $region152: #{tpu_custom_call.1} parent=147 // pred_fallthru
          _
      $region148: #{tpu_custom_call.1} parent=5 // pred_fallthru
        _
    $region6: #{tpu_custom_call.1} parent=1 // loop_footer
      %s41 = sadd.s32 1, %s37
    $region7: #{tpu_custom_call.1} parent=1 // loop_footer_branch
      %36 = sbr.rel target = $region3
    $region8: #{tpu_custom_call.1} parent=1 // loop_exit
      _
    %1806 = vsyncpa [#allocation7], 1
    %s1807 = scalar_lea.sflag [#allocation7], 1
    %1808 = vsyncpa %s1807, 1
    %1809 = vsyncpa [#allocation10], 1
    %s1810 = scalar_lea.sflag [#allocation10], 1
    %1811 = vsyncpa %s1810, 1
    %1812 = vsyncpa [#allocation13], 1
    %s1813 = scalar_lea.sflag [#allocation13], 1
    %1814 = vsyncpa %s1813, 1
    %1815 = vsyncpa [#allocation16], 1
    %1816 = vsyncpa [#allocation19], 1
    %1817 = vsyncpa [#allocation22], 1
    %1818 = vsyncpa [#allocation25], 1
    %1819 = vsyncpa [#allocation28], 1
    %1820 = vsyncpa [#allocation8], 1
    %s1821 = scalar_lea.sflag [#allocation8], 1
    %1822 = vsyncpa %s1821, 1

</llo_original>
